<compile_context>
chip_gen: v7x
topology: tpu7x:2x2x1
jax: 0.10.0
libtpu: 0.0.40
codegen_flags: <defaults>
</compile_context>

<pallas_src>
import functools

import jax
import jax.numpy as jnp
from jax.experimental import pallas as pl
from jax.experimental.pallas import tpu as pltpu


def _ms_loss_kernel(pred_label_ref, y_label_ref, pred_mmap_ref, y_mmap_ref,
                    out_ref, *, alpha, s_total, ts):
    s_blk = pl.program_id(0)

    # ---- step 0: classification CE (reduction='none') seeds the accumulator --
    @pl.when(s_blk == 0)
    def _init():
        logits = pred_label_ref[...].astype(jnp.float32)            # (B, C)
        m = jnp.max(logits, axis=-1, keepdims=True)
        lse = m + jnp.log(jnp.sum(jnp.exp(logits - m), axis=-1, keepdims=True))
        cls_iota = jax.lax.broadcasted_iota(jnp.int32, logits.shape, 1)
        y = y_label_ref[...]                                        # (B, 1) i32
        # TODO(synk): torch's ignore_index=-100 / invalid-label behaviour is not
        # reproduced; labels are assumed to lie in [0, C).
        picked = jnp.sum(jnp.where(cls_iota == y, logits, 0.0),
                         axis=-1, keepdims=True)
        out_ref[...] = lse - picked

    # ---- margin matrix:  d = x @ D  with  D[2j, j] = -1, D[2j+1, j] = +1 -----
    n_pos = y_mmap_ref.shape[-1]          # 49 map positions per frame
    n_il = 2 * n_pos                      # 98 interleaved 2-class logits
    row = jax.lax.broadcasted_iota(jnp.int32, (n_il, n_pos), 0)
    col = jax.lax.broadcasted_iota(jnp.int32, (n_il, n_pos), 1)
    dmat = jnp.where(row == 2 * col + 1, 1.0,
                     jnp.where(row == 2 * col, -1.0, 0.0)).astype(jnp.float32)

    b = out_ref.shape[0]
    acc = jnp.zeros((b, 1), jnp.float32)
    exact_chunks = (s_total % ts) == 0    # static: no masking needed if exact
    for ts_i in range(ts):                # static unroll over the S chunk
        x = pred_mmap_ref[ts_i].astype(jnp.float32)                 # (B, 98)
        t = y_mmap_ref[:, ts_i, :].astype(jnp.float32)              # (B, 49)
        d = jnp.dot(x, dmat,                                        # (B, 49)
                    preferred_element_type=jnp.float32,
                    precision=jax.lax.Precision.HIGHEST)
        # Stable softplus((1-2t)*d):  relu(d) - t*d + log(1 + exp(-|d|))
        ce = (jnp.maximum(d, 0.0) - t * d
              + jnp.log(1.0 + jnp.exp(-jnp.abs(d))))
        contrib = jnp.sum(ce, axis=-1, keepdims=True)               # (B, 1)
        if exact_chunks:
            acc = acc + contrib
        else:
            valid = (s_blk * ts + ts_i) < s_total   # mask padded tail frames
            acc = acc + jnp.where(valid, contrib, 0.0)

    # reduction='mean' over the TRUE S*49 positions.
    out_ref[...] += (alpha / float(s_total * n_pos)) * acc


def ms_classification_loss(pred_label, y_label, pred_mmap, y_mmap, alpha=1.0):
    """pred_label: (B, C) float, y_label: (B,) int,
       pred_mmap: (S, B, 98) float, y_mmap: (B, S, 49) int  ->  (B,) f32.

    Logits may be bf16 or f32; they are DMA'd as-is and up-cast in-kernel.
    """
    B, C = pred_label.shape
    S = pred_mmap.shape[0]
    assert pred_mmap.shape == (S, B, 2 * 49)
    assert y_mmap.shape == (B, S, 49)

    # Chunk the S (reduction) axis.  TS=8 keeps the y_mmap block's second-minor
    # dim a multiple of 8; for S<=8 use the full extent.
    TS = S if S <= 8 else 8
    grid = (pl.cdiv(S, TS),)

    yl = y_label.reshape(B, 1).astype(jnp.int32)

    kernel = functools.partial(_ms_loss_kernel, alpha=float(alpha),
                               s_total=S, ts=TS)
    out = pl.pallas_call(
        kernel,
        out_shape=jax.ShapeDtypeStruct((B, 1), jnp.float32),
        grid=grid,
        in_specs=[
            pl.BlockSpec((B, C), lambda s: (0, 0)),         # resident logits
            pl.BlockSpec((B, 1), lambda s: (0, 0)),         # resident labels
            pl.BlockSpec((TS, B, 2 * 49), lambda s: (s, 0, 0)),  # native (S,B,98)
            pl.BlockSpec((B, TS, 49), lambda s: (0, s, 0)),      # native (B,S,49)
        ],
        out_specs=pl.BlockSpec((B, 1), lambda s: (0, 0)),   # resident accumulator
        compiler_params=pltpu.CompilerParams(
            dimension_semantics=("arbitrary",),             # reduction over S
            vmem_limit_bytes=32 * 1024 * 1024),
    )(pred_label, yl, pred_mmap, y_mmap)
    return out[:, 0]


def _reference_loss(pred_label, y_label, pred_mmap, y_mmap, alpha=1.0):
    # Pure-JAX reference mirroring the PyTorch forward.
    B = pred_label.shape[0]
    lse = jax.nn.logsumexp(pred_label.astype(jnp.float32), axis=-1)
    picked = jnp.take_along_axis(pred_label.astype(jnp.float32),
                                 y_label[:, None], axis=-1)[:, 0]
    losses = lse - picked
    pm = jnp.transpose(pred_mmap.astype(jnp.float32), (1, 0, 2)).reshape(B, -1, 2)
    ym = y_mmap.reshape(B, -1)
    lse2 = jax.nn.logsumexp(pm, axis=-1)
    pick2 = jnp.take_along_axis(pm, ym[..., None].astype(jnp.int32),
                                axis=-1)[..., 0]
    return losses + alpha * jnp.mean(lse2 - pick2, axis=-1)


if __name__ == "__main__":
    key = jax.random.PRNGKey(0)
    k1, k2, k3, k4 = jax.random.split(key, 4)

    B, C, S = 2, 10, 16          # batch, num classes, sequence length
    pred_label = jax.random.normal(k1, (B, C), dtype=jnp.float32)
    y_label = jax.random.randint(k2, (B,), 0, C, dtype=jnp.int32)
    pred_mmap = jax.random.normal(k3, (S, B, 49 * 2), dtype=jnp.float32)
    y_mmap = jax.random.randint(k4, (B, S, 49), 0, 2, dtype=jnp.int32)

    losses = ms_classification_loss(pred_label, y_label, pred_mmap, y_mmap,
                                    alpha=1.0)
    jax.block_until_ready(losses)

    ref = _reference_loss(pred_label, y_label, pred_mmap, y_mmap, alpha=1.0)
    assert losses.shape == (B,)
    assert jnp.allclose(losses, ref, atol=1e-3, rtol=1e-3), (losses, ref)

    print("KERNEL_OK")
</pallas_src>

<mosaic_0001>
module attributes {stable_mosaic.version = 11 : i64} {
  func.func @_ms_loss_kernel(%arg0: i32, %arg1: memref<2x10xf32, #tpu.memory_space<vmem>>, %arg2: memref<2x1xi32, #tpu.memory_space<vmem>>, %arg3: memref<8x2x98xf32, #tpu.memory_space<vmem>>, %arg4: memref<2x8x49xi32, #tpu.memory_space<vmem>>, %arg5: memref<2x1xf32, #tpu.memory_space<vmem>>) attributes {dimension_semantics = [#tpu.dimension_semantics<arbitrary>], iteration_bounds = array<i64: 2>, scalar_prefetch = 0 : i64, scratch_operands = 0 : i64, tpu.core_type = #tpu.core_type<tc>, window_params = [{pipeline_mode = #tpu.pipeline_mode<synchronous>, transform_indices = @transform_0, window_bounds = array<i64: 2, 10>}, {pipeline_mode = #tpu.pipeline_mode<synchronous>, transform_indices = @transform_1, window_bounds = array<i64: 2, 1>}, {transform_indices = @transform_2, window_bounds = array<i64: 8, 2, 98>}, {transform_indices = @transform_3, window_bounds = array<i64: 2, 8, 49>}, {pipeline_mode = #tpu.pipeline_mode<synchronous>, transform_indices = @transform_4, window_bounds = array<i64: 2, 1>}]} {
    %c0_i32 = arith.constant 0 : i32
    %0 = arith.cmpi eq, %arg0, %c0_i32 : i32
    %1 = arith.extui %0 : i1 to i32
    %c0_i32_0 = arith.constant 0 : i32
    %2 = arith.cmpi ne, %1, %c0_i32_0 : i32
    scf.if %2 {
      %c0_90 = arith.constant 0 : index
      %c0_91 = arith.constant 0 : index
      %192 = vector.load %arg1[%c0_90, %c0_91] : memref<2x10xf32, #tpu.memory_space<vmem>>, vector<2x10xf32>
      %cst_92 = arith.constant dense<0xFF800000> : vector<2xf32>
      %193 = vector.multi_reduction <maximumf>, %192, %cst_92 [1] : vector<2x10xf32> to vector<2xf32>
      %194 = vector.shape_cast %193 : vector<2xf32> to vector<2x1xf32>
      %195 = vector.broadcast %194 : vector<2x1xf32> to vector<2x10xf32>
      %196 = arith.subf %192, %195 : vector<2x10xf32>
      %197 = math.exp %196 : vector<2x10xf32>
      %cst_93 = arith.constant dense<0.000000e+00> : vector<2xf32>
      %198 = vector.multi_reduction <add>, %197, %cst_93 [1] : vector<2x10xf32> to vector<2xf32>
      %199 = vector.shape_cast %198 : vector<2xf32> to vector<2x1xf32>
      %200 = math.log %199 : vector<2x1xf32>
      %201 = arith.addf %194, %200 : vector<2x1xf32>
      %202 = tpu.iota {dimensions = array<i32: 1>} : vector<2x10xi32>
      %c0_94 = arith.constant 0 : index
      %c0_95 = arith.constant 0 : index
      %203 = vector.load %arg2[%c0_94, %c0_95] : memref<2x1xi32, #tpu.memory_space<vmem>>, vector<2x1xi32>
      %204 = vector.broadcast %203 : vector<2x1xi32> to vector<2x10xi32>
      %205 = arith.cmpi eq, %202, %204 : vector<2x10xi32>
      %cst_96 = arith.constant 0.000000e+00 : f32
      %206 = vector.broadcast %cst_96 : f32 to vector<2x10xf32>
      %207 = arith.select %205, %192, %206 : vector<2x10xi1>, vector<2x10xf32>
      %cst_97 = arith.constant dense<0.000000e+00> : vector<2xf32>
      %208 = vector.multi_reduction <add>, %207, %cst_97 [1] : vector<2x10xf32> to vector<2xf32>
      %209 = vector.shape_cast %208 : vector<2xf32> to vector<2x1xf32>
      %210 = arith.subf %201, %209 : vector<2x1xf32>
      %c0_98 = arith.constant 0 : index
      %c0_99 = arith.constant 0 : index
      %211 = vector.load %arg5[%c0_98, %c0_99] : memref<2x1xf32, #tpu.memory_space<vmem>>, vector<2x1xf32>
      tpu.vector_store %arg5[%c0_98, %c0_99], %210 {strides = array<i32>} : memref<2x1xf32, #tpu.memory_space<vmem>>, vector<2x1xf32>,
    } else {
    }
    %3 = tpu.iota {dimensions = array<i32: 0>} : vector<98x49xi32>
    %4 = tpu.iota {dimensions = array<i32: 1>} : vector<98x49xi32>
    %c2_i32 = arith.constant 2 : i32
    %5 = vector.broadcast %c2_i32 : i32 to vector<98x49xi32>
    %6 = arith.muli %5, %4 : vector<98x49xi32>
    %c1_i32 = arith.constant 1 : i32
    %7 = vector.broadcast %c1_i32 : i32 to vector<98x49xi32>
    %8 = arith.addi %6, %7 : vector<98x49xi32>
    %9 = arith.cmpi eq, %3, %8 : vector<98x49xi32>
    %c2_i32_1 = arith.constant 2 : i32
    %10 = vector.broadcast %c2_i32_1 : i32 to vector<98x49xi32>
    %11 = arith.muli %10, %4 : vector<98x49xi32>
    %12 = arith.cmpi eq, %3, %11 : vector<98x49xi32>
    %cst = arith.constant -1.000000e+00 : f32
    %cst_2 = arith.constant 0.000000e+00 : f32
    %13 = vector.broadcast %cst : f32 to vector<98x49xf32>
    %14 = vector.broadcast %cst_2 : f32 to vector<98x49xf32>
    %15 = arith.select %12, %13, %14 : vector<98x49xi1>, vector<98x49xf32>
    %cst_3 = arith.constant 1.000000e+00 : f32
    %16 = vector.broadcast %cst_3 : f32 to vector<98x49xf32>
    %17 = arith.select %9, %16, %15 : vector<98x49xi1>, vector<98x49xf32>
    %cst_4 = arith.constant 0.000000e+00 : f32
    %18 = vector.broadcast %cst_4 : f32 to vector<2x1xf32>
    %c0 = arith.constant 0 : index
    %c0_5 = arith.constant 0 : index
    %c0_6 = arith.constant 0 : index
    %19 = vector.load %arg3[%c0, %c0_5, %c0_6] : memref<8x2x98xf32, #tpu.memory_space<vmem>>, vector<1x2x98xf32>
    %20 = vector.shape_cast %19 : vector<1x2x98xf32> to vector<2x98xf32>
    %c0_7 = arith.constant 0 : index
    %c0_8 = arith.constant 0 : index
    %c0_9 = arith.constant 0 : index
    %21 = vector.load %arg4[%c0_7, %c0_8, %c0_9] : memref<2x8x49xi32, #tpu.memory_space<vmem>>, vector<2x1x49xi32>
    %22 = vector.shape_cast %21 : vector<2x1x49xi32> to vector<2x49xi32>
    %23 = arith.sitofp %22 : vector<2x49xi32> to vector<2x49xf32>
    %cst_10 = arith.constant dense<0.000000e+00> : vector<2x49xf32>
    %24 = tpu.matmul %20, %17, %cst_10 {dimension_numbers = #tpu.dot_dimension_numbers<[1], [0], [0], [1], [0, 0, 1, 1], [], []>, precision = #tpu.contract_precision<fp32>} : vector<2x98xf32>, vector<98x49xf32>, vector<2x49xf32> -> vector<2x49xf32>
    %cst_11 = arith.constant 0.000000e+00 : f32
    %25 = vector.broadcast %cst_11 : f32 to vector<2x49xf32>
    %26 = arith.maximumf %24, %25 : vector<2x49xf32>
    %27 = arith.mulf %23, %24 : vector<2x49xf32>
    %28 = arith.subf %26, %27 : vector<2x49xf32>
    %29 = math.absf %24 : vector<2x49xf32>
    %cst_12 = arith.constant 0.000000e+00 : f32
    %30 = vector.broadcast %cst_12 : f32 to vector<2x49xf32>
    %31 = arith.subf %30, %29 : vector<2x49xf32>
    %32 = math.exp %31 : vector<2x49xf32>
    %cst_13 = arith.constant 1.000000e+00 : f32
    %33 = vector.broadcast %cst_13 : f32 to vector<2x49xf32>
    %34 = arith.addf %33, %32 : vector<2x49xf32>
    %35 = math.log %34 : vector<2x49xf32>
    %36 = arith.addf %28, %35 : vector<2x49xf32>
    %cst_14 = arith.constant dense<0.000000e+00> : vector<2xf32>
    %37 = vector.multi_reduction <add>, %36, %cst_14 [1] : vector<2x49xf32> to vector<2xf32>
    %38 = vector.shape_cast %37 : vector<2xf32> to vector<2x1xf32>
    %39 = arith.addf %18, %38 : vector<2x1xf32>
    %c1 = arith.constant 1 : index
    %c0_15 = arith.constant 0 : index
    %c0_16 = arith.constant 0 : index
    %40 = vector.load %arg3[%c1, %c0_15, %c0_16] : memref<8x2x98xf32, #tpu.memory_space<vmem>>, vector<1x2x98xf32>
    %41 = vector.shape_cast %40 : vector<1x2x98xf32> to vector<2x98xf32>
    %c0_17 = arith.constant 0 : index
    %c1_18 = arith.constant 1 : index
    %c0_19 = arith.constant 0 : index
    %42 = vector.load %arg4[%c0_17, %c1_18, %c0_19] : memref<2x8x49xi32, #tpu.memory_space<vmem>>, vector<2x1x49xi32>
    %43 = vector.shape_cast %42 : vector<2x1x49xi32> to vector<2x49xi32>
    %44 = arith.sitofp %43 : vector<2x49xi32> to vector<2x49xf32>
    %cst_20 = arith.constant dense<0.000000e+00> : vector<2x49xf32>
    %45 = tpu.matmul %41, %17, %cst_20 {dimension_numbers = #tpu.dot_dimension_numbers<[1], [0], [0], [1], [0, 0, 1, 1], [], []>, precision = #tpu.contract_precision<fp32>} : vector<2x98xf32>, vector<98x49xf32>, vector<2x49xf32> -> vector<2x49xf32>
    %cst_21 = arith.constant 0.000000e+00 : f32
    %46 = vector.broadcast %cst_21 : f32 to vector<2x49xf32>
    %47 = arith.maximumf %45, %46 : vector<2x49xf32>
    %48 = arith.mulf %44, %45 : vector<2x49xf32>
    %49 = arith.subf %47, %48 : vector<2x49xf32>
    %50 = math.absf %45 : vector<2x49xf32>
    %cst_22 = arith.constant 0.000000e+00 : f32
    %51 = vector.broadcast %cst_22 : f32 to vector<2x49xf32>
    %52 = arith.subf %51, %50 : vector<2x49xf32>
    %53 = math.exp %52 : vector<2x49xf32>
    %cst_23 = arith.constant 1.000000e+00 : f32
    %54 = vector.broadcast %cst_23 : f32 to vector<2x49xf32>
    %55 = arith.addf %54, %53 : vector<2x49xf32>
    %56 = math.log %55 : vector<2x49xf32>
    %57 = arith.addf %49, %56 : vector<2x49xf32>
    %cst_24 = arith.constant dense<0.000000e+00> : vector<2xf32>
    %58 = vector.multi_reduction <add>, %57, %cst_24 [1] : vector<2x49xf32> to vector<2xf32>
    %59 = vector.shape_cast %58 : vector<2xf32> to vector<2x1xf32>
    %60 = arith.addf %39, %59 : vector<2x1xf32>
    %c2 = arith.constant 2 : index
    %c0_25 = arith.constant 0 : index
    %c0_26 = arith.constant 0 : index
    %61 = vector.load %arg3[%c2, %c0_25, %c0_26] : memref<8x2x98xf32, #tpu.memory_space<vmem>>, vector<1x2x98xf32>
    %62 = vector.shape_cast %61 : vector<1x2x98xf32> to vector<2x98xf32>
    %c0_27 = arith.constant 0 : index
    %c2_28 = arith.constant 2 : index
    %c0_29 = arith.constant 0 : index
    %63 = vector.load %arg4[%c0_27, %c2_28, %c0_29] : memref<2x8x49xi32, #tpu.memory_space<vmem>>, vector<2x1x49xi32>
    %64 = vector.shape_cast %63 : vector<2x1x49xi32> to vector<2x49xi32>
    %65 = arith.sitofp %64 : vector<2x49xi32> to vector<2x49xf32>
    %cst_30 = arith.constant dense<0.000000e+00> : vector<2x49xf32>
    %66 = tpu.matmul %62, %17, %cst_30 {dimension_numbers = #tpu.dot_dimension_numbers<[1], [0], [0], [1], [0, 0, 1, 1], [], []>, precision = #tpu.contract_precision<fp32>} : vector<2x98xf32>, vector<98x49xf32>, vector<2x49xf32> -> vector<2x49xf32>
    %cst_31 = arith.constant 0.000000e+00 : f32
    %67 = vector.broadcast %cst_31 : f32 to vector<2x49xf32>
    %68 = arith.maximumf %66, %67 : vector<2x49xf32>
    %69 = arith.mulf %65, %66 : vector<2x49xf32>
    %70 = arith.subf %68, %69 : vector<2x49xf32>
    %71 = math.absf %66 : vector<2x49xf32>
    %cst_32 = arith.constant 0.000000e+00 : f32
    %72 = vector.broadcast %cst_32 : f32 to vector<2x49xf32>
    %73 = arith.subf %72, %71 : vector<2x49xf32>
    %74 = math.exp %73 : vector<2x49xf32>
    %cst_33 = arith.constant 1.000000e+00 : f32
    %75 = vector.broadcast %cst_33 : f32 to vector<2x49xf32>
    %76 = arith.addf %75, %74 : vector<2x49xf32>
    %77 = math.log %76 : vector<2x49xf32>
    %78 = arith.addf %70, %77 : vector<2x49xf32>
    %cst_34 = arith.constant dense<0.000000e+00> : vector<2xf32>
    %79 = vector.multi_reduction <add>, %78, %cst_34 [1] : vector<2x49xf32> to vector<2xf32>
    %80 = vector.shape_cast %79 : vector<2xf32> to vector<2x1xf32>
    %81 = arith.addf %60, %80 : vector<2x1xf32>
    %c3 = arith.constant 3 : index
    %c0_35 = arith.constant 0 : index
    %c0_36 = arith.constant 0 : index
    %82 = vector.load %arg3[%c3, %c0_35, %c0_36] : memref<8x2x98xf32, #tpu.memory_space<vmem>>, vector<1x2x98xf32>
    %83 = vector.shape_cast %82 : vector<1x2x98xf32> to vector<2x98xf32>
    %c0_37 = arith.constant 0 : index
    %c3_38 = arith.constant 3 : index
    %c0_39 = arith.constant 0 : index
    %84 = vector.load %arg4[%c0_37, %c3_38, %c0_39] : memref<2x8x49xi32, #tpu.memory_space<vmem>>, vector<2x1x49xi32>
    %85 = vector.shape_cast %84 : vector<2x1x49xi32> to vector<2x49xi32>
    %86 = arith.sitofp %85 : vector<2x49xi32> to vector<2x49xf32>
    %cst_40 = arith.constant dense<0.000000e+00> : vector<2x49xf32>
    %87 = tpu.matmul %83, %17, %cst_40 {dimension_numbers = #tpu.dot_dimension_numbers<[1], [0], [0], [1], [0, 0, 1, 1], [], []>, precision = #tpu.contract_precision<fp32>} : vector<2x98xf32>, vector<98x49xf32>, vector<2x49xf32> -> vector<2x49xf32>
    %cst_41 = arith.constant 0.000000e+00 : f32
    %88 = vector.broadcast %cst_41 : f32 to vector<2x49xf32>
    %89 = arith.maximumf %87, %88 : vector<2x49xf32>
    %90 = arith.mulf %86, %87 : vector<2x49xf32>
    %91 = arith.subf %89, %90 : vector<2x49xf32>
    %92 = math.absf %87 : vector<2x49xf32>
    %cst_42 = arith.constant 0.000000e+00 : f32
    %93 = vector.broadcast %cst_42 : f32 to vector<2x49xf32>
    %94 = arith.subf %93, %92 : vector<2x49xf32>
    %95 = math.exp %94 : vector<2x49xf32>
    %cst_43 = arith.constant 1.000000e+00 : f32
    %96 = vector.broadcast %cst_43 : f32 to vector<2x49xf32>
    %97 = arith.addf %96, %95 : vector<2x49xf32>
    %98 = math.log %97 : vector<2x49xf32>
    %99 = arith.addf %91, %98 : vector<2x49xf32>
    %cst_44 = arith.constant dense<0.000000e+00> : vector<2xf32>
    %100 = vector.multi_reduction <add>, %99, %cst_44 [1] : vector<2x49xf32> to vector<2xf32>
    %101 = vector.shape_cast %100 : vector<2xf32> to vector<2x1xf32>
    %102 = arith.addf %81, %101 : vector<2x1xf32>
    %c4 = arith.constant 4 : index
    %c0_45 = arith.constant 0 : index
    %c0_46 = arith.constant 0 : index
    %103 = vector.load %arg3[%c4, %c0_45, %c0_46] : memref<8x2x98xf32, #tpu.memory_space<vmem>>, vector<1x2x98xf32>
    %104 = vector.shape_cast %103 : vector<1x2x98xf32> to vector<2x98xf32>
    %c0_47 = arith.constant 0 : index
    %c4_48 = arith.constant 4 : index
    %c0_49 = arith.constant 0 : index
    %105 = vector.load %arg4[%c0_47, %c4_48, %c0_49] : memref<2x8x49xi32, #tpu.memory_space<vmem>>, vector<2x1x49xi32>
    %106 = vector.shape_cast %105 : vector<2x1x49xi32> to vector<2x49xi32>
    %107 = arith.sitofp %106 : vector<2x49xi32> to vector<2x49xf32>
    %cst_50 = arith.constant dense<0.000000e+00> : vector<2x49xf32>
    %108 = tpu.matmul %104, %17, %cst_50 {dimension_numbers = #tpu.dot_dimension_numbers<[1], [0], [0], [1], [0, 0, 1, 1], [], []>, precision = #tpu.contract_precision<fp32>} : vector<2x98xf32>, vector<98x49xf32>, vector<2x49xf32> -> vector<2x49xf32>
    %cst_51 = arith.constant 0.000000e+00 : f32
    %109 = vector.broadcast %cst_51 : f32 to vector<2x49xf32>
    %110 = arith.maximumf %108, %109 : vector<2x49xf32>
    %111 = arith.mulf %107, %108 : vector<2x49xf32>
    %112 = arith.subf %110, %111 : vector<2x49xf32>
    %113 = math.absf %108 : vector<2x49xf32>
    %cst_52 = arith.constant 0.000000e+00 : f32
    %114 = vector.broadcast %cst_52 : f32 to vector<2x49xf32>
    %115 = arith.subf %114, %113 : vector<2x49xf32>
    %116 = math.exp %115 : vector<2x49xf32>
    %cst_53 = arith.constant 1.000000e+00 : f32
    %117 = vector.broadcast %cst_53 : f32 to vector<2x49xf32>
    %118 = arith.addf %117, %116 : vector<2x49xf32>
    %119 = math.log %118 : vector<2x49xf32>
    %120 = arith.addf %112, %119 : vector<2x49xf32>
    %cst_54 = arith.constant dense<0.000000e+00> : vector<2xf32>
    %121 = vector.multi_reduction <add>, %120, %cst_54 [1] : vector<2x49xf32> to vector<2xf32>
    %122 = vector.shape_cast %121 : vector<2xf32> to vector<2x1xf32>
    %123 = arith.addf %102, %122 : vector<2x1xf32>
    %c5 = arith.constant 5 : index
    %c0_55 = arith.constant 0 : index
    %c0_56 = arith.constant 0 : index
    %124 = vector.load %arg3[%c5, %c0_55, %c0_56] : memref<8x2x98xf32, #tpu.memory_space<vmem>>, vector<1x2x98xf32>
    %125 = vector.shape_cast %124 : vector<1x2x98xf32> to vector<2x98xf32>
    %c0_57 = arith.constant 0 : index
    %c5_58 = arith.constant 5 : index
    %c0_59 = arith.constant 0 : index
    %126 = vector.load %arg4[%c0_57, %c5_58, %c0_59] : memref<2x8x49xi32, #tpu.memory_space<vmem>>, vector<2x1x49xi32>
    %127 = vector.shape_cast %126 : vector<2x1x49xi32> to vector<2x49xi32>
    %128 = arith.sitofp %127 : vector<2x49xi32> to vector<2x49xf32>
    %cst_60 = arith.constant dense<0.000000e+00> : vector<2x49xf32>
    %129 = tpu.matmul %125, %17, %cst_60 {dimension_numbers = #tpu.dot_dimension_numbers<[1], [0], [0], [1], [0, 0, 1, 1], [], []>, precision = #tpu.contract_precision<fp32>} : vector<2x98xf32>, vector<98x49xf32>, vector<2x49xf32> -> vector<2x49xf32>
    %cst_61 = arith.constant 0.000000e+00 : f32
    %130 = vector.broadcast %cst_61 : f32 to vector<2x49xf32>
    %131 = arith.maximumf %129, %130 : vector<2x49xf32>
    %132 = arith.mulf %128, %129 : vector<2x49xf32>
    %133 = arith.subf %131, %132 : vector<2x49xf32>
    %134 = math.absf %129 : vector<2x49xf32>
    %cst_62 = arith.constant 0.000000e+00 : f32
    %135 = vector.broadcast %cst_62 : f32 to vector<2x49xf32>
    %136 = arith.subf %135, %134 : vector<2x49xf32>
    %137 = math.exp %136 : vector<2x49xf32>
    %cst_63 = arith.constant 1.000000e+00 : f32
    %138 = vector.broadcast %cst_63 : f32 to vector<2x49xf32>
    %139 = arith.addf %138, %137 : vector<2x49xf32>
    %140 = math.log %139 : vector<2x49xf32>
    %141 = arith.addf %133, %140 : vector<2x49xf32>
    %cst_64 = arith.constant dense<0.000000e+00> : vector<2xf32>
    %142 = vector.multi_reduction <add>, %141, %cst_64 [1] : vector<2x49xf32> to vector<2xf32>
    %143 = vector.shape_cast %142 : vector<2xf32> to vector<2x1xf32>
    %144 = arith.addf %123, %143 : vector<2x1xf32>
    %c6 = arith.constant 6 : index
    %c0_65 = arith.constant 0 : index
    %c0_66 = arith.constant 0 : index
    %145 = vector.load %arg3[%c6, %c0_65, %c0_66] : memref<8x2x98xf32, #tpu.memory_space<vmem>>, vector<1x2x98xf32>
    %146 = vector.shape_cast %145 : vector<1x2x98xf32> to vector<2x98xf32>
    %c0_67 = arith.constant 0 : index
    %c6_68 = arith.constant 6 : index
    %c0_69 = arith.constant 0 : index
    %147 = vector.load %arg4[%c0_67, %c6_68, %c0_69] : memref<2x8x49xi32, #tpu.memory_space<vmem>>, vector<2x1x49xi32>
    %148 = vector.shape_cast %147 : vector<2x1x49xi32> to vector<2x49xi32>
    %149 = arith.sitofp %148 : vector<2x49xi32> to vector<2x49xf32>
    %cst_70 = arith.constant dense<0.000000e+00> : vector<2x49xf32>
    %150 = tpu.matmul %146, %17, %cst_70 {dimension_numbers = #tpu.dot_dimension_numbers<[1], [0], [0], [1], [0, 0, 1, 1], [], []>, precision = #tpu.contract_precision<fp32>} : vector<2x98xf32>, vector<98x49xf32>, vector<2x49xf32> -> vector<2x49xf32>
    %cst_71 = arith.constant 0.000000e+00 : f32
    %151 = vector.broadcast %cst_71 : f32 to vector<2x49xf32>
    %152 = arith.maximumf %150, %151 : vector<2x49xf32>
    %153 = arith.mulf %149, %150 : vector<2x49xf32>
    %154 = arith.subf %152, %153 : vector<2x49xf32>
    %155 = math.absf %150 : vector<2x49xf32>
    %cst_72 = arith.constant 0.000000e+00 : f32
    %156 = vector.broadcast %cst_72 : f32 to vector<2x49xf32>
    %157 = arith.subf %156, %155 : vector<2x49xf32>
    %158 = math.exp %157 : vector<2x49xf32>
    %cst_73 = arith.constant 1.000000e+00 : f32
    %159 = vector.broadcast %cst_73 : f32 to vector<2x49xf32>
    %160 = arith.addf %159, %158 : vector<2x49xf32>
    %161 = math.log %160 : vector<2x49xf32>
    %162 = arith.addf %154, %161 : vector<2x49xf32>
    %cst_74 = arith.constant dense<0.000000e+00> : vector<2xf32>
    %163 = vector.multi_reduction <add>, %162, %cst_74 [1] : vector<2x49xf32> to vector<2xf32>
    %164 = vector.shape_cast %163 : vector<2xf32> to vector<2x1xf32>
    %165 = arith.addf %144, %164 : vector<2x1xf32>
    %c7 = arith.constant 7 : index
    %c0_75 = arith.constant 0 : index
    %c0_76 = arith.constant 0 : index
    %166 = vector.load %arg3[%c7, %c0_75, %c0_76] : memref<8x2x98xf32, #tpu.memory_space<vmem>>, vector<1x2x98xf32>
    %167 = vector.shape_cast %166 : vector<1x2x98xf32> to vector<2x98xf32>
    %c0_77 = arith.constant 0 : index
    %c7_78 = arith.constant 7 : index
    %c0_79 = arith.constant 0 : index
    %168 = vector.load %arg4[%c0_77, %c7_78, %c0_79] : memref<2x8x49xi32, #tpu.memory_space<vmem>>, vector<2x1x49xi32>
    %169 = vector.shape_cast %168 : vector<2x1x49xi32> to vector<2x49xi32>
    %170 = arith.sitofp %169 : vector<2x49xi32> to vector<2x49xf32>
    %cst_80 = arith.constant dense<0.000000e+00> : vector<2x49xf32>
    %171 = tpu.matmul %167, %17, %cst_80 {dimension_numbers = #tpu.dot_dimension_numbers<[1], [0], [0], [1], [0, 0, 1, 1], [], []>, precision = #tpu.contract_precision<fp32>} : vector<2x98xf32>, vector<98x49xf32>, vector<2x49xf32> -> vector<2x49xf32>
    %cst_81 = arith.constant 0.000000e+00 : f32
    %172 = vector.broadcast %cst_81 : f32 to vector<2x49xf32>
    %173 = arith.maximumf %171, %172 : vector<2x49xf32>
    %174 = arith.mulf %170, %171 : vector<2x49xf32>
    %175 = arith.subf %173, %174 : vector<2x49xf32>
    %176 = math.absf %171 : vector<2x49xf32>
    %cst_82 = arith.constant 0.000000e+00 : f32
    %177 = vector.broadcast %cst_82 : f32 to vector<2x49xf32>
    %178 = arith.subf %177, %176 : vector<2x49xf32>
    %179 = math.exp %178 : vector<2x49xf32>
    %cst_83 = arith.constant 1.000000e+00 : f32
    %180 = vector.broadcast %cst_83 : f32 to vector<2x49xf32>
    %181 = arith.addf %180, %179 : vector<2x49xf32>
    %182 = math.log %181 : vector<2x49xf32>
    %183 = arith.addf %175, %182 : vector<2x49xf32>
    %cst_84 = arith.constant dense<0.000000e+00> : vector<2xf32>
    %184 = vector.multi_reduction <add>, %183, %cst_84 [1] : vector<2x49xf32> to vector<2xf32>
    %185 = vector.shape_cast %184 : vector<2xf32> to vector<2x1xf32>
    %186 = arith.addf %165, %185 : vector<2x1xf32>
    %c0_85 = arith.constant 0 : index
    %c0_86 = arith.constant 0 : index
    %187 = vector.load %arg5[%c0_85, %c0_86] : memref<2x1xf32, #tpu.memory_space<vmem>>, vector<2x1xf32>
    %cst_87 = arith.constant 0.00127551018 : f32
    %188 = vector.broadcast %cst_87 : f32 to vector<2x1xf32>
    %189 = arith.mulf %188, %186 : vector<2x1xf32>
    %190 = arith.addf %187, %189 : vector<2x1xf32>
    %c0_88 = arith.constant 0 : index
    %c0_89 = arith.constant 0 : index
    %191 = vector.load %arg5[%c0_88, %c0_89] : memref<2x1xf32, #tpu.memory_space<vmem>>, vector<2x1xf32>
    tpu.vector_store %arg5[%c0_88, %c0_89], %190 {strides = array<i32>} : memref<2x1xf32, #tpu.memory_space<vmem>>, vector<2x1xf32>,
    return
  }
  func.func @transform_0(%arg0: i32) -> (i32, i32) {
    %c0_i32 = arith.constant 0 : i32
    %c0_i32_0 = arith.constant 0 : i32
    %c0_i32_1 = arith.constant 0 : i32
    return %c0_i32, %c0_i32_0 : i32, i32
  }
  func.func @transform_1(%arg0: i32) -> (i32, i32) {
    %c0_i32 = arith.constant 0 : i32
    %c0_i32_0 = arith.constant 0 : i32
    %c0_i32_1 = arith.constant 0 : i32
    return %c0_i32, %c0_i32_0 : i32, i32
  }
  func.func @transform_2(%arg0: i32) -> (i32, i32, i32) {
    %c0_i32 = arith.constant 0 : i32
    %c0_i32_0 = arith.constant 0 : i32
    %c0_i32_1 = arith.constant 0 : i32
    return %arg0, %c0_i32, %c0_i32_0 : i32, i32, i32
  }
  func.func @transform_3(%arg0: i32) -> (i32, i32, i32) {
    %c0_i32 = arith.constant 0 : i32
    %c0_i32_0 = arith.constant 0 : i32
    %c0_i32_1 = arith.constant 0 : i32
    return %c0_i32, %arg0, %c0_i32_0 : i32, i32, i32
  }
  func.func @transform_4(%arg0: i32) -> (i32, i32) {
    %c0_i32 = arith.constant 0 : i32
    %c0_i32_0 = arith.constant 0 : i32
    %c0_i32_1 = arith.constant 0 : i32
    return %c0_i32, %c0_i32_0 : i32, i32
  }
}

</mosaic_0001>

<llo_original>
// kernel: tpu_custom_call.1
$region0: #{tpu_custom_call.1}
  #allocation0 [shape = 'u32[]', space=smem, size = 0x4, offset = 0x4, fixed_abs, tag = 'smem constant byte address 0x4 - core index']
  #allocation1 [shape = 'u32[144,128]{1,0:T(1,128)}', space=vmem, size = 0x12000, scoped, tag = 'internal scratch']
  %s0 = inlined_call_operand.vmem [shape: f32[2,10], index: 0, kind: input, shape index: {}]
  %s1 = inlined_call_operand.vmem [shape: s32[2,1], index: 1, kind: input, shape index: {}]
  %s2 = inlined_call_operand.hbm [shape: f32[16,2,98], index: 2, kind: input, shape index: {}]
  %s3 = inlined_call_operand.hbm [shape: s32[2,16,49], index: 3, kind: input, shape index: {}]
  %s4 = inlined_call_operand.vmem [shape: f32[2,1], index: 4, kind: output, shape index: {}]
  %s5 = sld [smem:[#allocation0]]
  $region61: #{tpu_custom_call.1} parent=0
    _
  %s7 = ssub.s32 1, %s5
  %s8 = scalar_select 0, %s7, %s5
  $region1: #{tpu_custom_call.1} parent=0
    #allocation2 [shape = 'u8[16384]{0}', space=vmem, size = 0x4000, scoped, tag = 'input window, operand 2']
    #allocation3 [shape = 's32[2]{0}', space=sflag, size = 0x8, scoped, tag = 'scoped memory for tpu_custom_call.1']
    #allocation4 [shape = 'u8[16384]{0}', space=vmem, size = 0x4000, scoped, tag = 'input window, operand 3']
    #allocation5 [shape = 's32[2]{0}', space=sflag, size = 0x8, scoped, tag = 'scoped memory for tpu_custom_call.1']
    %9 = vsyncpa [#allocation3], 0
    %s10 = scalar_lea.sflag [#allocation3], 1
    %11 = vsyncpa %s10, 0
    %12 = vsyncpa [#allocation5], 0
    %s13 = scalar_lea.sflag [#allocation5], 1
    %14 = vsyncpa %s13, 0
    loop: start=0, step=1, limit=4
    $region2: #{tpu_custom_call.1} parent=1 // loop_pre_header
      _
    $region3: #{tpu_custom_call.1} parent=1 // loop_header
      %s16 = sphi 0, %s20
      %p17 = scmp.ge.s32.totalorder %s16, 4
      %s24 = sphi 0, %s24
      %s26 = sphi 0, %s24
      %s27 = sphi 0, %s26
      %s41 = sphi 0, %s27
      %s45 = sphi 0, %s45
      %s47 = sphi 0, %s45
      %s48 = sphi 0, %s47
      %s62 = sphi 0, %s48
      %s68 = sphi 0, %s70
      %s71 = sphi 0, %s68
      %s72 = sphi 0, %s71
      %s88 = sphi 0, %s72
      %s94 = sphi 0, %s96
      %s97 = sphi 0, %s94
      %s98 = sphi 0, %s97
      %s114 = sphi 0, %s98
      %s118 = sphi 0, %s118
      %s120 = sphi 0, %s118
      %s121 = sphi 0, %s120
      %s135 = sphi 0, %s121
    $region4: #{tpu_custom_call.1} parent=1 // loop_header_branch
      %19 = sbr.rel (%p17) target = $region8
    $region5: #{tpu_custom_call.1} parent=1 // loop_body
      %s21 = ssub.s32 %s16, 1
      %s22 = ssub.s32 %s16, 2
      %s23 = sadd.s32 %s16, 1
      %s25 = sadd.s32 %s24, 1
      %p28 = scmp.eq.s32.totalorder %s16, 1
      %p29 = scmp.ne.s32.totalorder %s24, %s26
      %p30 = scmp.eq.s32.totalorder %s16, 0
      %p31 = por %p29, %p30
      %p32 = scmp.ne.s32.totalorder %s24, %s26
      %p33 = scmp.eq.s32.totalorder %s21, 1
      %p34 = por %p32, %p33
      %p35 = scmp.ne.s32.totalorder %s26, %s27
      %p36 = scmp.eq.s32.totalorder %s21, 0
      %p37 = por %p35, %p36
      %p38 = scmp.ne.s32.totalorder %s26, %s27
      %p39 = scmp.eq.s32.totalorder %s22, 1
      %p40 = por %p38, %p39
      %p42 = scmp.ne.s32.totalorder %s27, %s41
      %p43 = scmp.eq.s32.totalorder %s22, 0
      %p44 = por %p42, %p43
      %s46 = sadd.s32 %s45, 1
      %p49 = scmp.eq.s32.totalorder %s16, 1
      %p50 = scmp.ne.s32.totalorder %s45, %s47
      %p51 = scmp.eq.s32.totalorder %s16, 0
      %p52 = por %p50, %p51
      %p53 = scmp.ne.s32.totalorder %s45, %s47
      %p54 = scmp.eq.s32.totalorder %s21, 1
      %p55 = por %p53, %p54
      %p56 = scmp.ne.s32.totalorder %s47, %s48
      %p57 = scmp.eq.s32.totalorder %s21, 0
      %p58 = por %p56, %p57
      %p59 = scmp.ne.s32.totalorder %s47, %s48
      %p60 = scmp.eq.s32.totalorder %s22, 1
      %p61 = por %p59, %p60
      %p63 = scmp.ne.s32.totalorder %s48, %s62
      %p64 = scmp.eq.s32.totalorder %s22, 0
      %p65 = por %p63, %p64
      %s66 = ssub.s32 %s16, %s23
      %p67 = scmp.eq.s32.totalorder %s66, 0
      %s69 = sadd.s32 %s68, 1
      %s70 = scalar_select %p67, %s68, %s69
      %p73 = pneg %p67
      %p74 = scmp.eq.s32.totalorder %s16, 1
      %p75 = por %p73, %p74
      %p76 = scmp.ne.s32.totalorder %s68, %s71
      %p77 = scmp.eq.s32.totalorder %s16, 0
      %p78 = por %p76, %p77
      %p79 = scmp.ne.s32.totalorder %s68, %s71
      %p80 = scmp.eq.s32.totalorder %s21, 1
      %p81 = por %p79, %p80
      %p82 = scmp.ne.s32.totalorder %s71, %s72
      %p83 = scmp.eq.s32.totalorder %s21, 0
      %p84 = por %p82, %p83
      %p85 = scmp.ne.s32.totalorder %s71, %s72
      %p86 = scmp.eq.s32.totalorder %s22, 1
      %p87 = por %p85, %p86
      %p89 = scmp.ne.s32.totalorder %s72, %s88
      %p90 = scmp.eq.s32.totalorder %s22, 0
      %p91 = por %p89, %p90
      %s92 = ssub.s32 %s16, %s23
      %p93 = scmp.eq.s32.totalorder %s92, 0
      %s95 = sadd.s32 %s94, 1
      %s96 = scalar_select %p93, %s94, %s95
      %p99 = pneg %p93
      %p100 = scmp.eq.s32.totalorder %s16, 1
      %p101 = por %p99, %p100
      %p102 = scmp.ne.s32.totalorder %s94, %s97
      %p103 = scmp.eq.s32.totalorder %s16, 0
      %p104 = por %p102, %p103
      %p105 = scmp.ne.s32.totalorder %s94, %s97
      %p106 = scmp.eq.s32.totalorder %s21, 1
      %p107 = por %p105, %p106
      %p108 = scmp.ne.s32.totalorder %s97, %s98
      %p109 = scmp.eq.s32.totalorder %s21, 0
      %p110 = por %p108, %p109
      %p111 = scmp.ne.s32.totalorder %s97, %s98
      %p112 = scmp.eq.s32.totalorder %s22, 1
      %p113 = por %p111, %p112
      %p115 = scmp.ne.s32.totalorder %s98, %s114
      %p116 = scmp.eq.s32.totalorder %s22, 0
      %p117 = por %p115, %p116
      %s119 = sadd.s32 %s118, 1
      %p122 = scmp.eq.s32.totalorder %s16, 1
      %p123 = scmp.ne.s32.totalorder %s118, %s120
      %p124 = scmp.eq.s32.totalorder %s16, 0
      %p125 = por %p123, %p124
      %p126 = scmp.ne.s32.totalorder %s118, %s120
      %p127 = scmp.eq.s32.totalorder %s21, 1
      %p128 = por %p126, %p127
      %p129 = scmp.ne.s32.totalorder %s120, %s121
      %p130 = scmp.eq.s32.totalorder %s21, 0
      %p131 = por %p129, %p130
      %p132 = scmp.ne.s32.totalorder %s120, %s121
      %p133 = scmp.eq.s32.totalorder %s22, 1
      %p134 = por %p132, %p133
      %p136 = scmp.ne.s32.totalorder %s121, %s135
      %p137 = scmp.eq.s32.totalorder %s22, 0
      %p138 = por %p136, %p137
      %p139 = scmp.le.s32.totalorder 1, %s16
      %p140 = scmp.lt.s32.totalorder %s16, 3
      %p141 = pnand %p139, %p140
      %p142 = pneg %p141
      // Predicated region
      $region9: #{tpu_custom_call.1} parent=5 // pred_check
        _
      $region10: #{tpu_custom_call.1} parent=5 // pred_check_branch
        %144 = sbr.rel (%p141) target = $region12
      $region11: #{tpu_custom_call.1} parent=5 // pred_region
        %s145 = ssub.s32 %s16, 1
        // Predicated region
        $region13: #{tpu_custom_call.1} parent=11 // pred_check
          %p146 = pneg %p37
        $region14: #{tpu_custom_call.1} parent=11 // pred_check_branch
          %148 = sbr.rel (%p146) target = $region16
        $region15: #{tpu_custom_call.1} parent=11 // pred_region
          _
        $region16: #{tpu_custom_call.1} parent=11 // pred_fallthru
          _
        // Predicated region
        $region17: #{tpu_custom_call.1} parent=11 // pred_check
          %p149 = pneg %p58
        $region18: #{tpu_custom_call.1} parent=11 // pred_check_branch
          %151 = sbr.rel (%p149) target = $region20
        $region19: #{tpu_custom_call.1} parent=11 // pred_region
          _
        $region20: #{tpu_custom_call.1} parent=11 // pred_fallthru
          _
      $region12: #{tpu_custom_call.1} parent=5 // pred_fallthru
        _
      %p152 = scmp.lt.s32.totalorder %s16, 2
      // Predicated region
      $region21: #{tpu_custom_call.1} parent=5 // pred_check
        %p153 = pneg %p152
      $region22: #{tpu_custom_call.1} parent=5 // pred_check_branch
        %155 = sbr.rel (%p153) target = $region24
      $region23: #{tpu_custom_call.1} parent=5 // pred_region
        // Predicated region
        $region25: #{tpu_custom_call.1} parent=23 // pred_check
          %p156 = pneg %p78
        $region26: #{tpu_custom_call.1} parent=23 // pred_check_branch
          %158 = sbr.rel (%p156) target = $region28
        $region27: #{tpu_custom_call.1} parent=23 // pred_region
          %s159 = sand.u32 %s68, 1
          %s160 = scalar_lea.sflag [#allocation3], %s159
          %s161 = sand.u32 %s68, 1
          %s162 = smul.addr %s161, 16
          %s163 = scalar_lea.vmem [#allocation2], %s162
          %s164 = smul.u32 8, %s16
          %s166 = ssub.s32 256, 256
          %167 = vsyncadd %s160, %s166
          %s168 = smul.addr %s164, 32
          %s169 = scalar_lea.hbm %s2, %s168
          %s170 = sshll.u32 %s163, 4
          %s171 = int_to_ptr.vmem [resolvable:$true] %s170
          %176 = dma.hbm_to_vmem [thread:$0]  %s169, 256, %s171, %s160, 32, 32, 2
        $region28: #{tpu_custom_call.1} parent=23 // pred_fallthru
          _
        // Predicated region
        $region29: #{tpu_custom_call.1} parent=23 // pred_check
          %p177 = pneg %p104
        $region30: #{tpu_custom_call.1} parent=23 // pred_check_branch
          %179 = sbr.rel (%p177) target = $region32
        $region31: #{tpu_custom_call.1} parent=23 // pred_region
          %s180 = sand.u32 %s94, 1
          %s181 = scalar_lea.sflag [#allocation5], %s180
          %s182 = sand.u32 %s94, 1
          %s183 = smul.addr %s182, 16
          %s184 = scalar_lea.vmem [#allocation4], %s183
          %s186 = ssub.s32 256, 256
          %187 = vsyncadd %s181, %s186
          %s188 = smul.addr %s16, 128
          %s189 = scalar_lea.hbm %s3, %s188
          %s190 = sshll.u32 %s184, 4
          %s191 = int_to_ptr.vmem [resolvable:$true] %s190
          %196 = dma.hbm_to_vmem [thread:$0]  %s189, 256, %s191, %s181, 256, 128, 8
        $region32: #{tpu_custom_call.1} parent=23 // pred_fallthru
          _
      $region24: #{tpu_custom_call.1} parent=5 // pred_fallthru
        _
      %p197 = scmp.le.s32.totalorder 1, %s16
      %p198 = scmp.lt.s32.totalorder %s16, 3
      %p199 = pnand %p197, %p198
      %p200 = pneg %p199
      // Predicated region
      $region33: #{tpu_custom_call.1} parent=5 // pred_check
        _
      $region34: #{tpu_custom_call.1} parent=5 // pred_check_branch
        %202 = sbr.rel (%p199) target = $region36
      $region35: #{tpu_custom_call.1} parent=5 // pred_region
        %s203 = ssub.s32 %s16, 1
        %s204 = sand.u32 %s71, 1
        %s205 = scalar_lea.sflag [#allocation3], %s204
        %s206 = sand.u32 %s71, 1
        %s207 = smul.addr %s206, 16
        %s208 = scalar_lea.vmem [#allocation2], %s207
        // Predicated region
        $region37: #{tpu_custom_call.1} parent=35 // pred_check
          %p209 = pneg %p84
        $region38: #{tpu_custom_call.1} parent=35 // pred_check_branch
          %211 = sbr.rel (%p209) target = $region40
        $region39: #{tpu_custom_call.1} parent=35 // pred_region
          %212 = dma.done %s205, 256
        $region40: #{tpu_custom_call.1} parent=35 // pred_fallthru
          _
        %s213 = sand.u32 %s97, 1
        %s214 = scalar_lea.sflag [#allocation5], %s213
        %s215 = sand.u32 %s97, 1
        %s216 = smul.addr %s215, 16
        %s217 = scalar_lea.vmem [#allocation4], %s216
        // Predicated region
        $region41: #{tpu_custom_call.1} parent=35 // pred_check
          %p218 = pneg %p110
        $region42: #{tpu_custom_call.1} parent=35 // pred_check_branch
          %220 = sbr.rel (%p218) target = $region44
        $region43: #{tpu_custom_call.1} parent=35 // pred_region
          %221 = dma.done %s214, 256
        $region44: #{tpu_custom_call.1} parent=35 // pred_fallthru
          _
        %p222 = pneg %p37
        %p223 = pneg %p34
        %p224 = pneg %p58
        %p225 = pneg %p55
        %s226 = sand.u32 %s71, 1
        %s227 = scalar_lea.sflag [#allocation3], %s226
        %s228 = sand.u32 %s71, 1
        %s229 = smul.addr %s228, 16
        %s230 = scalar_lea.vmem [#allocation2], %s229
        %p231 = pneg %p84
        %p232 = pneg %p81
        %s233 = sand.u32 %s97, 1
        %s234 = scalar_lea.sflag [#allocation5], %s233
        %s235 = sand.u32 %s97, 1
        %s236 = smul.addr %s235, 16
        %s237 = scalar_lea.vmem [#allocation4], %s236
        %p238 = pneg %p110
        %p239 = pneg %p107
        %p240 = pneg %p131
        %p241 = pneg %p128
        %s242 = smul.u32 8, %s21
        %p243 = scmp.eq.s32.totalorder %s21, 0
        // Predicated region
        $region45: #{tpu_custom_call.1} parent=35 // pred_check
          %p244 = pneg %p243
        $region46: #{tpu_custom_call.1} parent=35 // pred_check_branch
          %246 = sbr.rel (%p244) target = $region48
        $region47: #{tpu_custom_call.1} parent=35 // pred_region
          %v247 = vld [vmem:[%s0] sm:$0x3]
          %vm248 = vcmask 74752
          %v249 = vsel %vm248, %v247, -inf
          %250 = vmax.xlane.f32.xlu0 %v249
          %v251 = vpop.xlane.xlu0 %250
          %v252 = vsub.f32 %v247, %v251
          %v253 = vmul.f32 %v252, 1.442695
          %v254 = vpow.pop %v253
          %v255 = vsel %vm248, %v254, 0.0
          %256 = vadd.xlane.f32.xlu0 %v255
          %v257 = vpop.xlane.xlu0 %256
          %v258 = vlog2.pop %v257
          %v259 = vmul.f32 %v258, 0.6931472
          %v260 = vadd.f32 %v251, %v259
          %v261 = vlaneseq
          %v262 = vand.u32 %v261, 127
          %v263 = vld [vmem:[%s1] sm:$0x3]
          %264 = vset.pattern.permute.xlu0 0
          %265 = vperm.xlu0 %264, %v263
          %v266 = vpop.permute.xlu0 %265
          %vm267 = vcmp.eq.s32.totalorder %v262, %v266
          %v268 = vsel %vm267, %v247, 0.0
          %v269 = vsel %vm248, %v268, 0.0
          %270 = vadd.xlane.f32.xlu0 %v269
          %v271 = vpop.xlane.xlu0 %270
          %v272 = vsub.f32 %v260, %v271
          %vm273 = vcmask 1024
          %274 = vst.msk [vmem:[%s4] sm:$0x3] %vm273, %v272
        $region48: #{tpu_custom_call.1} parent=35 // pred_fallthru
          _
        %v275 = vlaneseq
        %v276 = vshrl.u32 %v275, 7
        %v277 = vadd.s32 %v276, 8
        %v278 = vadd.s32 %v276, 16
        %v279 = vadd.s32 %v276, 24
        %v280 = vadd.s32 %v276, 32
        %v281 = vadd.s32 %v276, 40
        %v282 = vadd.s32 %v276, 48
        %v283 = vadd.s32 %v276, 56
        %v284 = vadd.s32 %v276, 64
        %v285 = vadd.s32 %v276, 72
        %v286 = vadd.s32 %v276, 80
        %v287 = vadd.s32 %v276, 88
        %v288 = vadd.s32 %v276, 96
        %v289 = vlaneseq
        %v290 = vand.u32 %v289, 127
        %v291 = vmul.u32 %v290, 2
        %v292 = vadd.s32 %v291, 1
        %vm293 = vcmp.eq.s32.totalorder %v276, %v292
        %vm294 = vcmp.eq.s32.totalorder %v277, %v292
        %vm295 = vcmp.eq.s32.totalorder %v278, %v292
        %vm296 = vcmp.eq.s32.totalorder %v279, %v292
        %vm297 = vcmp.eq.s32.totalorder %v280, %v292
        %vm298 = vcmp.eq.s32.totalorder %v281, %v292
        %vm299 = vcmp.eq.s32.totalorder %v282, %v292
        %vm300 = vcmp.eq.s32.totalorder %v283, %v292
        %vm301 = vcmp.eq.s32.totalorder %v284, %v292
        %vm302 = vcmp.eq.s32.totalorder %v285, %v292
        %vm303 = vcmp.eq.s32.totalorder %v286, %v292
        %vm304 = vcmp.eq.s32.totalorder %v287, %v292
        %vm305 = vcmp.eq.s32.totalorder %v288, %v292
        %vm306 = vcmp.eq.s32.totalorder %v276, %v291
        %vm307 = vcmp.eq.s32.totalorder %v277, %v291
        %vm308 = vcmp.eq.s32.totalorder %v278, %v291
        %vm309 = vcmp.eq.s32.totalorder %v279, %v291
        %vm310 = vcmp.eq.s32.totalorder %v280, %v291
        %vm311 = vcmp.eq.s32.totalorder %v281, %v291
        %vm312 = vcmp.eq.s32.totalorder %v282, %v291
        %vm313 = vcmp.eq.s32.totalorder %v283, %v291
        %vm314 = vcmp.eq.s32.totalorder %v284, %v291
        %vm315 = vcmp.eq.s32.totalorder %v285, %v291
        %vm316 = vcmp.eq.s32.totalorder %v286, %v291
        %vm317 = vcmp.eq.s32.totalorder %v287, %v291
        %vm318 = vcmp.eq.s32.totalorder %v288, %v291
        %v319 = vsel %vm306, -1.0, 0.0
        %v320 = vsel %vm307, -1.0, 0.0
        %v321 = vsel %vm308, -1.0, 0.0
        %v322 = vsel %vm309, -1.0, 0.0
        %v323 = vsel %vm310, -1.0, 0.0
        %v324 = vsel %vm311, -1.0, 0.0
        %v325 = vsel %vm312, -1.0, 0.0
        %v326 = vsel %vm313, -1.0, 0.0
        %v327 = vsel %vm314, -1.0, 0.0
        %v328 = vsel %vm315, -1.0, 0.0
        %v329 = vsel %vm316, -1.0, 0.0
        %v330 = vsel %vm317, -1.0, 0.0
        %v331 = vsel %vm318, -1.0, 0.0
        %v332 = vsel %vm293, 1.0, %v319
        %v333 = vsel %vm294, 1.0, %v320
        %v334 = vsel %vm295, 1.0, %v321
        %v335 = vsel %vm296, 1.0, %v322
        %v336 = vsel %vm297, 1.0, %v323
        %v337 = vsel %vm298, 1.0, %v324
        %v338 = vsel %vm299, 1.0, %v325
        %v339 = vsel %vm300, 1.0, %v326
        %v340 = vsel %vm301, 1.0, %v327
        %v341 = vsel %vm302, 1.0, %v328
        %v342 = vsel %vm303, 1.0, %v329
        %v343 = vsel %vm304, 1.0, %v330
        %v344 = vsel %vm305, 1.0, %v331
        %v345 = vld [vmem:[%s208] sm:$0x3]
        %v346 = vld [vmem:[%s217] sm:$0x1]
        %v347 = vld [vmem:[%s217 + $0x8] sm:$0x1]
        %v348 = vcvt.s32.f32 %v346
        %v349 = vcvt.s32.f32 %v347
        %vm350 = vcmask 801792
        %v352 = vsel %vm350, %v345, 0
        %vm354 = vcmask 1041408
        %v356 = vsel %vm354, %v344, 0
        %358 = vmatprep.subr.mxu0 0.0
        %359 = vmatpush1.msra.mxu0 %v332
        %360 = vmatprep.subr.mxu0 0.0
        %361 = vmatpush1.msra.mxu0 %v333
        %362 = vmatprep.subr.mxu0 0.0
        %363 = vmatpush1.msra.mxu0 %v334
        %364 = vmatprep.subr.mxu0 0.0
        %365 = vmatpush1.msra.mxu0 %v335
        %366 = vmatprep.subr.mxu0 0.0
        %367 = vmatpush1.msra.mxu0 %v336
        %368 = vmatprep.subr.mxu0 0.0
        %369 = vmatpush1.msra.mxu0 %v337
        %370 = vmatprep.subr.mxu0 0.0
        %371 = vmatpush1.msra.mxu0 %v338
        %372 = vmatprep.subr.mxu0 0.0
        %373 = vmatpush1.msra.mxu0 %v339
        %374 = vmatprep.subr.mxu0 0.0
        %375 = vmatpush1.msra.mxu0 %v340
        %376 = vmatprep.subr.mxu0 0.0
        %377 = vmatpush1.msra.mxu0 %v341
        %378 = vmatprep.subr.mxu0 0.0
        %379 = vmatpush1.msra.mxu0 %v342
        %380 = vmatprep.subr.mxu0 0.0
        %381 = vmatpush1.msra.mxu0 %v343
        %382 = vmatprep.subr.mxu0 0.0
        %v383 = vand.u32 %v356, 4294901760
        %384 = vmatpush1.msra.mxu0 %v383
        %385 = vmatprep.subr.mxu0 0.0
        %386 = vmatpush1.msra.mxu0 0.0
        %387 = vmatprep.subr.mxu0 0.0
        %388 = vmatpush1.msra.mxu0 0.0
        %389 = vmatprep.subr.mxu0 0.0
        %390 = vmatpush1.msra.mxu0 0.0
        %391 = vmatprep.subr.mxu0 0.0
        %392 = vmatpush1.msra.mxu0 0.0
        %393 = vmatprep.subr.mxu0 0.0
        %394 = vmatpush1.msra.mxu0 0.0
        %395 = vmatprep.subr.mxu0 0.0
        %396 = vmatpush1.msra.mxu0 0.0
        %397 = vmatprep.subr.mxu0 0.0
        %398 = vmatpush1.msra.mxu0 0.0
        %399 = vmatprep.subr.mxu0 0.0
        %400 = vmatpush1.msra.mxu0 0.0
        %401 = vmatprep.subr.mxu0 0.0
        %402 = vmatpush1.msra.mxu0 0.0
        %403 = vmatprep.subr.mxu0 0.0
        %404 = vmatpush1.msra.mxu0 0.0
        %405 = vmatprep.subr.mxu0 0.0
        %406 = vmatpush1.msra.mxu0 0.0
        %407 = vmatprep.subr.mxu0 0.0
        %408 = vmatpush1.msra.mxu0 0.0
        %409 = vmatprep.subr.mxu0 0.0
        %410 = vmatpush1.msra.mxu0 0.0
        %411 = vmatprep.subr.mxu0 0.0
        %412 = vmatpush1.msra.mxu0 0.0
        %413 = vmatprep.subr.mxu0 0.0
        %414 = vmatpush1.msra.mxu0 0.0
        %415 = vmatprep.subr.mxu0 0.0
        %416 = vmatpush1.msra.mxu0 0.0
        %417 = vmatprep.subr.mxu0 0.0
        %418 = vmatpush1.msra.mxu0 0.0
        %419 = vmatprep.subr.mxu0 0.0
        %420 = vmatpush1.msra.mxu0 0.0
        %421 = vmatprep.subr.mxu0 0.0
        %422 = vmatpush1.msra.mxu0 0.0
        %423 = vmatprep.mubr.f32.mxu0 0.0
        %v424 = vand.u32 %v352, 4294901760
        %v425 = vsub.f32 %v352, %v424
        %v426 = vand.u32 %v425, 4294901760
        %v427 = vsub.f32 %v425, %v426
        %v428 = vand.u32 %v427, 4294901760
        %429 = vmatmul.mubr.f32.gmra.mrb[0].mxu0 %v428
        %v430 = vpop.f32.mrb[0].mxu0
        %v431 = vadd.f32 0.0, %v430
        %v432 = vpop.f32.mrb[0].mxu0
        %433 = vdwg.mxu0
        %434 = vmatprep.subr.mxu0 0.0
        %v435 = vsub.f32 %v332, %v332
        %v436 = vand.u32 %v435, 4294901760
        %v437 = vsub.f32 %v435, %v436
        %v438 = vand.u32 %v437, 4294901760
        %439 = vmatpush1.msra.mxu0 %v438
        %440 = vmatprep.subr.mxu0 0.0
        %v441 = vsub.f32 %v333, %v333
        %v442 = vand.u32 %v441, 4294901760
        %v443 = vsub.f32 %v441, %v442
        %v444 = vand.u32 %v443, 4294901760
        %445 = vmatpush1.msra.mxu0 %v444
        %446 = vmatprep.subr.mxu0 0.0
        %v447 = vsub.f32 %v334, %v334
        %v448 = vand.u32 %v447, 4294901760
        %v449 = vsub.f32 %v447, %v448
        %v450 = vand.u32 %v449, 4294901760
        %451 = vmatpush1.msra.mxu0 %v450
        %452 = vmatprep.subr.mxu0 0.0
        %v453 = vsub.f32 %v335, %v335
        %v454 = vand.u32 %v453, 4294901760
        %v455 = vsub.f32 %v453, %v454
        %v456 = vand.u32 %v455, 4294901760
        %457 = vmatpush1.msra.mxu0 %v456
        %458 = vmatprep.subr.mxu0 0.0
        %v459 = vsub.f32 %v336, %v336
        %v460 = vand.u32 %v459, 4294901760
        %v461 = vsub.f32 %v459, %v460
        %v462 = vand.u32 %v461, 4294901760
        %463 = vmatpush1.msra.mxu0 %v462
        %464 = vmatprep.subr.mxu0 0.0
        %v465 = vsub.f32 %v337, %v337
        %v466 = vand.u32 %v465, 4294901760
        %v467 = vsub.f32 %v465, %v466
        %v468 = vand.u32 %v467, 4294901760
        %469 = vmatpush1.msra.mxu0 %v468
        %470 = vmatprep.subr.mxu0 0.0
        %v471 = vsub.f32 %v338, %v338
        %v472 = vand.u32 %v471, 4294901760
        %v473 = vsub.f32 %v471, %v472
        %v474 = vand.u32 %v473, 4294901760
        %475 = vmatpush1.msra.mxu0 %v474
        %476 = vmatprep.subr.mxu0 0.0
        %v477 = vsub.f32 %v339, %v339
        %v478 = vand.u32 %v477, 4294901760
        %v479 = vsub.f32 %v477, %v478
        %v480 = vand.u32 %v479, 4294901760
        %481 = vmatpush1.msra.mxu0 %v480
        %482 = vmatprep.subr.mxu0 0.0
        %v483 = vsub.f32 %v340, %v340
        %v484 = vand.u32 %v483, 4294901760
        %v485 = vsub.f32 %v483, %v484
        %v486 = vand.u32 %v485, 4294901760
        %487 = vmatpush1.msra.mxu0 %v486
        %488 = vmatprep.subr.mxu0 0.0
        %v489 = vsub.f32 %v341, %v341
        %v490 = vand.u32 %v489, 4294901760
        %v491 = vsub.f32 %v489, %v490
        %v492 = vand.u32 %v491, 4294901760
        %493 = vmatpush1.msra.mxu0 %v492
        %494 = vmatprep.subr.mxu0 0.0
        %v495 = vsub.f32 %v342, %v342
        %v496 = vand.u32 %v495, 4294901760
        %v497 = vsub.f32 %v495, %v496
        %v498 = vand.u32 %v497, 4294901760
        %499 = vmatpush1.msra.mxu0 %v498
        %500 = vmatprep.subr.mxu0 0.0
        %v501 = vsub.f32 %v343, %v343
        %v502 = vand.u32 %v501, 4294901760
        %v503 = vsub.f32 %v501, %v502
        %v504 = vand.u32 %v503, 4294901760
        %505 = vmatpush1.msra.mxu0 %v504
        %506 = vmatprep.subr.mxu0 0.0
        %v507 = vand.u32 %v356, 4294901760
        %v508 = vsub.f32 %v356, %v507
        %v509 = vand.u32 %v508, 4294901760
        %v510 = vsub.f32 %v508, %v509
        %v511 = vand.u32 %v510, 4294901760
        %512 = vmatpush1.msra.mxu0 %v511
        %513 = vmatprep.subr.mxu0 0.0
        %514 = vmatpush1.msra.mxu0 0.0
        %515 = vmatprep.subr.mxu0 0.0
        %516 = vmatpush1.msra.mxu0 0.0
        %517 = vmatprep.subr.mxu0 0.0
        %518 = vmatpush1.msra.mxu0 0.0
        %519 = vmatprep.subr.mxu0 0.0
        %520 = vmatpush1.msra.mxu0 0.0
        %521 = vmatprep.subr.mxu0 0.0
        %522 = vmatpush1.msra.mxu0 0.0
        %523 = vmatprep.subr.mxu0 0.0
        %524 = vmatpush1.msra.mxu0 0.0
        %525 = vmatprep.subr.mxu0 0.0
        %526 = vmatpush1.msra.mxu0 0.0
        %527 = vmatprep.subr.mxu0 0.0
        %528 = vmatpush1.msra.mxu0 0.0
        %529 = vmatprep.subr.mxu0 0.0
        %530 = vmatpush1.msra.mxu0 0.0
        %531 = vmatprep.subr.mxu0 0.0
        %532 = vmatpush1.msra.mxu0 0.0
        %533 = vmatprep.subr.mxu0 0.0
        %534 = vmatpush1.msra.mxu0 0.0
        %535 = vmatprep.subr.mxu0 0.0
        %536 = vmatpush1.msra.mxu0 0.0
        %537 = vmatprep.subr.mxu0 0.0
        %538 = vmatpush1.msra.mxu0 0.0
        %539 = vmatprep.subr.mxu0 0.0
        %540 = vmatpush1.msra.mxu0 0.0
        %541 = vmatprep.subr.mxu0 0.0
        %542 = vmatpush1.msra.mxu0 0.0
        %543 = vmatprep.subr.mxu0 0.0
        %544 = vmatpush1.msra.mxu0 0.0
        %545 = vmatprep.subr.mxu0 0.0
        %546 = vmatpush1.msra.mxu0 0.0
        %547 = vmatprep.subr.mxu0 0.0
        %548 = vmatpush1.msra.mxu0 0.0
        %549 = vmatprep.subr.mxu0 0.0
        %550 = vmatpush1.msra.mxu0 0.0
        %551 = vmatprep.mubr.f32.mxu0 0.0
        %v552 = vand.u32 %v352, 4294901760
        %553 = vmatmul.mubr.f32.gmra.mrb[0].mxu0 %v552
        %v554 = vpop.f32.mrb[0].mxu0
        %v555 = vadd.f32 %v431, %v554
        %v556 = vpop.f32.mrb[0].mxu0
        %557 = vdwg.mxu0
        %558 = vmatprep.subr.mxu0 0.0
        %v559 = vsub.f32 %v332, %v332
        %560 = vmatpush1.msra.mxu0 %v559
        %561 = vmatprep.subr.mxu0 0.0
        %v562 = vsub.f32 %v333, %v333
        %563 = vmatpush1.msra.mxu0 %v562
        %564 = vmatprep.subr.mxu0 0.0
        %v565 = vsub.f32 %v334, %v334
        %566 = vmatpush1.msra.mxu0 %v565
        %567 = vmatprep.subr.mxu0 0.0
        %v568 = vsub.f32 %v335, %v335
        %569 = vmatpush1.msra.mxu0 %v568
        %570 = vmatprep.subr.mxu0 0.0
        %v571 = vsub.f32 %v336, %v336
        %572 = vmatpush1.msra.mxu0 %v571
        %573 = vmatprep.subr.mxu0 0.0
        %v574 = vsub.f32 %v337, %v337
        %575 = vmatpush1.msra.mxu0 %v574
        %576 = vmatprep.subr.mxu0 0.0
        %v577 = vsub.f32 %v338, %v338
        %578 = vmatpush1.msra.mxu0 %v577
        %579 = vmatprep.subr.mxu0 0.0
        %v580 = vsub.f32 %v339, %v339
        %581 = vmatpush1.msra.mxu0 %v580
        %582 = vmatprep.subr.mxu0 0.0
        %v583 = vsub.f32 %v340, %v340
        %584 = vmatpush1.msra.mxu0 %v583
        %585 = vmatprep.subr.mxu0 0.0
        %v586 = vsub.f32 %v341, %v341
        %587 = vmatpush1.msra.mxu0 %v586
        %588 = vmatprep.subr.mxu0 0.0
        %v589 = vsub.f32 %v342, %v342
        %590 = vmatpush1.msra.mxu0 %v589
        %591 = vmatprep.subr.mxu0 0.0
        %v592 = vsub.f32 %v343, %v343
        %593 = vmatpush1.msra.mxu0 %v592
        %594 = vmatprep.subr.mxu0 0.0
        %v595 = vand.u32 %v356, 4294901760
        %v596 = vsub.f32 %v356, %v595
        %597 = vmatpush1.msra.mxu0 %v596
        %598 = vmatprep.subr.mxu0 0.0
        %599 = vmatpush1.msra.mxu0 0.0
        %600 = vmatprep.subr.mxu0 0.0
        %601 = vmatpush1.msra.mxu0 0.0
        %602 = vmatprep.subr.mxu0 0.0
        %603 = vmatpush1.msra.mxu0 0.0
        %604 = vmatprep.subr.mxu0 0.0
        %605 = vmatpush1.msra.mxu0 0.0
        %606 = vmatprep.subr.mxu0 0.0
        %607 = vmatpush1.msra.mxu0 0.0
        %608 = vmatprep.subr.mxu0 0.0
        %609 = vmatpush1.msra.mxu0 0.0
        %610 = vmatprep.subr.mxu0 0.0
        %611 = vmatpush1.msra.mxu0 0.0
        %612 = vmatprep.subr.mxu0 0.0
        %613 = vmatpush1.msra.mxu0 0.0
        %614 = vmatprep.subr.mxu0 0.0
        %615 = vmatpush1.msra.mxu0 0.0
        %616 = vmatprep.subr.mxu0 0.0
        %617 = vmatpush1.msra.mxu0 0.0
        %618 = vmatprep.subr.mxu0 0.0
        %619 = vmatpush1.msra.mxu0 0.0
        %620 = vmatprep.subr.mxu0 0.0
        %621 = vmatpush1.msra.mxu0 0.0
        %622 = vmatprep.subr.mxu0 0.0
        %623 = vmatpush1.msra.mxu0 0.0
        %624 = vmatprep.subr.mxu0 0.0
        %625 = vmatpush1.msra.mxu0 0.0
        %626 = vmatprep.subr.mxu0 0.0
        %627 = vmatpush1.msra.mxu0 0.0
        %628 = vmatprep.subr.mxu0 0.0
        %629 = vmatpush1.msra.mxu0 0.0
        %630 = vmatprep.subr.mxu0 0.0
        %631 = vmatpush1.msra.mxu0 0.0
        %632 = vmatprep.subr.mxu0 0.0
        %633 = vmatpush1.msra.mxu0 0.0
        %634 = vmatprep.subr.mxu0 0.0
        %635 = vmatpush1.msra.mxu0 0.0
        %636 = vmatprep.mubr.f32.mxu0 0.0
        %v637 = vand.u32 %v352, 4294901760
        %v638 = vsub.f32 %v352, %v637
        %639 = vmatmul.mubr.f32.gmra.mrb[0].mxu0 %v638
        %v640 = vpop.f32.mrb[0].mxu0
        %v641 = vadd.f32 %v555, %v640
        %v642 = vpop.f32.mrb[0].mxu0
        %643 = vdwg.mxu0
        %644 = vmatprep.subr.mxu0 0.0
        %645 = vmatpush1.msra.mxu0 %v332
        %646 = vmatprep.subr.mxu0 0.0
        %647 = vmatpush1.msra.mxu0 %v333
        %648 = vmatprep.subr.mxu0 0.0
        %649 = vmatpush1.msra.mxu0 %v334
        %650 = vmatprep.subr.mxu0 0.0
        %651 = vmatpush1.msra.mxu0 %v335
        %652 = vmatprep.subr.mxu0 0.0
        %653 = vmatpush1.msra.mxu0 %v336
        %654 = vmatprep.subr.mxu0 0.0
        %655 = vmatpush1.msra.mxu0 %v337
        %656 = vmatprep.subr.mxu0 0.0
        %657 = vmatpush1.msra.mxu0 %v338
        %658 = vmatprep.subr.mxu0 0.0
        %659 = vmatpush1.msra.mxu0 %v339
        %660 = vmatprep.subr.mxu0 0.0
        %661 = vmatpush1.msra.mxu0 %v340
        %662 = vmatprep.subr.mxu0 0.0
        %663 = vmatpush1.msra.mxu0 %v341
        %664 = vmatprep.subr.mxu0 0.0
        %665 = vmatpush1.msra.mxu0 %v342
        %666 = vmatprep.subr.mxu0 0.0
        %667 = vmatpush1.msra.mxu0 %v343
        %668 = vmatprep.subr.mxu0 0.0
        %v669 = vand.u32 %v356, 4294901760
        %670 = vmatpush1.msra.mxu0 %v669
        %671 = vmatprep.subr.mxu0 0.0
        %672 = vmatpush1.msra.mxu0 0.0
        %673 = vmatprep.subr.mxu0 0.0
        %674 = vmatpush1.msra.mxu0 0.0
        %675 = vmatprep.subr.mxu0 0.0
        %676 = vmatpush1.msra.mxu0 0.0
        %677 = vmatprep.subr.mxu0 0.0
        %678 = vmatpush1.msra.mxu0 0.0
        %679 = vmatprep.subr.mxu0 0.0
        %680 = vmatpush1.msra.mxu0 0.0
        %681 = vmatprep.subr.mxu0 0.0
        %682 = vmatpush1.msra.mxu0 0.0
        %683 = vmatprep.subr.mxu0 0.0
        %684 = vmatpush1.msra.mxu0 0.0
        %685 = vmatprep.subr.mxu0 0.0
        %686 = vmatpush1.msra.mxu0 0.0
        %687 = vmatprep.subr.mxu0 0.0
        %688 = vmatpush1.msra.mxu0 0.0
        %689 = vmatprep.subr.mxu0 0.0
        %690 = vmatpush1.msra.mxu0 0.0
        %691 = vmatprep.subr.mxu0 0.0
        %692 = vmatpush1.msra.mxu0 0.0
        %693 = vmatprep.subr.mxu0 0.0
        %694 = vmatpush1.msra.mxu0 0.0
        %695 = vmatprep.subr.mxu0 0.0
        %696 = vmatpush1.msra.mxu0 0.0
        %697 = vmatprep.subr.mxu0 0.0
        %698 = vmatpush1.msra.mxu0 0.0
        %699 = vmatprep.subr.mxu0 0.0
        %700 = vmatpush1.msra.mxu0 0.0
        %701 = vmatprep.subr.mxu0 0.0
        %702 = vmatpush1.msra.mxu0 0.0
        %703 = vmatprep.subr.mxu0 0.0
        %704 = vmatpush1.msra.mxu0 0.0
        %705 = vmatprep.subr.mxu0 0.0
        %706 = vmatpush1.msra.mxu0 0.0
        %707 = vmatprep.subr.mxu0 0.0
        %708 = vmatpush1.msra.mxu0 0.0
        %709 = vmatprep.mubr.f32.mxu0 0.0
        %v710 = vand.u32 %v352, 4294901760
        %v711 = vsub.f32 %v352, %v710
        %v712 = vand.u32 %v711, 4294901760
        %713 = vmatmul.mubr.f32.gmra.mrb[0].mxu0 %v712
        %v714 = vpop.f32.mrb[0].mxu0
        %v715 = vadd.f32 %v641, %v714
        %v716 = vpop.f32.mrb[0].mxu0
        %717 = vdwg.mxu0
        %718 = vmatprep.subr.mxu0 0.0
        %v719 = vsub.f32 %v332, %v332
        %v720 = vand.u32 %v719, 4294901760
        %721 = vmatpush1.msra.mxu0 %v720
        %722 = vmatprep.subr.mxu0 0.0
        %v723 = vsub.f32 %v333, %v333
        %v724 = vand.u32 %v723, 4294901760
        %725 = vmatpush1.msra.mxu0 %v724
        %726 = vmatprep.subr.mxu0 0.0
        %v727 = vsub.f32 %v334, %v334
        %v728 = vand.u32 %v727, 4294901760
        %729 = vmatpush1.msra.mxu0 %v728
        %730 = vmatprep.subr.mxu0 0.0
        %v731 = vsub.f32 %v335, %v335
        %v732 = vand.u32 %v731, 4294901760
        %733 = vmatpush1.msra.mxu0 %v732
        %734 = vmatprep.subr.mxu0 0.0
        %v735 = vsub.f32 %v336, %v336
        %v736 = vand.u32 %v735, 4294901760
        %737 = vmatpush1.msra.mxu0 %v736
        %738 = vmatprep.subr.mxu0 0.0
        %v739 = vsub.f32 %v337, %v337
        %v740 = vand.u32 %v739, 4294901760
        %741 = vmatpush1.msra.mxu0 %v740
        %742 = vmatprep.subr.mxu0 0.0
        %v743 = vsub.f32 %v338, %v338
        %v744 = vand.u32 %v743, 4294901760
        %745 = vmatpush1.msra.mxu0 %v744
        %746 = vmatprep.subr.mxu0 0.0
        %v747 = vsub.f32 %v339, %v339
        %v748 = vand.u32 %v747, 4294901760
        %749 = vmatpush1.msra.mxu0 %v748
        %750 = vmatprep.subr.mxu0 0.0
        %v751 = vsub.f32 %v340, %v340
        %v752 = vand.u32 %v751, 4294901760
        %753 = vmatpush1.msra.mxu0 %v752
        %754 = vmatprep.subr.mxu0 0.0
        %v755 = vsub.f32 %v341, %v341
        %v756 = vand.u32 %v755, 4294901760
        %757 = vmatpush1.msra.mxu0 %v756
        %758 = vmatprep.subr.mxu0 0.0
        %v759 = vsub.f32 %v342, %v342
        %v760 = vand.u32 %v759, 4294901760
        %761 = vmatpush1.msra.mxu0 %v760
        %762 = vmatprep.subr.mxu0 0.0
        %v763 = vsub.f32 %v343, %v343
        %v764 = vand.u32 %v763, 4294901760
        %765 = vmatpush1.msra.mxu0 %v764
        %766 = vmatprep.subr.mxu0 0.0
        %v767 = vand.u32 %v356, 4294901760
        %v768 = vsub.f32 %v356, %v767
        %v769 = vand.u32 %v768, 4294901760
        %770 = vmatpush1.msra.mxu0 %v769
        %771 = vmatprep.subr.mxu0 0.0
        %772 = vmatpush1.msra.mxu0 0.0
        %773 = vmatprep.subr.mxu0 0.0
        %774 = vmatpush1.msra.mxu0 0.0
        %775 = vmatprep.subr.mxu0 0.0
        %776 = vmatpush1.msra.mxu0 0.0
        %777 = vmatprep.subr.mxu0 0.0
        %778 = vmatpush1.msra.mxu0 0.0
        %779 = vmatprep.subr.mxu0 0.0
        %780 = vmatpush1.msra.mxu0 0.0
        %781 = vmatprep.subr.mxu0 0.0
        %782 = vmatpush1.msra.mxu0 0.0
        %783 = vmatprep.subr.mxu0 0.0
        %784 = vmatpush1.msra.mxu0 0.0
        %785 = vmatprep.subr.mxu0 0.0
        %786 = vmatpush1.msra.mxu0 0.0
        %787 = vmatprep.subr.mxu0 0.0
        %788 = vmatpush1.msra.mxu0 0.0
        %789 = vmatprep.subr.mxu0 0.0
        %790 = vmatpush1.msra.mxu0 0.0
        %791 = vmatprep.subr.mxu0 0.0
        %792 = vmatpush1.msra.mxu0 0.0
        %793 = vmatprep.subr.mxu0 0.0
        %794 = vmatpush1.msra.mxu0 0.0
        %795 = vmatprep.subr.mxu0 0.0
        %796 = vmatpush1.msra.mxu0 0.0
        %797 = vmatprep.subr.mxu0 0.0
        %798 = vmatpush1.msra.mxu0 0.0
        %799 = vmatprep.subr.mxu0 0.0
        %800 = vmatpush1.msra.mxu0 0.0
        %801 = vmatprep.subr.mxu0 0.0
        %802 = vmatpush1.msra.mxu0 0.0
        %803 = vmatprep.subr.mxu0 0.0
        %804 = vmatpush1.msra.mxu0 0.0
        %805 = vmatprep.subr.mxu0 0.0
        %806 = vmatpush1.msra.mxu0 0.0
        %807 = vmatprep.subr.mxu0 0.0
        %808 = vmatpush1.msra.mxu0 0.0
        %809 = vmatprep.mubr.f32.mxu0 0.0
        %v810 = vand.u32 %v352, 4294901760
        %811 = vmatmul.mubr.f32.gmra.mrb[0].mxu0 %v810
        %v812 = vpop.f32.mrb[0].mxu0
        %v813 = vadd.f32 %v715, %v812
        %v814 = vpop.f32.mrb[0].mxu0
        %815 = vdwg.mxu0
        %816 = vmatprep.subr.mxu0 0.0
        %817 = vmatpush1.msra.mxu0 %v332
        %818 = vmatprep.subr.mxu0 0.0
        %819 = vmatpush1.msra.mxu0 %v333
        %820 = vmatprep.subr.mxu0 0.0
        %821 = vmatpush1.msra.mxu0 %v334
        %822 = vmatprep.subr.mxu0 0.0
        %823 = vmatpush1.msra.mxu0 %v335
        %824 = vmatprep.subr.mxu0 0.0
        %825 = vmatpush1.msra.mxu0 %v336
        %826 = vmatprep.subr.mxu0 0.0
        %827 = vmatpush1.msra.mxu0 %v337
        %828 = vmatprep.subr.mxu0 0.0
        %829 = vmatpush1.msra.mxu0 %v338
        %830 = vmatprep.subr.mxu0 0.0
        %831 = vmatpush1.msra.mxu0 %v339
        %832 = vmatprep.subr.mxu0 0.0
        %833 = vmatpush1.msra.mxu0 %v340
        %834 = vmatprep.subr.mxu0 0.0
        %835 = vmatpush1.msra.mxu0 %v341
        %836 = vmatprep.subr.mxu0 0.0
        %837 = vmatpush1.msra.mxu0 %v342
        %838 = vmatprep.subr.mxu0 0.0
        %839 = vmatpush1.msra.mxu0 %v343
        %840 = vmatprep.subr.mxu0 0.0
        %v841 = vand.u32 %v356, 4294901760
        %842 = vmatpush1.msra.mxu0 %v841
        %843 = vmatprep.subr.mxu0 0.0
        %844 = vmatpush1.msra.mxu0 0.0
        %845 = vmatprep.subr.mxu0 0.0
        %846 = vmatpush1.msra.mxu0 0.0
        %847 = vmatprep.subr.mxu0 0.0
        %848 = vmatpush1.msra.mxu0 0.0
        %849 = vmatprep.subr.mxu0 0.0
        %850 = vmatpush1.msra.mxu0 0.0
        %851 = vmatprep.subr.mxu0 0.0
        %852 = vmatpush1.msra.mxu0 0.0
        %853 = vmatprep.subr.mxu0 0.0
        %854 = vmatpush1.msra.mxu0 0.0
        %855 = vmatprep.subr.mxu0 0.0
        %856 = vmatpush1.msra.mxu0 0.0
        %857 = vmatprep.subr.mxu0 0.0
        %858 = vmatpush1.msra.mxu0 0.0
        %859 = vmatprep.subr.mxu0 0.0
        %860 = vmatpush1.msra.mxu0 0.0
        %861 = vmatprep.subr.mxu0 0.0
        %862 = vmatpush1.msra.mxu0 0.0
        %863 = vmatprep.subr.mxu0 0.0
        %864 = vmatpush1.msra.mxu0 0.0
        %865 = vmatprep.subr.mxu0 0.0
        %866 = vmatpush1.msra.mxu0 0.0
        %867 = vmatprep.subr.mxu0 0.0
        %868 = vmatpush1.msra.mxu0 0.0
        %869 = vmatprep.subr.mxu0 0.0
        %870 = vmatpush1.msra.mxu0 0.0
        %871 = vmatprep.subr.mxu0 0.0
        %872 = vmatpush1.msra.mxu0 0.0
        %873 = vmatprep.subr.mxu0 0.0
        %874 = vmatpush1.msra.mxu0 0.0
        %875 = vmatprep.subr.mxu0 0.0
        %876 = vmatpush1.msra.mxu0 0.0
        %877 = vmatprep.subr.mxu0 0.0
        %878 = vmatpush1.msra.mxu0 0.0
        %879 = vmatprep.subr.mxu0 0.0
        %880 = vmatpush1.msra.mxu0 0.0
        %881 = vmatprep.mubr.f32.mxu0 0.0
        %v882 = vand.u32 %v352, 4294901760
        %883 = vmatmul.mubr.f32.gmra.mrb[0].mxu0 %v882
        %v884 = vpop.f32.mrb[0].mxu0
        %v885 = vadd.f32 %v813, %v884
        %v886 = vpop.f32.mrb[0].mxu0
        %887 = vdwg.mxu0
        %v888 = vmax.f32 %v885, 0.0
        %v890 = vrot.slane %v885, 1
        %v893 = vmul.f32 %v348, %v885
        %v894 = vmul.f32 %v349, %v890
        %v897 = vrot.slane %v894, 7
        %vm898 = vcmask 1041409
        %v899 = vsel %vm898, %v897, %v893
        %v901 = vsub.f32 %v888, %v899
        %v902 = vand.u32 2147483647, %v885
        %v903 = vsub.f32 0.0, %v902
        %v904 = vmul.f32 %v903, 1.442695
        %v905 = vpow.pop %v904
        %v906 = vadd.f32 %v905, 1.0
        %v907 = vlog2.pop %v906
        %v908 = vmul.f32 %v907, 0.6931472
        %v909 = vadd.f32 %v901, %v908
        %vm910 = vcmask 394240
        %v911 = vsel %vm910, %v909, 0.0
        %912 = vadd.xlane.f32.xlu0 %v911
        %v913 = vpop.xlane.xlu0 %912
        %v914 = vadd.f32 %v913, 0.0
        %s915 = scalar_lea.vmem %s208, 2 [#allocation2]
        %v916 = vld [vmem:[%s915] sm:$0x3]
        %v917 = vld [vmem:[%s217 + $0x1] sm:$0x1]
        %v918 = vld [vmem:[%s217 + $0x9] sm:$0x1]
        %v919 = vcvt.s32.f32 %v917
        %v920 = vcvt.s32.f32 %v918
        %v922 = vsel %vm350, %v916, 0
        %924 = vmatprep.subr.mxu0 0.0
        %925 = vmatpush1.msra.mxu0 %v332
        %926 = vmatprep.subr.mxu0 0.0
        %927 = vmatpush1.msra.mxu0 %v333
        %928 = vmatprep.subr.mxu0 0.0
        %929 = vmatpush1.msra.mxu0 %v334
        %930 = vmatprep.subr.mxu0 0.0
        %931 = vmatpush1.msra.mxu0 %v335
        %932 = vmatprep.subr.mxu0 0.0
        %933 = vmatpush1.msra.mxu0 %v336
        %934 = vmatprep.subr.mxu0 0.0
        %935 = vmatpush1.msra.mxu0 %v337
        %936 = vmatprep.subr.mxu0 0.0
        %937 = vmatpush1.msra.mxu0 %v338
        %938 = vmatprep.subr.mxu0 0.0
        %939 = vmatpush1.msra.mxu0 %v339
        %940 = vmatprep.subr.mxu0 0.0
        %941 = vmatpush1.msra.mxu0 %v340
        %942 = vmatprep.subr.mxu0 0.0
        %943 = vmatpush1.msra.mxu0 %v341
        %944 = vmatprep.subr.mxu0 0.0
        %945 = vmatpush1.msra.mxu0 %v342
        %946 = vmatprep.subr.mxu0 0.0
        %947 = vmatpush1.msra.mxu0 %v343
        %948 = vmatprep.subr.mxu0 0.0
        %v949 = vand.u32 %v356, 4294901760
        %950 = vmatpush1.msra.mxu0 %v949
        %951 = vmatprep.subr.mxu0 0.0
        %952 = vmatpush1.msra.mxu0 0.0
        %953 = vmatprep.subr.mxu0 0.0
        %954 = vmatpush1.msra.mxu0 0.0
        %955 = vmatprep.subr.mxu0 0.0
        %956 = vmatpush1.msra.mxu0 0.0
        %957 = vmatprep.subr.mxu0 0.0
        %958 = vmatpush1.msra.mxu0 0.0
        %959 = vmatprep.subr.mxu0 0.0
        %960 = vmatpush1.msra.mxu0 0.0
        %961 = vmatprep.subr.mxu0 0.0
        %962 = vmatpush1.msra.mxu0 0.0
        %963 = vmatprep.subr.mxu0 0.0
        %964 = vmatpush1.msra.mxu0 0.0
        %965 = vmatprep.subr.mxu0 0.0
        %966 = vmatpush1.msra.mxu0 0.0
        %967 = vmatprep.subr.mxu0 0.0
        %968 = vmatpush1.msra.mxu0 0.0
        %969 = vmatprep.subr.mxu0 0.0
        %970 = vmatpush1.msra.mxu0 0.0
        %971 = vmatprep.subr.mxu0 0.0
        %972 = vmatpush1.msra.mxu0 0.0
        %973 = vmatprep.subr.mxu0 0.0
        %974 = vmatpush1.msra.mxu0 0.0
        %975 = vmatprep.subr.mxu0 0.0
        %976 = vmatpush1.msra.mxu0 0.0
        %977 = vmatprep.subr.mxu0 0.0
        %978 = vmatpush1.msra.mxu0 0.0
        %979 = vmatprep.subr.mxu0 0.0
        %980 = vmatpush1.msra.mxu0 0.0
        %981 = vmatprep.subr.mxu0 0.0
        %982 = vmatpush1.msra.mxu0 0.0
        %983 = vmatprep.subr.mxu0 0.0
        %984 = vmatpush1.msra.mxu0 0.0
        %985 = vmatprep.subr.mxu0 0.0
        %986 = vmatpush1.msra.mxu0 0.0
        %987 = vmatprep.subr.mxu0 0.0
        %988 = vmatpush1.msra.mxu0 0.0
        %989 = vmatprep.mubr.f32.mxu0 0.0
        %v990 = vand.u32 %v922, 4294901760
        %v991 = vsub.f32 %v922, %v990
        %v992 = vand.u32 %v991, 4294901760
        %v993 = vsub.f32 %v991, %v992
        %v994 = vand.u32 %v993, 4294901760
        %995 = vmatmul.mubr.f32.gmra.mrb[0].mxu0 %v994
        %v996 = vpop.f32.mrb[0].mxu0
        %v997 = vadd.f32 0.0, %v996
        %v998 = vpop.f32.mrb[0].mxu0
        %999 = vdwg.mxu0
        %1000 = vmatprep.subr.mxu0 0.0
        %v1001 = vsub.f32 %v332, %v332
        %v1002 = vand.u32 %v1001, 4294901760
        %v1003 = vsub.f32 %v1001, %v1002
        %v1004 = vand.u32 %v1003, 4294901760
        %1005 = vmatpush1.msra.mxu0 %v1004
        %1006 = vmatprep.subr.mxu0 0.0
        %v1007 = vsub.f32 %v333, %v333
        %v1008 = vand.u32 %v1007, 4294901760
        %v1009 = vsub.f32 %v1007, %v1008
        %v1010 = vand.u32 %v1009, 4294901760
        %1011 = vmatpush1.msra.mxu0 %v1010
        %1012 = vmatprep.subr.mxu0 0.0
        %v1013 = vsub.f32 %v334, %v334
        %v1014 = vand.u32 %v1013, 4294901760
        %v1015 = vsub.f32 %v1013, %v1014
        %v1016 = vand.u32 %v1015, 4294901760
        %1017 = vmatpush1.msra.mxu0 %v1016
        %1018 = vmatprep.subr.mxu0 0.0
        %v1019 = vsub.f32 %v335, %v335
        %v1020 = vand.u32 %v1019, 4294901760
        %v1021 = vsub.f32 %v1019, %v1020
        %v1022 = vand.u32 %v1021, 4294901760
        %1023 = vmatpush1.msra.mxu0 %v1022
        %1024 = vmatprep.subr.mxu0 0.0
        %v1025 = vsub.f32 %v336, %v336
        %v1026 = vand.u32 %v1025, 4294901760
        %v1027 = vsub.f32 %v1025, %v1026
        %v1028 = vand.u32 %v1027, 4294901760
        %1029 = vmatpush1.msra.mxu0 %v1028
        %1030 = vmatprep.subr.mxu0 0.0
        %v1031 = vsub.f32 %v337, %v337
        %v1032 = vand.u32 %v1031, 4294901760
        %v1033 = vsub.f32 %v1031, %v1032
        %v1034 = vand.u32 %v1033, 4294901760
        %1035 = vmatpush1.msra.mxu0 %v1034
        %1036 = vmatprep.subr.mxu0 0.0
        %v1037 = vsub.f32 %v338, %v338
        %v1038 = vand.u32 %v1037, 4294901760
        %v1039 = vsub.f32 %v1037, %v1038
        %v1040 = vand.u32 %v1039, 4294901760
        %1041 = vmatpush1.msra.mxu0 %v1040
        %1042 = vmatprep.subr.mxu0 0.0
        %v1043 = vsub.f32 %v339, %v339
        %v1044 = vand.u32 %v1043, 4294901760
        %v1045 = vsub.f32 %v1043, %v1044
        %v1046 = vand.u32 %v1045, 4294901760
        %1047 = vmatpush1.msra.mxu0 %v1046
        %1048 = vmatprep.subr.mxu0 0.0
        %v1049 = vsub.f32 %v340, %v340
        %v1050 = vand.u32 %v1049, 4294901760
        %v1051 = vsub.f32 %v1049, %v1050
        %v1052 = vand.u32 %v1051, 4294901760
        %1053 = vmatpush1.msra.mxu0 %v1052
        %1054 = vmatprep.subr.mxu0 0.0
        %v1055 = vsub.f32 %v341, %v341
        %v1056 = vand.u32 %v1055, 4294901760
        %v1057 = vsub.f32 %v1055, %v1056
        %v1058 = vand.u32 %v1057, 4294901760
        %1059 = vmatpush1.msra.mxu0 %v1058
        %1060 = vmatprep.subr.mxu0 0.0
        %v1061 = vsub.f32 %v342, %v342
        %v1062 = vand.u32 %v1061, 4294901760
        %v1063 = vsub.f32 %v1061, %v1062
        %v1064 = vand.u32 %v1063, 4294901760
        %1065 = vmatpush1.msra.mxu0 %v1064
        %1066 = vmatprep.subr.mxu0 0.0
        %v1067 = vsub.f32 %v343, %v343
        %v1068 = vand.u32 %v1067, 4294901760
        %v1069 = vsub.f32 %v1067, %v1068
        %v1070 = vand.u32 %v1069, 4294901760
        %1071 = vmatpush1.msra.mxu0 %v1070
        %1072 = vmatprep.subr.mxu0 0.0
        %v1073 = vand.u32 %v356, 4294901760
        %v1074 = vsub.f32 %v356, %v1073
        %v1075 = vand.u32 %v1074, 4294901760
        %v1076 = vsub.f32 %v1074, %v1075
        %v1077 = vand.u32 %v1076, 4294901760
        %1078 = vmatpush1.msra.mxu0 %v1077
        %1079 = vmatprep.subr.mxu0 0.0
        %1080 = vmatpush1.msra.mxu0 0.0
        %1081 = vmatprep.subr.mxu0 0.0
        %1082 = vmatpush1.msra.mxu0 0.0
        %1083 = vmatprep.subr.mxu0 0.0
        %1084 = vmatpush1.msra.mxu0 0.0
        %1085 = vmatprep.subr.mxu0 0.0
        %1086 = vmatpush1.msra.mxu0 0.0
        %1087 = vmatprep.subr.mxu0 0.0
        %1088 = vmatpush1.msra.mxu0 0.0
        %1089 = vmatprep.subr.mxu0 0.0
        %1090 = vmatpush1.msra.mxu0 0.0
        %1091 = vmatprep.subr.mxu0 0.0
        %1092 = vmatpush1.msra.mxu0 0.0
        %1093 = vmatprep.subr.mxu0 0.0
        %1094 = vmatpush1.msra.mxu0 0.0
        %1095 = vmatprep.subr.mxu0 0.0
        %1096 = vmatpush1.msra.mxu0 0.0
        %1097 = vmatprep.subr.mxu0 0.0
        %1098 = vmatpush1.msra.mxu0 0.0
        %1099 = vmatprep.subr.mxu0 0.0
        %1100 = vmatpush1.msra.mxu0 0.0
        %1101 = vmatprep.subr.mxu0 0.0
        %1102 = vmatpush1.msra.mxu0 0.0
        %1103 = vmatprep.subr.mxu0 0.0
        %1104 = vmatpush1.msra.mxu0 0.0
        %1105 = vmatprep.subr.mxu0 0.0
        %1106 = vmatpush1.msra.mxu0 0.0
        %1107 = vmatprep.subr.mxu0 0.0
        %1108 = vmatpush1.msra.mxu0 0.0
        %1109 = vmatprep.subr.mxu0 0.0
        %1110 = vmatpush1.msra.mxu0 0.0
        %1111 = vmatprep.subr.mxu0 0.0
        %1112 = vmatpush1.msra.mxu0 0.0
        %1113 = vmatprep.subr.mxu0 0.0
        %1114 = vmatpush1.msra.mxu0 0.0
        %1115 = vmatprep.subr.mxu0 0.0
        %1116 = vmatpush1.msra.mxu0 0.0
        %1117 = vmatprep.mubr.f32.mxu0 0.0
        %v1118 = vand.u32 %v922, 4294901760
        %1119 = vmatmul.mubr.f32.gmra.mrb[0].mxu0 %v1118
        %v1120 = vpop.f32.mrb[0].mxu0
        %v1121 = vadd.f32 %v997, %v1120
        %v1122 = vpop.f32.mrb[0].mxu0
        %1123 = vdwg.mxu0
        %1124 = vmatprep.subr.mxu0 0.0
        %v1125 = vsub.f32 %v332, %v332
        %1126 = vmatpush1.msra.mxu0 %v1125
        %1127 = vmatprep.subr.mxu0 0.0
        %v1128 = vsub.f32 %v333, %v333
        %1129 = vmatpush1.msra.mxu0 %v1128
        %1130 = vmatprep.subr.mxu0 0.0
        %v1131 = vsub.f32 %v334, %v334
        %1132 = vmatpush1.msra.mxu0 %v1131
        %1133 = vmatprep.subr.mxu0 0.0
        %v1134 = vsub.f32 %v335, %v335
        %1135 = vmatpush1.msra.mxu0 %v1134
        %1136 = vmatprep.subr.mxu0 0.0
        %v1137 = vsub.f32 %v336, %v336
        %1138 = vmatpush1.msra.mxu0 %v1137
        %1139 = vmatprep.subr.mxu0 0.0
        %v1140 = vsub.f32 %v337, %v337
        %1141 = vmatpush1.msra.mxu0 %v1140
        %1142 = vmatprep.subr.mxu0 0.0
        %v1143 = vsub.f32 %v338, %v338
        %1144 = vmatpush1.msra.mxu0 %v1143
        %1145 = vmatprep.subr.mxu0 0.0
        %v1146 = vsub.f32 %v339, %v339
        %1147 = vmatpush1.msra.mxu0 %v1146
        %1148 = vmatprep.subr.mxu0 0.0
        %v1149 = vsub.f32 %v340, %v340
        %1150 = vmatpush1.msra.mxu0 %v1149
        %1151 = vmatprep.subr.mxu0 0.0
        %v1152 = vsub.f32 %v341, %v341
        %1153 = vmatpush1.msra.mxu0 %v1152
        %1154 = vmatprep.subr.mxu0 0.0
        %v1155 = vsub.f32 %v342, %v342
        %1156 = vmatpush1.msra.mxu0 %v1155
        %1157 = vmatprep.subr.mxu0 0.0
        %v1158 = vsub.f32 %v343, %v343
        %1159 = vmatpush1.msra.mxu0 %v1158
        %1160 = vmatprep.subr.mxu0 0.0
        %v1161 = vand.u32 %v356, 4294901760
        %v1162 = vsub.f32 %v356, %v1161
        %1163 = vmatpush1.msra.mxu0 %v1162
        %1164 = vmatprep.subr.mxu0 0.0
        %1165 = vmatpush1.msra.mxu0 0.0
        %1166 = vmatprep.subr.mxu0 0.0
        %1167 = vmatpush1.msra.mxu0 0.0
        %1168 = vmatprep.subr.mxu0 0.0
        %1169 = vmatpush1.msra.mxu0 0.0
        %1170 = vmatprep.subr.mxu0 0.0
        %1171 = vmatpush1.msra.mxu0 0.0
        %1172 = vmatprep.subr.mxu0 0.0
        %1173 = vmatpush1.msra.mxu0 0.0
        %1174 = vmatprep.subr.mxu0 0.0
        %1175 = vmatpush1.msra.mxu0 0.0
        %1176 = vmatprep.subr.mxu0 0.0
        %1177 = vmatpush1.msra.mxu0 0.0
        %1178 = vmatprep.subr.mxu0 0.0
        %1179 = vmatpush1.msra.mxu0 0.0
        %1180 = vmatprep.subr.mxu0 0.0
        %1181 = vmatpush1.msra.mxu0 0.0
        %1182 = vmatprep.subr.mxu0 0.0
        %1183 = vmatpush1.msra.mxu0 0.0
        %1184 = vmatprep.subr.mxu0 0.0
        %1185 = vmatpush1.msra.mxu0 0.0
        %1186 = vmatprep.subr.mxu0 0.0
        %1187 = vmatpush1.msra.mxu0 0.0
        %1188 = vmatprep.subr.mxu0 0.0
        %1189 = vmatpush1.msra.mxu0 0.0
        %1190 = vmatprep.subr.mxu0 0.0
        %1191 = vmatpush1.msra.mxu0 0.0
        %1192 = vmatprep.subr.mxu0 0.0
        %1193 = vmatpush1.msra.mxu0 0.0
        %1194 = vmatprep.subr.mxu0 0.0
        %1195 = vmatpush1.msra.mxu0 0.0
        %1196 = vmatprep.subr.mxu0 0.0
        %1197 = vmatpush1.msra.mxu0 0.0
        %1198 = vmatprep.subr.mxu0 0.0
        %1199 = vmatpush1.msra.mxu0 0.0
        %1200 = vmatprep.subr.mxu0 0.0
        %1201 = vmatpush1.msra.mxu0 0.0
        %1202 = vmatprep.mubr.f32.mxu0 0.0
        %v1203 = vand.u32 %v922, 4294901760
        %v1204 = vsub.f32 %v922, %v1203
        %1205 = vmatmul.mubr.f32.gmra.mrb[0].mxu0 %v1204
        %v1206 = vpop.f32.mrb[0].mxu0
        %v1207 = vadd.f32 %v1121, %v1206
        %v1208 = vpop.f32.mrb[0].mxu0
        %1209 = vdwg.mxu0
        %1210 = vmatprep.subr.mxu0 0.0
        %1211 = vmatpush1.msra.mxu0 %v332
        %1212 = vmatprep.subr.mxu0 0.0
        %1213 = vmatpush1.msra.mxu0 %v333
        %1214 = vmatprep.subr.mxu0 0.0
        %1215 = vmatpush1.msra.mxu0 %v334
        %1216 = vmatprep.subr.mxu0 0.0
        %1217 = vmatpush1.msra.mxu0 %v335
        %1218 = vmatprep.subr.mxu0 0.0
        %1219 = vmatpush1.msra.mxu0 %v336
        %1220 = vmatprep.subr.mxu0 0.0
        %1221 = vmatpush1.msra.mxu0 %v337
        %1222 = vmatprep.subr.mxu0 0.0
        %1223 = vmatpush1.msra.mxu0 %v338
        %1224 = vmatprep.subr.mxu0 0.0
        %1225 = vmatpush1.msra.mxu0 %v339
        %1226 = vmatprep.subr.mxu0 0.0
        %1227 = vmatpush1.msra.mxu0 %v340
        %1228 = vmatprep.subr.mxu0 0.0
        %1229 = vmatpush1.msra.mxu0 %v341
        %1230 = vmatprep.subr.mxu0 0.0
        %1231 = vmatpush1.msra.mxu0 %v342
        %1232 = vmatprep.subr.mxu0 0.0
        %1233 = vmatpush1.msra.mxu0 %v343
        %1234 = vmatprep.subr.mxu0 0.0
        %v1235 = vand.u32 %v356, 4294901760
        %1236 = vmatpush1.msra.mxu0 %v1235
        %1237 = vmatprep.subr.mxu0 0.0
        %1238 = vmatpush1.msra.mxu0 0.0
        %1239 = vmatprep.subr.mxu0 0.0
        %1240 = vmatpush1.msra.mxu0 0.0
        %1241 = vmatprep.subr.mxu0 0.0
        %1242 = vmatpush1.msra.mxu0 0.0
        %1243 = vmatprep.subr.mxu0 0.0
        %1244 = vmatpush1.msra.mxu0 0.0
        %1245 = vmatprep.subr.mxu0 0.0
        %1246 = vmatpush1.msra.mxu0 0.0
        %1247 = vmatprep.subr.mxu0 0.0
        %1248 = vmatpush1.msra.mxu0 0.0
        %1249 = vmatprep.subr.mxu0 0.0
        %1250 = vmatpush1.msra.mxu0 0.0
        %1251 = vmatprep.subr.mxu0 0.0
        %1252 = vmatpush1.msra.mxu0 0.0
        %1253 = vmatprep.subr.mxu0 0.0
        %1254 = vmatpush1.msra.mxu0 0.0
        %1255 = vmatprep.subr.mxu0 0.0
        %1256 = vmatpush1.msra.mxu0 0.0
        %1257 = vmatprep.subr.mxu0 0.0
        %1258 = vmatpush1.msra.mxu0 0.0
        %1259 = vmatprep.subr.mxu0 0.0
        %1260 = vmatpush1.msra.mxu0 0.0
        %1261 = vmatprep.subr.mxu0 0.0
        %1262 = vmatpush1.msra.mxu0 0.0
        %1263 = vmatprep.subr.mxu0 0.0
        %1264 = vmatpush1.msra.mxu0 0.0
        %1265 = vmatprep.subr.mxu0 0.0
        %1266 = vmatpush1.msra.mxu0 0.0
        %1267 = vmatprep.subr.mxu0 0.0
        %1268 = vmatpush1.msra.mxu0 0.0
        %1269 = vmatprep.subr.mxu0 0.0
        %1270 = vmatpush1.msra.mxu0 0.0
        %1271 = vmatprep.subr.mxu0 0.0
        %1272 = vmatpush1.msra.mxu0 0.0
        %1273 = vmatprep.subr.mxu0 0.0
        %1274 = vmatpush1.msra.mxu0 0.0
        %1275 = vmatprep.mubr.f32.mxu0 0.0
        %v1276 = vand.u32 %v922, 4294901760
        %v1277 = vsub.f32 %v922, %v1276
        %v1278 = vand.u32 %v1277, 4294901760
        %1279 = vmatmul.mubr.f32.gmra.mrb[0].mxu0 %v1278
        %v1280 = vpop.f32.mrb[0].mxu0
        %v1281 = vadd.f32 %v1207, %v1280
        %v1282 = vpop.f32.mrb[0].mxu0
        %1283 = vdwg.mxu0
        %1284 = vmatprep.subr.mxu0 0.0
        %v1285 = vsub.f32 %v332, %v332
        %v1286 = vand.u32 %v1285, 4294901760
        %1287 = vmatpush1.msra.mxu0 %v1286
        %1288 = vmatprep.subr.mxu0 0.0
        %v1289 = vsub.f32 %v333, %v333
        %v1290 = vand.u32 %v1289, 4294901760
        %1291 = vmatpush1.msra.mxu0 %v1290
        %1292 = vmatprep.subr.mxu0 0.0
        %v1293 = vsub.f32 %v334, %v334
        %v1294 = vand.u32 %v1293, 4294901760
        %1295 = vmatpush1.msra.mxu0 %v1294
        %1296 = vmatprep.subr.mxu0 0.0
        %v1297 = vsub.f32 %v335, %v335
        %v1298 = vand.u32 %v1297, 4294901760
        %1299 = vmatpush1.msra.mxu0 %v1298
        %1300 = vmatprep.subr.mxu0 0.0
        %v1301 = vsub.f32 %v336, %v336
        %v1302 = vand.u32 %v1301, 4294901760
        %1303 = vmatpush1.msra.mxu0 %v1302
        %1304 = vmatprep.subr.mxu0 0.0
        %v1305 = vsub.f32 %v337, %v337
        %v1306 = vand.u32 %v1305, 4294901760
        %1307 = vmatpush1.msra.mxu0 %v1306
        %1308 = vmatprep.subr.mxu0 0.0
        %v1309 = vsub.f32 %v338, %v338
        %v1310 = vand.u32 %v1309, 4294901760
        %1311 = vmatpush1.msra.mxu0 %v1310
        %1312 = vmatprep.subr.mxu0 0.0
        %v1313 = vsub.f32 %v339, %v339
        %v1314 = vand.u32 %v1313, 4294901760
        %1315 = vmatpush1.msra.mxu0 %v1314
        %1316 = vmatprep.subr.mxu0 0.0
        %v1317 = vsub.f32 %v340, %v340
        %v1318 = vand.u32 %v1317, 4294901760
        %1319 = vmatpush1.msra.mxu0 %v1318
        %1320 = vmatprep.subr.mxu0 0.0
        %v1321 = vsub.f32 %v341, %v341
        %v1322 = vand.u32 %v1321, 4294901760
        %1323 = vmatpush1.msra.mxu0 %v1322
        %1324 = vmatprep.subr.mxu0 0.0
        %v1325 = vsub.f32 %v342, %v342
        %v1326 = vand.u32 %v1325, 4294901760
        %1327 = vmatpush1.msra.mxu0 %v1326
        %1328 = vmatprep.subr.mxu0 0.0
        %v1329 = vsub.f32 %v343, %v343
        %v1330 = vand.u32 %v1329, 4294901760
        %1331 = vmatpush1.msra.mxu0 %v1330
        %1332 = vmatprep.subr.mxu0 0.0
        %v1333 = vand.u32 %v356, 4294901760
        %v1334 = vsub.f32 %v356, %v1333
        %v1335 = vand.u32 %v1334, 4294901760
        %1336 = vmatpush1.msra.mxu0 %v1335
        %1337 = vmatprep.subr.mxu0 0.0
        %1338 = vmatpush1.msra.mxu0 0.0
        %1339 = vmatprep.subr.mxu0 0.0
        %1340 = vmatpush1.msra.mxu0 0.0
        %1341 = vmatprep.subr.mxu0 0.0
        %1342 = vmatpush1.msra.mxu0 0.0
        %1343 = vmatprep.subr.mxu0 0.0
        %1344 = vmatpush1.msra.mxu0 0.0
        %1345 = vmatprep.subr.mxu0 0.0
        %1346 = vmatpush1.msra.mxu0 0.0
        %1347 = vmatprep.subr.mxu0 0.0
        %1348 = vmatpush1.msra.mxu0 0.0
        %1349 = vmatprep.subr.mxu0 0.0
        %1350 = vmatpush1.msra.mxu0 0.0
        %1351 = vmatprep.subr.mxu0 0.0
        %1352 = vmatpush1.msra.mxu0 0.0
        %1353 = vmatprep.subr.mxu0 0.0
        %1354 = vmatpush1.msra.mxu0 0.0
        %1355 = vmatprep.subr.mxu0 0.0
        %1356 = vmatpush1.msra.mxu0 0.0
        %1357 = vmatprep.subr.mxu0 0.0
        %1358 = vmatpush1.msra.mxu0 0.0
        %1359 = vmatprep.subr.mxu0 0.0
        %1360 = vmatpush1.msra.mxu0 0.0
        %1361 = vmatprep.subr.mxu0 0.0
        %1362 = vmatpush1.msra.mxu0 0.0
        %1363 = vmatprep.subr.mxu0 0.0
        %1364 = vmatpush1.msra.mxu0 0.0
        %1365 = vmatprep.subr.mxu0 0.0
        %1366 = vmatpush1.msra.mxu0 0.0
        %1367 = vmatprep.subr.mxu0 0.0
        %1368 = vmatpush1.msra.mxu0 0.0
        %1369 = vmatprep.subr.mxu0 0.0
        %1370 = vmatpush1.msra.mxu0 0.0
        %1371 = vmatprep.subr.mxu0 0.0
        %1372 = vmatpush1.msra.mxu0 0.0
        %1373 = vmatprep.subr.mxu0 0.0
        %1374 = vmatpush1.msra.mxu0 0.0
        %1375 = vmatprep.mubr.f32.mxu0 0.0
        %v1376 = vand.u32 %v922, 4294901760
        %1377 = vmatmul.mubr.f32.gmra.mrb[0].mxu0 %v1376
        %v1378 = vpop.f32.mrb[0].mxu0
        %v1379 = vadd.f32 %v1281, %v1378
        %v1380 = vpop.f32.mrb[0].mxu0
        %1381 = vdwg.mxu0
        %1382 = vmatprep.subr.mxu0 0.0
        %1383 = vmatpush1.msra.mxu0 %v332
        %1384 = vmatprep.subr.mxu0 0.0
        %1385 = vmatpush1.msra.mxu0 %v333
        %1386 = vmatprep.subr.mxu0 0.0
        %1387 = vmatpush1.msra.mxu0 %v334
        %1388 = vmatprep.subr.mxu0 0.0
        %1389 = vmatpush1.msra.mxu0 %v335
        %1390 = vmatprep.subr.mxu0 0.0
        %1391 = vmatpush1.msra.mxu0 %v336
        %1392 = vmatprep.subr.mxu0 0.0
        %1393 = vmatpush1.msra.mxu0 %v337
        %1394 = vmatprep.subr.mxu0 0.0
        %1395 = vmatpush1.msra.mxu0 %v338
        %1396 = vmatprep.subr.mxu0 0.0
        %1397 = vmatpush1.msra.mxu0 %v339
        %1398 = vmatprep.subr.mxu0 0.0
        %1399 = vmatpush1.msra.mxu0 %v340
        %1400 = vmatprep.subr.mxu0 0.0
        %1401 = vmatpush1.msra.mxu0 %v341
        %1402 = vmatprep.subr.mxu0 0.0
        %1403 = vmatpush1.msra.mxu0 %v342
        %1404 = vmatprep.subr.mxu0 0.0
        %1405 = vmatpush1.msra.mxu0 %v343
        %1406 = vmatprep.subr.mxu0 0.0
        %v1407 = vand.u32 %v356, 4294901760
        %1408 = vmatpush1.msra.mxu0 %v1407
        %1409 = vmatprep.subr.mxu0 0.0
        %1410 = vmatpush1.msra.mxu0 0.0
        %1411 = vmatprep.subr.mxu0 0.0
        %1412 = vmatpush1.msra.mxu0 0.0
        %1413 = vmatprep.subr.mxu0 0.0
        %1414 = vmatpush1.msra.mxu0 0.0
        %1415 = vmatprep.subr.mxu0 0.0
        %1416 = vmatpush1.msra.mxu0 0.0
        %1417 = vmatprep.subr.mxu0 0.0
        %1418 = vmatpush1.msra.mxu0 0.0
        %1419 = vmatprep.subr.mxu0 0.0
        %1420 = vmatpush1.msra.mxu0 0.0
        %1421 = vmatprep.subr.mxu0 0.0
        %1422 = vmatpush1.msra.mxu0 0.0
        %1423 = vmatprep.subr.mxu0 0.0
        %1424 = vmatpush1.msra.mxu0 0.0
        %1425 = vmatprep.subr.mxu0 0.0
        %1426 = vmatpush1.msra.mxu0 0.0
        %1427 = vmatprep.subr.mxu0 0.0
        %1428 = vmatpush1.msra.mxu0 0.0
        %1429 = vmatprep.subr.mxu0 0.0
        %1430 = vmatpush1.msra.mxu0 0.0
        %1431 = vmatprep.subr.mxu0 0.0
        %1432 = vmatpush1.msra.mxu0 0.0
        %1433 = vmatprep.subr.mxu0 0.0
        %1434 = vmatpush1.msra.mxu0 0.0
        %1435 = vmatprep.subr.mxu0 0.0
        %1436 = vmatpush1.msra.mxu0 0.0
        %1437 = vmatprep.subr.mxu0 0.0
        %1438 = vmatpush1.msra.mxu0 0.0
        %1439 = vmatprep.subr.mxu0 0.0
        %1440 = vmatpush1.msra.mxu0 0.0
        %1441 = vmatprep.subr.mxu0 0.0
        %1442 = vmatpush1.msra.mxu0 0.0
        %1443 = vmatprep.subr.mxu0 0.0
        %1444 = vmatpush1.msra.mxu0 0.0
        %1445 = vmatprep.subr.mxu0 0.0
        %1446 = vmatpush1.msra.mxu0 0.0
        %1447 = vmatprep.mubr.f32.mxu0 0.0
        %v1448 = vand.u32 %v922, 4294901760
        %1449 = vmatmul.mubr.f32.gmra.mrb[0].mxu0 %v1448
        %v1450 = vpop.f32.mrb[0].mxu0
        %v1451 = vadd.f32 %v1379, %v1450
        %v1452 = vpop.f32.mrb[0].mxu0
        %1453 = vdwg.mxu0
        %v1454 = vmax.f32 %v1451, 0.0
        %v1456 = vrot.slane %v1451, 1
        %v1459 = vmul.f32 %v919, %v1451
        %v1460 = vmul.f32 %v920, %v1456
        %v1463 = vrot.slane %v1460, 7
        %v1464 = vsel %vm898, %v1463, %v1459
        %v1466 = vsub.f32 %v1454, %v1464
        %v1467 = vand.u32 2147483647, %v1451
        %v1468 = vsub.f32 0.0, %v1467
        %v1469 = vmul.f32 %v1468, 1.442695
        %v1470 = vpow.pop %v1469
        %v1471 = vadd.f32 %v1470, 1.0
        %v1472 = vlog2.pop %v1471
        %v1473 = vmul.f32 %v1472, 0.6931472
        %v1474 = vadd.f32 %v1466, %v1473
        %v1475 = vsel %vm910, %v1474, 0.0
        %1476 = vadd.xlane.f32.xlu0 %v1475
        %v1477 = vpop.xlane.xlu0 %1476
        %v1478 = vadd.f32 %v914, %v1477
        %s1479 = scalar_lea.vmem %s208, 4 [#allocation2]
        %v1480 = vld [vmem:[%s1479] sm:$0x3]
        %v1481 = vld [vmem:[%s217 + $0x2] sm:$0x1]
        %v1482 = vld [vmem:[%s217 + $0xa] sm:$0x1]
        %v1483 = vcvt.s32.f32 %v1481
        %v1484 = vcvt.s32.f32 %v1482
        %v1486 = vsel %vm350, %v1480, 0
        %1488 = vmatprep.subr.mxu0 0.0
        %1489 = vmatpush1.msra.mxu0 %v332
        %1490 = vmatprep.subr.mxu0 0.0
        %1491 = vmatpush1.msra.mxu0 %v333
        %1492 = vmatprep.subr.mxu0 0.0
        %1493 = vmatpush1.msra.mxu0 %v334
        %1494 = vmatprep.subr.mxu0 0.0
        %1495 = vmatpush1.msra.mxu0 %v335
        %1496 = vmatprep.subr.mxu0 0.0
        %1497 = vmatpush1.msra.mxu0 %v336
        %1498 = vmatprep.subr.mxu0 0.0
        %1499 = vmatpush1.msra.mxu0 %v337
        %1500 = vmatprep.subr.mxu0 0.0
        %1501 = vmatpush1.msra.mxu0 %v338
        %1502 = vmatprep.subr.mxu0 0.0
        %1503 = vmatpush1.msra.mxu0 %v339
        %1504 = vmatprep.subr.mxu0 0.0
        %1505 = vmatpush1.msra.mxu0 %v340
        %1506 = vmatprep.subr.mxu0 0.0
        %1507 = vmatpush1.msra.mxu0 %v341
        %1508 = vmatprep.subr.mxu0 0.0
        %1509 = vmatpush1.msra.mxu0 %v342
        %1510 = vmatprep.subr.mxu0 0.0
        %1511 = vmatpush1.msra.mxu0 %v343
        %1512 = vmatprep.subr.mxu0 0.0
        %v1513 = vand.u32 %v356, 4294901760
        %1514 = vmatpush1.msra.mxu0 %v1513
        %1515 = vmatprep.subr.mxu0 0.0
        %1516 = vmatpush1.msra.mxu0 0.0
        %1517 = vmatprep.subr.mxu0 0.0
        %1518 = vmatpush1.msra.mxu0 0.0
        %1519 = vmatprep.subr.mxu0 0.0
        %1520 = vmatpush1.msra.mxu0 0.0
        %1521 = vmatprep.subr.mxu0 0.0
        %1522 = vmatpush1.msra.mxu0 0.0
        %1523 = vmatprep.subr.mxu0 0.0
        %1524 = vmatpush1.msra.mxu0 0.0
        %1525 = vmatprep.subr.mxu0 0.0
        %1526 = vmatpush1.msra.mxu0 0.0
        %1527 = vmatprep.subr.mxu0 0.0
        %1528 = vmatpush1.msra.mxu0 0.0
        %1529 = vmatprep.subr.mxu0 0.0
        %1530 = vmatpush1.msra.mxu0 0.0
        %1531 = vmatprep.subr.mxu0 0.0
        %1532 = vmatpush1.msra.mxu0 0.0
        %1533 = vmatprep.subr.mxu0 0.0
        %1534 = vmatpush1.msra.mxu0 0.0
        %1535 = vmatprep.subr.mxu0 0.0
        %1536 = vmatpush1.msra.mxu0 0.0
        %1537 = vmatprep.subr.mxu0 0.0
        %1538 = vmatpush1.msra.mxu0 0.0
        %1539 = vmatprep.subr.mxu0 0.0
        %1540 = vmatpush1.msra.mxu0 0.0
        %1541 = vmatprep.subr.mxu0 0.0
        %1542 = vmatpush1.msra.mxu0 0.0
        %1543 = vmatprep.subr.mxu0 0.0
        %1544 = vmatpush1.msra.mxu0 0.0
        %1545 = vmatprep.subr.mxu0 0.0
        %1546 = vmatpush1.msra.mxu0 0.0
        %1547 = vmatprep.subr.mxu0 0.0
        %1548 = vmatpush1.msra.mxu0 0.0
        %1549 = vmatprep.subr.mxu0 0.0
        %1550 = vmatpush1.msra.mxu0 0.0
        %1551 = vmatprep.subr.mxu0 0.0
        %1552 = vmatpush1.msra.mxu0 0.0
        %1553 = vmatprep.mubr.f32.mxu0 0.0
        %v1554 = vand.u32 %v1486, 4294901760
        %v1555 = vsub.f32 %v1486, %v1554
        %v1556 = vand.u32 %v1555, 4294901760
        %v1557 = vsub.f32 %v1555, %v1556
        %v1558 = vand.u32 %v1557, 4294901760
        %1559 = vmatmul.mubr.f32.gmra.mrb[0].mxu0 %v1558
        %v1560 = vpop.f32.mrb[0].mxu0
        %v1561 = vadd.f32 0.0, %v1560
        %v1562 = vpop.f32.mrb[0].mxu0
        %1563 = vdwg.mxu0
        %1564 = vmatprep.subr.mxu0 0.0
        %v1565 = vsub.f32 %v332, %v332
        %v1566 = vand.u32 %v1565, 4294901760
        %v1567 = vsub.f32 %v1565, %v1566
        %v1568 = vand.u32 %v1567, 4294901760
        %1569 = vmatpush1.msra.mxu0 %v1568
        %1570 = vmatprep.subr.mxu0 0.0
        %v1571 = vsub.f32 %v333, %v333
        %v1572 = vand.u32 %v1571, 4294901760
        %v1573 = vsub.f32 %v1571, %v1572
        %v1574 = vand.u32 %v1573, 4294901760
        %1575 = vmatpush1.msra.mxu0 %v1574
        %1576 = vmatprep.subr.mxu0 0.0
        %v1577 = vsub.f32 %v334, %v334
        %v1578 = vand.u32 %v1577, 4294901760
        %v1579 = vsub.f32 %v1577, %v1578
        %v1580 = vand.u32 %v1579, 4294901760
        %1581 = vmatpush1.msra.mxu0 %v1580
        %1582 = vmatprep.subr.mxu0 0.0
        %v1583 = vsub.f32 %v335, %v335
        %v1584 = vand.u32 %v1583, 4294901760
        %v1585 = vsub.f32 %v1583, %v1584
        %v1586 = vand.u32 %v1585, 4294901760
        %1587 = vmatpush1.msra.mxu0 %v1586
        %1588 = vmatprep.subr.mxu0 0.0
        %v1589 = vsub.f32 %v336, %v336
        %v1590 = vand.u32 %v1589, 4294901760
        %v1591 = vsub.f32 %v1589, %v1590
        %v1592 = vand.u32 %v1591, 4294901760
        %1593 = vmatpush1.msra.mxu0 %v1592
        %1594 = vmatprep.subr.mxu0 0.0
        %v1595 = vsub.f32 %v337, %v337
        %v1596 = vand.u32 %v1595, 4294901760
        %v1597 = vsub.f32 %v1595, %v1596
        %v1598 = vand.u32 %v1597, 4294901760
        %1599 = vmatpush1.msra.mxu0 %v1598
        %1600 = vmatprep.subr.mxu0 0.0
        %v1601 = vsub.f32 %v338, %v338
        %v1602 = vand.u32 %v1601, 4294901760
        %v1603 = vsub.f32 %v1601, %v1602
        %v1604 = vand.u32 %v1603, 4294901760
        %1605 = vmatpush1.msra.mxu0 %v1604
        %1606 = vmatprep.subr.mxu0 0.0
        %v1607 = vsub.f32 %v339, %v339
        %v1608 = vand.u32 %v1607, 4294901760
        %v1609 = vsub.f32 %v1607, %v1608
        %v1610 = vand.u32 %v1609, 4294901760
        %1611 = vmatpush1.msra.mxu0 %v1610
        %1612 = vmatprep.subr.mxu0 0.0
        %v1613 = vsub.f32 %v340, %v340
        %v1614 = vand.u32 %v1613, 4294901760
        %v1615 = vsub.f32 %v1613, %v1614
        %v1616 = vand.u32 %v1615, 4294901760
        %1617 = vmatpush1.msra.mxu0 %v1616
        %1618 = vmatprep.subr.mxu0 0.0
        %v1619 = vsub.f32 %v341, %v341
        %v1620 = vand.u32 %v1619, 4294901760
        %v1621 = vsub.f32 %v1619, %v1620
        %v1622 = vand.u32 %v1621, 4294901760
        %1623 = vmatpush1.msra.mxu0 %v1622
        %1624 = vmatprep.subr.mxu0 0.0
        %v1625 = vsub.f32 %v342, %v342
        %v1626 = vand.u32 %v1625, 4294901760
        %v1627 = vsub.f32 %v1625, %v1626
        %v1628 = vand.u32 %v1627, 4294901760
        %1629 = vmatpush1.msra.mxu0 %v1628
        %1630 = vmatprep.subr.mxu0 0.0
        %v1631 = vsub.f32 %v343, %v343
        %v1632 = vand.u32 %v1631, 4294901760
        %v1633 = vsub.f32 %v1631, %v1632
        %v1634 = vand.u32 %v1633, 4294901760
        %1635 = vmatpush1.msra.mxu0 %v1634
        %1636 = vmatprep.subr.mxu0 0.0
        %v1637 = vand.u32 %v356, 4294901760
        %v1638 = vsub.f32 %v356, %v1637
        %v1639 = vand.u32 %v1638, 4294901760
        %v1640 = vsub.f32 %v1638, %v1639
        %v1641 = vand.u32 %v1640, 4294901760
        %1642 = vmatpush1.msra.mxu0 %v1641
        %1643 = vmatprep.subr.mxu0 0.0
        %1644 = vmatpush1.msra.mxu0 0.0
        %1645 = vmatprep.subr.mxu0 0.0
        %1646 = vmatpush1.msra.mxu0 0.0
        %1647 = vmatprep.subr.mxu0 0.0
        %1648 = vmatpush1.msra.mxu0 0.0
        %1649 = vmatprep.subr.mxu0 0.0
        %1650 = vmatpush1.msra.mxu0 0.0
        %1651 = vmatprep.subr.mxu0 0.0
        %1652 = vmatpush1.msra.mxu0 0.0
        %1653 = vmatprep.subr.mxu0 0.0
        %1654 = vmatpush1.msra.mxu0 0.0
        %1655 = vmatprep.subr.mxu0 0.0
        %1656 = vmatpush1.msra.mxu0 0.0
        %1657 = vmatprep.subr.mxu0 0.0
        %1658 = vmatpush1.msra.mxu0 0.0
        %1659 = vmatprep.subr.mxu0 0.0
        %1660 = vmatpush1.msra.mxu0 0.0
        %1661 = vmatprep.subr.mxu0 0.0
        %1662 = vmatpush1.msra.mxu0 0.0
        %1663 = vmatprep.subr.mxu0 0.0
        %1664 = vmatpush1.msra.mxu0 0.0
        %1665 = vmatprep.subr.mxu0 0.0
        %1666 = vmatpush1.msra.mxu0 0.0
        %1667 = vmatprep.subr.mxu0 0.0
        %1668 = vmatpush1.msra.mxu0 0.0
        %1669 = vmatprep.subr.mxu0 0.0
        %1670 = vmatpush1.msra.mxu0 0.0
        %1671 = vmatprep.subr.mxu0 0.0
        %1672 = vmatpush1.msra.mxu0 0.0
        %1673 = vmatprep.subr.mxu0 0.0
        %1674 = vmatpush1.msra.mxu0 0.0
        %1675 = vmatprep.subr.mxu0 0.0
        %1676 = vmatpush1.msra.mxu0 0.0
        %1677 = vmatprep.subr.mxu0 0.0
        %1678 = vmatpush1.msra.mxu0 0.0
        %1679 = vmatprep.subr.mxu0 0.0
        %1680 = vmatpush1.msra.mxu0 0.0
        %1681 = vmatprep.mubr.f32.mxu0 0.0
        %v1682 = vand.u32 %v1486, 4294901760
        %1683 = vmatmul.mubr.f32.gmra.mrb[0].mxu0 %v1682
        %v1684 = vpop.f32.mrb[0].mxu0
        %v1685 = vadd.f32 %v1561, %v1684
        %v1686 = vpop.f32.mrb[0].mxu0
        %1687 = vdwg.mxu0
        %1688 = vmatprep.subr.mxu0 0.0
        %v1689 = vsub.f32 %v332, %v332
        %1690 = vmatpush1.msra.mxu0 %v1689
        %1691 = vmatprep.subr.mxu0 0.0
        %v1692 = vsub.f32 %v333, %v333
        %1693 = vmatpush1.msra.mxu0 %v1692
        %1694 = vmatprep.subr.mxu0 0.0
        %v1695 = vsub.f32 %v334, %v334
        %1696 = vmatpush1.msra.mxu0 %v1695
        %1697 = vmatprep.subr.mxu0 0.0
        %v1698 = vsub.f32 %v335, %v335
        %1699 = vmatpush1.msra.mxu0 %v1698
        %1700 = vmatprep.subr.mxu0 0.0
        %v1701 = vsub.f32 %v336, %v336
        %1702 = vmatpush1.msra.mxu0 %v1701
        %1703 = vmatprep.subr.mxu0 0.0
        %v1704 = vsub.f32 %v337, %v337
        %1705 = vmatpush1.msra.mxu0 %v1704
        %1706 = vmatprep.subr.mxu0 0.0
        %v1707 = vsub.f32 %v338, %v338
        %1708 = vmatpush1.msra.mxu0 %v1707
        %1709 = vmatprep.subr.mxu0 0.0
        %v1710 = vsub.f32 %v339, %v339
        %1711 = vmatpush1.msra.mxu0 %v1710
        %1712 = vmatprep.subr.mxu0 0.0
        %v1713 = vsub.f32 %v340, %v340
        %1714 = vmatpush1.msra.mxu0 %v1713
        %1715 = vmatprep.subr.mxu0 0.0
        %v1716 = vsub.f32 %v341, %v341
        %1717 = vmatpush1.msra.mxu0 %v1716
        %1718 = vmatprep.subr.mxu0 0.0
        %v1719 = vsub.f32 %v342, %v342
        %1720 = vmatpush1.msra.mxu0 %v1719
        %1721 = vmatprep.subr.mxu0 0.0
        %v1722 = vsub.f32 %v343, %v343
        %1723 = vmatpush1.msra.mxu0 %v1722
        %1724 = vmatprep.subr.mxu0 0.0
        %v1725 = vand.u32 %v356, 4294901760
        %v1726 = vsub.f32 %v356, %v1725
        %1727 = vmatpush1.msra.mxu0 %v1726
        %1728 = vmatprep.subr.mxu0 0.0
        %1729 = vmatpush1.msra.mxu0 0.0
        %1730 = vmatprep.subr.mxu0 0.0
        %1731 = vmatpush1.msra.mxu0 0.0
        %1732 = vmatprep.subr.mxu0 0.0
        %1733 = vmatpush1.msra.mxu0 0.0
        %1734 = vmatprep.subr.mxu0 0.0
        %1735 = vmatpush1.msra.mxu0 0.0
        %1736 = vmatprep.subr.mxu0 0.0
        %1737 = vmatpush1.msra.mxu0 0.0
        %1738 = vmatprep.subr.mxu0 0.0
        %1739 = vmatpush1.msra.mxu0 0.0
        %1740 = vmatprep.subr.mxu0 0.0
        %1741 = vmatpush1.msra.mxu0 0.0
        %1742 = vmatprep.subr.mxu0 0.0
        %1743 = vmatpush1.msra.mxu0 0.0
        %1744 = vmatprep.subr.mxu0 0.0
        %1745 = vmatpush1.msra.mxu0 0.0
        %1746 = vmatprep.subr.mxu0 0.0
        %1747 = vmatpush1.msra.mxu0 0.0
        %1748 = vmatprep.subr.mxu0 0.0
        %1749 = vmatpush1.msra.mxu0 0.0
        %1750 = vmatprep.subr.mxu0 0.0
        %1751 = vmatpush1.msra.mxu0 0.0
        %1752 = vmatprep.subr.mxu0 0.0
        %1753 = vmatpush1.msra.mxu0 0.0
        %1754 = vmatprep.subr.mxu0 0.0
        %1755 = vmatpush1.msra.mxu0 0.0
        %1756 = vmatprep.subr.mxu0 0.0
        %1757 = vmatpush1.msra.mxu0 0.0
        %1758 = vmatprep.subr.mxu0 0.0
        %1759 = vmatpush1.msra.mxu0 0.0
        %1760 = vmatprep.subr.mxu0 0.0
        %1761 = vmatpush1.msra.mxu0 0.0
        %1762 = vmatprep.subr.mxu0 0.0
        %1763 = vmatpush1.msra.mxu0 0.0
        %1764 = vmatprep.subr.mxu0 0.0
        %1765 = vmatpush1.msra.mxu0 0.0
        %1766 = vmatprep.mubr.f32.mxu0 0.0
        %v1767 = vand.u32 %v1486, 4294901760
        %v1768 = vsub.f32 %v1486, %v1767
        %1769 = vmatmul.mubr.f32.gmra.mrb[0].mxu0 %v1768
        %v1770 = vpop.f32.mrb[0].mxu0
        %v1771 = vadd.f32 %v1685, %v1770
        %v1772 = vpop.f32.mrb[0].mxu0
        %1773 = vdwg.mxu0
        %1774 = vmatprep.subr.mxu0 0.0
        %1775 = vmatpush1.msra.mxu0 %v332
        %1776 = vmatprep.subr.mxu0 0.0
        %1777 = vmatpush1.msra.mxu0 %v333
        %1778 = vmatprep.subr.mxu0 0.0
        %1779 = vmatpush1.msra.mxu0 %v334
        %1780 = vmatprep.subr.mxu0 0.0
        %1781 = vmatpush1.msra.mxu0 %v335
        %1782 = vmatprep.subr.mxu0 0.0
        %1783 = vmatpush1.msra.mxu0 %v336
        %1784 = vmatprep.subr.mxu0 0.0
        %1785 = vmatpush1.msra.mxu0 %v337
        %1786 = vmatprep.subr.mxu0 0.0
        %1787 = vmatpush1.msra.mxu0 %v338
        %1788 = vmatprep.subr.mxu0 0.0
        %1789 = vmatpush1.msra.mxu0 %v339
        %1790 = vmatprep.subr.mxu0 0.0
        %1791 = vmatpush1.msra.mxu0 %v340
        %1792 = vmatprep.subr.mxu0 0.0
        %1793 = vmatpush1.msra.mxu0 %v341
        %1794 = vmatprep.subr.mxu0 0.0
        %1795 = vmatpush1.msra.mxu0 %v342
        %1796 = vmatprep.subr.mxu0 0.0
        %1797 = vmatpush1.msra.mxu0 %v343
        %1798 = vmatprep.subr.mxu0 0.0
        %v1799 = vand.u32 %v356, 4294901760
        %1800 = vmatpush1.msra.mxu0 %v1799
        %1801 = vmatprep.subr.mxu0 0.0
        %1802 = vmatpush1.msra.mxu0 0.0
        %1803 = vmatprep.subr.mxu0 0.0
        %1804 = vmatpush1.msra.mxu0 0.0
        %1805 = vmatprep.subr.mxu0 0.0
        %1806 = vmatpush1.msra.mxu0 0.0
        %1807 = vmatprep.subr.mxu0 0.0
        %1808 = vmatpush1.msra.mxu0 0.0
        %1809 = vmatprep.subr.mxu0 0.0
        %1810 = vmatpush1.msra.mxu0 0.0
        %1811 = vmatprep.subr.mxu0 0.0
        %1812 = vmatpush1.msra.mxu0 0.0
        %1813 = vmatprep.subr.mxu0 0.0
        %1814 = vmatpush1.msra.mxu0 0.0
        %1815 = vmatprep.subr.mxu0 0.0
        %1816 = vmatpush1.msra.mxu0 0.0
        %1817 = vmatprep.subr.mxu0 0.0
        %1818 = vmatpush1.msra.mxu0 0.0
        %1819 = vmatprep.subr.mxu0 0.0
        %1820 = vmatpush1.msra.mxu0 0.0
        %1821 = vmatprep.subr.mxu0 0.0
        %1822 = vmatpush1.msra.mxu0 0.0
        %1823 = vmatprep.subr.mxu0 0.0
        %1824 = vmatpush1.msra.mxu0 0.0
        %1825 = vmatprep.subr.mxu0 0.0
        %1826 = vmatpush1.msra.mxu0 0.0
        %1827 = vmatprep.subr.mxu0 0.0
        %1828 = vmatpush1.msra.mxu0 0.0
        %1829 = vmatprep.subr.mxu0 0.0
        %1830 = vmatpush1.msra.mxu0 0.0
        %1831 = vmatprep.subr.mxu0 0.0
        %1832 = vmatpush1.msra.mxu0 0.0
        %1833 = vmatprep.subr.mxu0 0.0
        %1834 = vmatpush1.msra.mxu0 0.0
        %1835 = vmatprep.subr.mxu0 0.0
        %1836 = vmatpush1.msra.mxu0 0.0
        %1837 = vmatprep.subr.mxu0 0.0
        %1838 = vmatpush1.msra.mxu0 0.0
        %1839 = vmatprep.mubr.f32.mxu0 0.0
        %v1840 = vand.u32 %v1486, 4294901760
        %v1841 = vsub.f32 %v1486, %v1840
        %v1842 = vand.u32 %v1841, 4294901760
        %1843 = vmatmul.mubr.f32.gmra.mrb[0].mxu0 %v1842
        %v1844 = vpop.f32.mrb[0].mxu0
        %v1845 = vadd.f32 %v1771, %v1844
        %v1846 = vpop.f32.mrb[0].mxu0
        %1847 = vdwg.mxu0
        %1848 = vmatprep.subr.mxu0 0.0
        %v1849 = vsub.f32 %v332, %v332
        %v1850 = vand.u32 %v1849, 4294901760
        %1851 = vmatpush1.msra.mxu0 %v1850
        %1852 = vmatprep.subr.mxu0 0.0
        %v1853 = vsub.f32 %v333, %v333
        %v1854 = vand.u32 %v1853, 4294901760
        %1855 = vmatpush1.msra.mxu0 %v1854
        %1856 = vmatprep.subr.mxu0 0.0
        %v1857 = vsub.f32 %v334, %v334
        %v1858 = vand.u32 %v1857, 4294901760
        %1859 = vmatpush1.msra.mxu0 %v1858
        %1860 = vmatprep.subr.mxu0 0.0
        %v1861 = vsub.f32 %v335, %v335
        %v1862 = vand.u32 %v1861, 4294901760
        %1863 = vmatpush1.msra.mxu0 %v1862
        %1864 = vmatprep.subr.mxu0 0.0
        %v1865 = vsub.f32 %v336, %v336
        %v1866 = vand.u32 %v1865, 4294901760
        %1867 = vmatpush1.msra.mxu0 %v1866
        %1868 = vmatprep.subr.mxu0 0.0
        %v1869 = vsub.f32 %v337, %v337
        %v1870 = vand.u32 %v1869, 4294901760
        %1871 = vmatpush1.msra.mxu0 %v1870
        %1872 = vmatprep.subr.mxu0 0.0
        %v1873 = vsub.f32 %v338, %v338
        %v1874 = vand.u32 %v1873, 4294901760
        %1875 = vmatpush1.msra.mxu0 %v1874
        %1876 = vmatprep.subr.mxu0 0.0
        %v1877 = vsub.f32 %v339, %v339
        %v1878 = vand.u32 %v1877, 4294901760
        %1879 = vmatpush1.msra.mxu0 %v1878
        %1880 = vmatprep.subr.mxu0 0.0
        %v1881 = vsub.f32 %v340, %v340
        %v1882 = vand.u32 %v1881, 4294901760
        %1883 = vmatpush1.msra.mxu0 %v1882
        %1884 = vmatprep.subr.mxu0 0.0
        %v1885 = vsub.f32 %v341, %v341
        %v1886 = vand.u32 %v1885, 4294901760
        %1887 = vmatpush1.msra.mxu0 %v1886
        %1888 = vmatprep.subr.mxu0 0.0
        %v1889 = vsub.f32 %v342, %v342
        %v1890 = vand.u32 %v1889, 4294901760
        %1891 = vmatpush1.msra.mxu0 %v1890
        %1892 = vmatprep.subr.mxu0 0.0
        %v1893 = vsub.f32 %v343, %v343
        %v1894 = vand.u32 %v1893, 4294901760
        %1895 = vmatpush1.msra.mxu0 %v1894
        %1896 = vmatprep.subr.mxu0 0.0
        %v1897 = vand.u32 %v356, 4294901760
        %v1898 = vsub.f32 %v356, %v1897
        %v1899 = vand.u32 %v1898, 4294901760
        %1900 = vmatpush1.msra.mxu0 %v1899
        %1901 = vmatprep.subr.mxu0 0.0
        %1902 = vmatpush1.msra.mxu0 0.0
        %1903 = vmatprep.subr.mxu0 0.0
        %1904 = vmatpush1.msra.mxu0 0.0
        %1905 = vmatprep.subr.mxu0 0.0
        %1906 = vmatpush1.msra.mxu0 0.0
        %1907 = vmatprep.subr.mxu0 0.0
        %1908 = vmatpush1.msra.mxu0 0.0
        %1909 = vmatprep.subr.mxu0 0.0
        %1910 = vmatpush1.msra.mxu0 0.0
        %1911 = vmatprep.subr.mxu0 0.0
        %1912 = vmatpush1.msra.mxu0 0.0
        %1913 = vmatprep.subr.mxu0 0.0
        %1914 = vmatpush1.msra.mxu0 0.0
        %1915 = vmatprep.subr.mxu0 0.0
        %1916 = vmatpush1.msra.mxu0 0.0
        %1917 = vmatprep.subr.mxu0 0.0
        %1918 = vmatpush1.msra.mxu0 0.0
        %1919 = vmatprep.subr.mxu0 0.0
        %1920 = vmatpush1.msra.mxu0 0.0
        %1921 = vmatprep.subr.mxu0 0.0
        %1922 = vmatpush1.msra.mxu0 0.0
        %1923 = vmatprep.subr.mxu0 0.0
        %1924 = vmatpush1.msra.mxu0 0.0
        %1925 = vmatprep.subr.mxu0 0.0
        %1926 = vmatpush1.msra.mxu0 0.0
        %1927 = vmatprep.subr.mxu0 0.0
        %1928 = vmatpush1.msra.mxu0 0.0
        %1929 = vmatprep.subr.mxu0 0.0
        %1930 = vmatpush1.msra.mxu0 0.0
        %1931 = vmatprep.subr.mxu0 0.0
        %1932 = vmatpush1.msra.mxu0 0.0
        %1933 = vmatprep.subr.mxu0 0.0
        %1934 = vmatpush1.msra.mxu0 0.0
        %1935 = vmatprep.subr.mxu0 0.0
        %1936 = vmatpush1.msra.mxu0 0.0
        %1937 = vmatprep.subr.mxu0 0.0
        %1938 = vmatpush1.msra.mxu0 0.0
        %1939 = vmatprep.mubr.f32.mxu0 0.0
        %v1940 = vand.u32 %v1486, 4294901760
        %1941 = vmatmul.mubr.f32.gmra.mrb[0].mxu0 %v1940
        %v1942 = vpop.f32.mrb[0].mxu0
        %v1943 = vadd.f32 %v1845, %v1942
        %v1944 = vpop.f32.mrb[0].mxu0
        %1945 = vdwg.mxu0
        %1946 = vmatprep.subr.mxu0 0.0
        %1947 = vmatpush1.msra.mxu0 %v332
        %1948 = vmatprep.subr.mxu0 0.0
        %1949 = vmatpush1.msra.mxu0 %v333
        %1950 = vmatprep.subr.mxu0 0.0
        %1951 = vmatpush1.msra.mxu0 %v334
        %1952 = vmatprep.subr.mxu0 0.0
        %1953 = vmatpush1.msra.mxu0 %v335
        %1954 = vmatprep.subr.mxu0 0.0
        %1955 = vmatpush1.msra.mxu0 %v336
        %1956 = vmatprep.subr.mxu0 0.0
        %1957 = vmatpush1.msra.mxu0 %v337
        %1958 = vmatprep.subr.mxu0 0.0
        %1959 = vmatpush1.msra.mxu0 %v338
        %1960 = vmatprep.subr.mxu0 0.0
        %1961 = vmatpush1.msra.mxu0 %v339
        %1962 = vmatprep.subr.mxu0 0.0
        %1963 = vmatpush1.msra.mxu0 %v340
        %1964 = vmatprep.subr.mxu0 0.0
        %1965 = vmatpush1.msra.mxu0 %v341
        %1966 = vmatprep.subr.mxu0 0.0
        %1967 = vmatpush1.msra.mxu0 %v342
        %1968 = vmatprep.subr.mxu0 0.0
        %1969 = vmatpush1.msra.mxu0 %v343
        %1970 = vmatprep.subr.mxu0 0.0
        %v1971 = vand.u32 %v356, 4294901760
        %1972 = vmatpush1.msra.mxu0 %v1971
        %1973 = vmatprep.subr.mxu0 0.0
        %1974 = vmatpush1.msra.mxu0 0.0
        %1975 = vmatprep.subr.mxu0 0.0
        %1976 = vmatpush1.msra.mxu0 0.0
        %1977 = vmatprep.subr.mxu0 0.0
        %1978 = vmatpush1.msra.mxu0 0.0
        %1979 = vmatprep.subr.mxu0 0.0
        %1980 = vmatpush1.msra.mxu0 0.0
        %1981 = vmatprep.subr.mxu0 0.0
        %1982 = vmatpush1.msra.mxu0 0.0
        %1983 = vmatprep.subr.mxu0 0.0
        %1984 = vmatpush1.msra.mxu0 0.0
        %1985 = vmatprep.subr.mxu0 0.0
        %1986 = vmatpush1.msra.mxu0 0.0
        %1987 = vmatprep.subr.mxu0 0.0
        %1988 = vmatpush1.msra.mxu0 0.0
        %1989 = vmatprep.subr.mxu0 0.0
        %1990 = vmatpush1.msra.mxu0 0.0
        %1991 = vmatprep.subr.mxu0 0.0
        %1992 = vmatpush1.msra.mxu0 0.0
        %1993 = vmatprep.subr.mxu0 0.0
        %1994 = vmatpush1.msra.mxu0 0.0
        %1995 = vmatprep.subr.mxu0 0.0
        %1996 = vmatpush1.msra.mxu0 0.0
        %1997 = vmatprep.subr.mxu0 0.0
        %1998 = vmatpush1.msra.mxu0 0.0
        %1999 = vmatprep.subr.mxu0 0.0
        %2000 = vmatpush1.msra.mxu0 0.0
        %2001 = vmatprep.subr.mxu0 0.0
        %2002 = vmatpush1.msra.mxu0 0.0
        %2003 = vmatprep.subr.mxu0 0.0
        %2004 = vmatpush1.msra.mxu0 0.0
        %2005 = vmatprep.subr.mxu0 0.0
        %2006 = vmatpush1.msra.mxu0 0.0
        %2007 = vmatprep.subr.mxu0 0.0
        %2008 = vmatpush1.msra.mxu0 0.0
        %2009 = vmatprep.subr.mxu0 0.0
        %2010 = vmatpush1.msra.mxu0 0.0
        %2011 = vmatprep.mubr.f32.mxu0 0.0
        %v2012 = vand.u32 %v1486, 4294901760
        %2013 = vmatmul.mubr.f32.gmra.mrb[0].mxu0 %v2012
        %v2014 = vpop.f32.mrb[0].mxu0
        %v2015 = vadd.f32 %v1943, %v2014
        %v2016 = vpop.f32.mrb[0].mxu0
        %2017 = vdwg.mxu0
        %v2018 = vmax.f32 %v2015, 0.0
        %v2020 = vrot.slane %v2015, 1
        %v2023 = vmul.f32 %v1483, %v2015
        %v2024 = vmul.f32 %v1484, %v2020
        %v2027 = vrot.slane %v2024, 7
        %v2028 = vsel %vm898, %v2027, %v2023
        %v2030 = vsub.f32 %v2018, %v2028
        %v2031 = vand.u32 2147483647, %v2015
        %v2032 = vsub.f32 0.0, %v2031
        %v2033 = vmul.f32 %v2032, 1.442695
        %v2034 = vpow.pop %v2033
        %v2035 = vadd.f32 %v2034, 1.0
        %v2036 = vlog2.pop %v2035
        %v2037 = vmul.f32 %v2036, 0.6931472
        %v2038 = vadd.f32 %v2030, %v2037
        %v2039 = vsel %vm910, %v2038, 0.0
        %2040 = vadd.xlane.f32.xlu0 %v2039
        %v2041 = vpop.xlane.xlu0 %2040
        %v2042 = vadd.f32 %v1478, %v2041
        %s2043 = scalar_lea.vmem %s208, 6 [#allocation2]
        %v2044 = vld [vmem:[%s2043] sm:$0x3]
        %v2045 = vld [vmem:[%s217 + $0x3] sm:$0x1]
        %v2046 = vld [vmem:[%s217 + $0xb] sm:$0x1]
        %v2047 = vcvt.s32.f32 %v2045
        %v2048 = vcvt.s32.f32 %v2046
        %v2050 = vsel %vm350, %v2044, 0
        %2052 = vmatprep.subr.mxu0 0.0
        %2053 = vmatpush1.msra.mxu0 %v332
        %2054 = vmatprep.subr.mxu0 0.0
        %2055 = vmatpush1.msra.mxu0 %v333
        %2056 = vmatprep.subr.mxu0 0.0
        %2057 = vmatpush1.msra.mxu0 %v334
        %2058 = vmatprep.subr.mxu0 0.0
        %2059 = vmatpush1.msra.mxu0 %v335
        %2060 = vmatprep.subr.mxu0 0.0
        %2061 = vmatpush1.msra.mxu0 %v336
        %2062 = vmatprep.subr.mxu0 0.0
        %2063 = vmatpush1.msra.mxu0 %v337
        %2064 = vmatprep.subr.mxu0 0.0
        %2065 = vmatpush1.msra.mxu0 %v338
        %2066 = vmatprep.subr.mxu0 0.0
        %2067 = vmatpush1.msra.mxu0 %v339
        %2068 = vmatprep.subr.mxu0 0.0
        %2069 = vmatpush1.msra.mxu0 %v340
        %2070 = vmatprep.subr.mxu0 0.0
        %2071 = vmatpush1.msra.mxu0 %v341
        %2072 = vmatprep.subr.mxu0 0.0
        %2073 = vmatpush1.msra.mxu0 %v342
        %2074 = vmatprep.subr.mxu0 0.0
        %2075 = vmatpush1.msra.mxu0 %v343
        %2076 = vmatprep.subr.mxu0 0.0
        %v2077 = vand.u32 %v356, 4294901760
        %2078 = vmatpush1.msra.mxu0 %v2077
        %2079 = vmatprep.subr.mxu0 0.0
        %2080 = vmatpush1.msra.mxu0 0.0
        %2081 = vmatprep.subr.mxu0 0.0
        %2082 = vmatpush1.msra.mxu0 0.0
        %2083 = vmatprep.subr.mxu0 0.0
        %2084 = vmatpush1.msra.mxu0 0.0
        %2085 = vmatprep.subr.mxu0 0.0
        %2086 = vmatpush1.msra.mxu0 0.0
        %2087 = vmatprep.subr.mxu0 0.0
        %2088 = vmatpush1.msra.mxu0 0.0
        %2089 = vmatprep.subr.mxu0 0.0
        %2090 = vmatpush1.msra.mxu0 0.0
        %2091 = vmatprep.subr.mxu0 0.0
        %2092 = vmatpush1.msra.mxu0 0.0
        %2093 = vmatprep.subr.mxu0 0.0
        %2094 = vmatpush1.msra.mxu0 0.0
        %2095 = vmatprep.subr.mxu0 0.0
        %2096 = vmatpush1.msra.mxu0 0.0
        %2097 = vmatprep.subr.mxu0 0.0
        %2098 = vmatpush1.msra.mxu0 0.0
        %2099 = vmatprep.subr.mxu0 0.0
        %2100 = vmatpush1.msra.mxu0 0.0
        %2101 = vmatprep.subr.mxu0 0.0
        %2102 = vmatpush1.msra.mxu0 0.0
        %2103 = vmatprep.subr.mxu0 0.0
        %2104 = vmatpush1.msra.mxu0 0.0
        %2105 = vmatprep.subr.mxu0 0.0
        %2106 = vmatpush1.msra.mxu0 0.0
        %2107 = vmatprep.subr.mxu0 0.0
        %2108 = vmatpush1.msra.mxu0 0.0
        %2109 = vmatprep.subr.mxu0 0.0
        %2110 = vmatpush1.msra.mxu0 0.0
        %2111 = vmatprep.subr.mxu0 0.0
        %2112 = vmatpush1.msra.mxu0 0.0
        %2113 = vmatprep.subr.mxu0 0.0
        %2114 = vmatpush1.msra.mxu0 0.0
        %2115 = vmatprep.subr.mxu0 0.0
        %2116 = vmatpush1.msra.mxu0 0.0
        %2117 = vmatprep.mubr.f32.mxu0 0.0
        %v2118 = vand.u32 %v2050, 4294901760
        %v2119 = vsub.f32 %v2050, %v2118
        %v2120 = vand.u32 %v2119, 4294901760
        %v2121 = vsub.f32 %v2119, %v2120
        %v2122 = vand.u32 %v2121, 4294901760
        %2123 = vmatmul.mubr.f32.gmra.mrb[0].mxu0 %v2122
        %v2124 = vpop.f32.mrb[0].mxu0
        %v2125 = vadd.f32 0.0, %v2124
        %v2126 = vpop.f32.mrb[0].mxu0
        %2127 = vdwg.mxu0
        %2128 = vmatprep.subr.mxu0 0.0
        %v2129 = vsub.f32 %v332, %v332
        %v2130 = vand.u32 %v2129, 4294901760
        %v2131 = vsub.f32 %v2129, %v2130
        %v2132 = vand.u32 %v2131, 4294901760
        %2133 = vmatpush1.msra.mxu0 %v2132
        %2134 = vmatprep.subr.mxu0 0.0
        %v2135 = vsub.f32 %v333, %v333
        %v2136 = vand.u32 %v2135, 4294901760
        %v2137 = vsub.f32 %v2135, %v2136
        %v2138 = vand.u32 %v2137, 4294901760
        %2139 = vmatpush1.msra.mxu0 %v2138
        %2140 = vmatprep.subr.mxu0 0.0
        %v2141 = vsub.f32 %v334, %v334
        %v2142 = vand.u32 %v2141, 4294901760
        %v2143 = vsub.f32 %v2141, %v2142
        %v2144 = vand.u32 %v2143, 4294901760
        %2145 = vmatpush1.msra.mxu0 %v2144
        %2146 = vmatprep.subr.mxu0 0.0
        %v2147 = vsub.f32 %v335, %v335
        %v2148 = vand.u32 %v2147, 4294901760
        %v2149 = vsub.f32 %v2147, %v2148
        %v2150 = vand.u32 %v2149, 4294901760
        %2151 = vmatpush1.msra.mxu0 %v2150
        %2152 = vmatprep.subr.mxu0 0.0
        %v2153 = vsub.f32 %v336, %v336
        %v2154 = vand.u32 %v2153, 4294901760
        %v2155 = vsub.f32 %v2153, %v2154
        %v2156 = vand.u32 %v2155, 4294901760
        %2157 = vmatpush1.msra.mxu0 %v2156
        %2158 = vmatprep.subr.mxu0 0.0
        %v2159 = vsub.f32 %v337, %v337
        %v2160 = vand.u32 %v2159, 4294901760
        %v2161 = vsub.f32 %v2159, %v2160
        %v2162 = vand.u32 %v2161, 4294901760
        %2163 = vmatpush1.msra.mxu0 %v2162
        %2164 = vmatprep.subr.mxu0 0.0
        %v2165 = vsub.f32 %v338, %v338
        %v2166 = vand.u32 %v2165, 4294901760
        %v2167 = vsub.f32 %v2165, %v2166
        %v2168 = vand.u32 %v2167, 4294901760
        %2169 = vmatpush1.msra.mxu0 %v2168
        %2170 = vmatprep.subr.mxu0 0.0
        %v2171 = vsub.f32 %v339, %v339
        %v2172 = vand.u32 %v2171, 4294901760
        %v2173 = vsub.f32 %v2171, %v2172
        %v2174 = vand.u32 %v2173, 4294901760
        %2175 = vmatpush1.msra.mxu0 %v2174
        %2176 = vmatprep.subr.mxu0 0.0
        %v2177 = vsub.f32 %v340, %v340
        %v2178 = vand.u32 %v2177, 4294901760
        %v2179 = vsub.f32 %v2177, %v2178
        %v2180 = vand.u32 %v2179, 4294901760
        %2181 = vmatpush1.msra.mxu0 %v2180
        %2182 = vmatprep.subr.mxu0 0.0
        %v2183 = vsub.f32 %v341, %v341
        %v2184 = vand.u32 %v2183, 4294901760
        %v2185 = vsub.f32 %v2183, %v2184
        %v2186 = vand.u32 %v2185, 4294901760
        %2187 = vmatpush1.msra.mxu0 %v2186
        %2188 = vmatprep.subr.mxu0 0.0
        %v2189 = vsub.f32 %v342, %v342
        %v2190 = vand.u32 %v2189, 4294901760
        %v2191 = vsub.f32 %v2189, %v2190
        %v2192 = vand.u32 %v2191, 4294901760
        %2193 = vmatpush1.msra.mxu0 %v2192
        %2194 = vmatprep.subr.mxu0 0.0
        %v2195 = vsub.f32 %v343, %v343
        %v2196 = vand.u32 %v2195, 4294901760
        %v2197 = vsub.f32 %v2195, %v2196
        %v2198 = vand.u32 %v2197, 4294901760
        %2199 = vmatpush1.msra.mxu0 %v2198
        %2200 = vmatprep.subr.mxu0 0.0
        %v2201 = vand.u32 %v356, 4294901760
        %v2202 = vsub.f32 %v356, %v2201
        %v2203 = vand.u32 %v2202, 4294901760
        %v2204 = vsub.f32 %v2202, %v2203
        %v2205 = vand.u32 %v2204, 4294901760
        %2206 = vmatpush1.msra.mxu0 %v2205
        %2207 = vmatprep.subr.mxu0 0.0
        %2208 = vmatpush1.msra.mxu0 0.0
        %2209 = vmatprep.subr.mxu0 0.0
        %2210 = vmatpush1.msra.mxu0 0.0
        %2211 = vmatprep.subr.mxu0 0.0
        %2212 = vmatpush1.msra.mxu0 0.0
        %2213 = vmatprep.subr.mxu0 0.0
        %2214 = vmatpush1.msra.mxu0 0.0
        %2215 = vmatprep.subr.mxu0 0.0
        %2216 = vmatpush1.msra.mxu0 0.0
        %2217 = vmatprep.subr.mxu0 0.0
        %2218 = vmatpush1.msra.mxu0 0.0
        %2219 = vmatprep.subr.mxu0 0.0
        %2220 = vmatpush1.msra.mxu0 0.0
        %2221 = vmatprep.subr.mxu0 0.0
        %2222 = vmatpush1.msra.mxu0 0.0
        %2223 = vmatprep.subr.mxu0 0.0
        %2224 = vmatpush1.msra.mxu0 0.0
        %2225 = vmatprep.subr.mxu0 0.0
        %2226 = vmatpush1.msra.mxu0 0.0
        %2227 = vmatprep.subr.mxu0 0.0
        %2228 = vmatpush1.msra.mxu0 0.0
        %2229 = vmatprep.subr.mxu0 0.0
        %2230 = vmatpush1.msra.mxu0 0.0
        %2231 = vmatprep.subr.mxu0 0.0
        %2232 = vmatpush1.msra.mxu0 0.0
        %2233 = vmatprep.subr.mxu0 0.0
        %2234 = vmatpush1.msra.mxu0 0.0
        %2235 = vmatprep.subr.mxu0 0.0
        %2236 = vmatpush1.msra.mxu0 0.0
        %2237 = vmatprep.subr.mxu0 0.0
        %2238 = vmatpush1.msra.mxu0 0.0
        %2239 = vmatprep.subr.mxu0 0.0
        %2240 = vmatpush1.msra.mxu0 0.0
        %2241 = vmatprep.subr.mxu0 0.0
        %2242 = vmatpush1.msra.mxu0 0.0
        %2243 = vmatprep.subr.mxu0 0.0
        %2244 = vmatpush1.msra.mxu0 0.0
        %2245 = vmatprep.mubr.f32.mxu0 0.0
        %v2246 = vand.u32 %v2050, 4294901760
        %2247 = vmatmul.mubr.f32.gmra.mrb[0].mxu0 %v2246
        %v2248 = vpop.f32.mrb[0].mxu0
        %v2249 = vadd.f32 %v2125, %v2248
        %v2250 = vpop.f32.mrb[0].mxu0
        %2251 = vdwg.mxu0
        %2252 = vmatprep.subr.mxu0 0.0
        %v2253 = vsub.f32 %v332, %v332
        %2254 = vmatpush1.msra.mxu0 %v2253
        %2255 = vmatprep.subr.mxu0 0.0
        %v2256 = vsub.f32 %v333, %v333
        %2257 = vmatpush1.msra.mxu0 %v2256
        %2258 = vmatprep.subr.mxu0 0.0
        %v2259 = vsub.f32 %v334, %v334
        %2260 = vmatpush1.msra.mxu0 %v2259
        %2261 = vmatprep.subr.mxu0 0.0
        %v2262 = vsub.f32 %v335, %v335
        %2263 = vmatpush1.msra.mxu0 %v2262
        %2264 = vmatprep.subr.mxu0 0.0
        %v2265 = vsub.f32 %v336, %v336
        %2266 = vmatpush1.msra.mxu0 %v2265
        %2267 = vmatprep.subr.mxu0 0.0
        %v2268 = vsub.f32 %v337, %v337
        %2269 = vmatpush1.msra.mxu0 %v2268
        %2270 = vmatprep.subr.mxu0 0.0
        %v2271 = vsub.f32 %v338, %v338
        %2272 = vmatpush1.msra.mxu0 %v2271
        %2273 = vmatprep.subr.mxu0 0.0
        %v2274 = vsub.f32 %v339, %v339
        %2275 = vmatpush1.msra.mxu0 %v2274
        %2276 = vmatprep.subr.mxu0 0.0
        %v2277 = vsub.f32 %v340, %v340
        %2278 = vmatpush1.msra.mxu0 %v2277
        %2279 = vmatprep.subr.mxu0 0.0
        %v2280 = vsub.f32 %v341, %v341
        %2281 = vmatpush1.msra.mxu0 %v2280
        %2282 = vmatprep.subr.mxu0 0.0
        %v2283 = vsub.f32 %v342, %v342
        %2284 = vmatpush1.msra.mxu0 %v2283
        %2285 = vmatprep.subr.mxu0 0.0
        %v2286 = vsub.f32 %v343, %v343
        %2287 = vmatpush1.msra.mxu0 %v2286
        %2288 = vmatprep.subr.mxu0 0.0
        %v2289 = vand.u32 %v356, 4294901760
        %v2290 = vsub.f32 %v356, %v2289
        %2291 = vmatpush1.msra.mxu0 %v2290
        %2292 = vmatprep.subr.mxu0 0.0
        %2293 = vmatpush1.msra.mxu0 0.0
        %2294 = vmatprep.subr.mxu0 0.0
        %2295 = vmatpush1.msra.mxu0 0.0
        %2296 = vmatprep.subr.mxu0 0.0
        %2297 = vmatpush1.msra.mxu0 0.0
        %2298 = vmatprep.subr.mxu0 0.0
        %2299 = vmatpush1.msra.mxu0 0.0
        %2300 = vmatprep.subr.mxu0 0.0
        %2301 = vmatpush1.msra.mxu0 0.0
        %2302 = vmatprep.subr.mxu0 0.0
        %2303 = vmatpush1.msra.mxu0 0.0
        %2304 = vmatprep.subr.mxu0 0.0
        %2305 = vmatpush1.msra.mxu0 0.0
        %2306 = vmatprep.subr.mxu0 0.0
        %2307 = vmatpush1.msra.mxu0 0.0
        %2308 = vmatprep.subr.mxu0 0.0
        %2309 = vmatpush1.msra.mxu0 0.0
        %2310 = vmatprep.subr.mxu0 0.0
        %2311 = vmatpush1.msra.mxu0 0.0
        %2312 = vmatprep.subr.mxu0 0.0
        %2313 = vmatpush1.msra.mxu0 0.0
        %2314 = vmatprep.subr.mxu0 0.0
        %2315 = vmatpush1.msra.mxu0 0.0
        %2316 = vmatprep.subr.mxu0 0.0
        %2317 = vmatpush1.msra.mxu0 0.0
        %2318 = vmatprep.subr.mxu0 0.0
        %2319 = vmatpush1.msra.mxu0 0.0
        %2320 = vmatprep.subr.mxu0 0.0
        %2321 = vmatpush1.msra.mxu0 0.0
        %2322 = vmatprep.subr.mxu0 0.0
        %2323 = vmatpush1.msra.mxu0 0.0
        %2324 = vmatprep.subr.mxu0 0.0
        %2325 = vmatpush1.msra.mxu0 0.0
        %2326 = vmatprep.subr.mxu0 0.0
        %2327 = vmatpush1.msra.mxu0 0.0
        %2328 = vmatprep.subr.mxu0 0.0
        %2329 = vmatpush1.msra.mxu0 0.0
        %2330 = vmatprep.mubr.f32.mxu0 0.0
        %v2331 = vand.u32 %v2050, 4294901760
        %v2332 = vsub.f32 %v2050, %v2331
        %2333 = vmatmul.mubr.f32.gmra.mrb[0].mxu0 %v2332
        %v2334 = vpop.f32.mrb[0].mxu0
        %v2335 = vadd.f32 %v2249, %v2334
        %v2336 = vpop.f32.mrb[0].mxu0
        %2337 = vdwg.mxu0
        %2338 = vmatprep.subr.mxu0 0.0
        %2339 = vmatpush1.msra.mxu0 %v332
        %2340 = vmatprep.subr.mxu0 0.0
        %2341 = vmatpush1.msra.mxu0 %v333
        %2342 = vmatprep.subr.mxu0 0.0
        %2343 = vmatpush1.msra.mxu0 %v334
        %2344 = vmatprep.subr.mxu0 0.0
        %2345 = vmatpush1.msra.mxu0 %v335
        %2346 = vmatprep.subr.mxu0 0.0
        %2347 = vmatpush1.msra.mxu0 %v336
        %2348 = vmatprep.subr.mxu0 0.0
        %2349 = vmatpush1.msra.mxu0 %v337
        %2350 = vmatprep.subr.mxu0 0.0
        %2351 = vmatpush1.msra.mxu0 %v338
        %2352 = vmatprep.subr.mxu0 0.0
        %2353 = vmatpush1.msra.mxu0 %v339
        %2354 = vmatprep.subr.mxu0 0.0
        %2355 = vmatpush1.msra.mxu0 %v340
        %2356 = vmatprep.subr.mxu0 0.0
        %2357 = vmatpush1.msra.mxu0 %v341
        %2358 = vmatprep.subr.mxu0 0.0
        %2359 = vmatpush1.msra.mxu0 %v342
        %2360 = vmatprep.subr.mxu0 0.0
        %2361 = vmatpush1.msra.mxu0 %v343
        %2362 = vmatprep.subr.mxu0 0.0
        %v2363 = vand.u32 %v356, 4294901760
        %2364 = vmatpush1.msra.mxu0 %v2363
        %2365 = vmatprep.subr.mxu0 0.0
        %2366 = vmatpush1.msra.mxu0 0.0
        %2367 = vmatprep.subr.mxu0 0.0
        %2368 = vmatpush1.msra.mxu0 0.0
        %2369 = vmatprep.subr.mxu0 0.0
        %2370 = vmatpush1.msra.mxu0 0.0
        %2371 = vmatprep.subr.mxu0 0.0
        %2372 = vmatpush1.msra.mxu0 0.0
        %2373 = vmatprep.subr.mxu0 0.0
        %2374 = vmatpush1.msra.mxu0 0.0
        %2375 = vmatprep.subr.mxu0 0.0
        %2376 = vmatpush1.msra.mxu0 0.0
        %2377 = vmatprep.subr.mxu0 0.0
        %2378 = vmatpush1.msra.mxu0 0.0
        %2379 = vmatprep.subr.mxu0 0.0
        %2380 = vmatpush1.msra.mxu0 0.0
        %2381 = vmatprep.subr.mxu0 0.0
        %2382 = vmatpush1.msra.mxu0 0.0
        %2383 = vmatprep.subr.mxu0 0.0
        %2384 = vmatpush1.msra.mxu0 0.0
        %2385 = vmatprep.subr.mxu0 0.0
        %2386 = vmatpush1.msra.mxu0 0.0
        %2387 = vmatprep.subr.mxu0 0.0
        %2388 = vmatpush1.msra.mxu0 0.0
        %2389 = vmatprep.subr.mxu0 0.0
        %2390 = vmatpush1.msra.mxu0 0.0
        %2391 = vmatprep.subr.mxu0 0.0
        %2392 = vmatpush1.msra.mxu0 0.0
        %2393 = vmatprep.subr.mxu0 0.0
        %2394 = vmatpush1.msra.mxu0 0.0
        %2395 = vmatprep.subr.mxu0 0.0
        %2396 = vmatpush1.msra.mxu0 0.0
        %2397 = vmatprep.subr.mxu0 0.0
        %2398 = vmatpush1.msra.mxu0 0.0
        %2399 = vmatprep.subr.mxu0 0.0
        %2400 = vmatpush1.msra.mxu0 0.0
        %2401 = vmatprep.subr.mxu0 0.0
        %2402 = vmatpush1.msra.mxu0 0.0
        %2403 = vmatprep.mubr.f32.mxu0 0.0
        %v2404 = vand.u32 %v2050, 4294901760
        %v2405 = vsub.f32 %v2050, %v2404
        %v2406 = vand.u32 %v2405, 4294901760
        %2407 = vmatmul.mubr.f32.gmra.mrb[0].mxu0 %v2406
        %v2408 = vpop.f32.mrb[0].mxu0
        %v2409 = vadd.f32 %v2335, %v2408
        %v2410 = vpop.f32.mrb[0].mxu0
        %2411 = vdwg.mxu0
        %2412 = vmatprep.subr.mxu0 0.0
        %v2413 = vsub.f32 %v332, %v332
        %v2414 = vand.u32 %v2413, 4294901760
        %2415 = vmatpush1.msra.mxu0 %v2414
        %2416 = vmatprep.subr.mxu0 0.0
        %v2417 = vsub.f32 %v333, %v333
        %v2418 = vand.u32 %v2417, 4294901760
        %2419 = vmatpush1.msra.mxu0 %v2418
        %2420 = vmatprep.subr.mxu0 0.0
        %v2421 = vsub.f32 %v334, %v334
        %v2422 = vand.u32 %v2421, 4294901760
        %2423 = vmatpush1.msra.mxu0 %v2422
        %2424 = vmatprep.subr.mxu0 0.0
        %v2425 = vsub.f32 %v335, %v335
        %v2426 = vand.u32 %v2425, 4294901760
        %2427 = vmatpush1.msra.mxu0 %v2426
        %2428 = vmatprep.subr.mxu0 0.0
        %v2429 = vsub.f32 %v336, %v336
        %v2430 = vand.u32 %v2429, 4294901760
        %2431 = vmatpush1.msra.mxu0 %v2430
        %2432 = vmatprep.subr.mxu0 0.0
        %v2433 = vsub.f32 %v337, %v337
        %v2434 = vand.u32 %v2433, 4294901760
        %2435 = vmatpush1.msra.mxu0 %v2434
        %2436 = vmatprep.subr.mxu0 0.0
        %v2437 = vsub.f32 %v338, %v338
        %v2438 = vand.u32 %v2437, 4294901760
        %2439 = vmatpush1.msra.mxu0 %v2438
        %2440 = vmatprep.subr.mxu0 0.0
        %v2441 = vsub.f32 %v339, %v339
        %v2442 = vand.u32 %v2441, 4294901760
        %2443 = vmatpush1.msra.mxu0 %v2442
        %2444 = vmatprep.subr.mxu0 0.0
        %v2445 = vsub.f32 %v340, %v340
        %v2446 = vand.u32 %v2445, 4294901760
        %2447 = vmatpush1.msra.mxu0 %v2446
        %2448 = vmatprep.subr.mxu0 0.0
        %v2449 = vsub.f32 %v341, %v341
        %v2450 = vand.u32 %v2449, 4294901760
        %2451 = vmatpush1.msra.mxu0 %v2450
        %2452 = vmatprep.subr.mxu0 0.0
        %v2453 = vsub.f32 %v342, %v342
        %v2454 = vand.u32 %v2453, 4294901760
        %2455 = vmatpush1.msra.mxu0 %v2454
        %2456 = vmatprep.subr.mxu0 0.0
        %v2457 = vsub.f32 %v343, %v343
        %v2458 = vand.u32 %v2457, 4294901760
        %2459 = vmatpush1.msra.mxu0 %v2458
        %2460 = vmatprep.subr.mxu0 0.0
        %v2461 = vand.u32 %v356, 4294901760
        %v2462 = vsub.f32 %v356, %v2461
        %v2463 = vand.u32 %v2462, 4294901760
        %2464 = vmatpush1.msra.mxu0 %v2463
        %2465 = vmatprep.subr.mxu0 0.0
        %2466 = vmatpush1.msra.mxu0 0.0
        %2467 = vmatprep.subr.mxu0 0.0
        %2468 = vmatpush1.msra.mxu0 0.0
        %2469 = vmatprep.subr.mxu0 0.0
        %2470 = vmatpush1.msra.mxu0 0.0
        %2471 = vmatprep.subr.mxu0 0.0
        %2472 = vmatpush1.msra.mxu0 0.0
        %2473 = vmatprep.subr.mxu0 0.0
        %2474 = vmatpush1.msra.mxu0 0.0
        %2475 = vmatprep.subr.mxu0 0.0
        %2476 = vmatpush1.msra.mxu0 0.0
        %2477 = vmatprep.subr.mxu0 0.0
        %2478 = vmatpush1.msra.mxu0 0.0
        %2479 = vmatprep.subr.mxu0 0.0
        %2480 = vmatpush1.msra.mxu0 0.0
        %2481 = vmatprep.subr.mxu0 0.0
        %2482 = vmatpush1.msra.mxu0 0.0
        %2483 = vmatprep.subr.mxu0 0.0
        %2484 = vmatpush1.msra.mxu0 0.0
        %2485 = vmatprep.subr.mxu0 0.0
        %2486 = vmatpush1.msra.mxu0 0.0
        %2487 = vmatprep.subr.mxu0 0.0
        %2488 = vmatpush1.msra.mxu0 0.0
        %2489 = vmatprep.subr.mxu0 0.0
        %2490 = vmatpush1.msra.mxu0 0.0
        %2491 = vmatprep.subr.mxu0 0.0
        %2492 = vmatpush1.msra.mxu0 0.0
        %2493 = vmatprep.subr.mxu0 0.0
        %2494 = vmatpush1.msra.mxu0 0.0
        %2495 = vmatprep.subr.mxu0 0.0
        %2496 = vmatpush1.msra.mxu0 0.0
        %2497 = vmatprep.subr.mxu0 0.0
        %2498 = vmatpush1.msra.mxu0 0.0
        %2499 = vmatprep.subr.mxu0 0.0
        %2500 = vmatpush1.msra.mxu0 0.0
        %2501 = vmatprep.subr.mxu0 0.0
        %2502 = vmatpush1.msra.mxu0 0.0
        %2503 = vmatprep.mubr.f32.mxu0 0.0
        %v2504 = vand.u32 %v2050, 4294901760
        %2505 = vmatmul.mubr.f32.gmra.mrb[0].mxu0 %v2504
        %v2506 = vpop.f32.mrb[0].mxu0
        %v2507 = vadd.f32 %v2409, %v2506
        %v2508 = vpop.f32.mrb[0].mxu0
        %2509 = vdwg.mxu0
        %2510 = vmatprep.subr.mxu0 0.0
        %2511 = vmatpush1.msra.mxu0 %v332
        %2512 = vmatprep.subr.mxu0 0.0
        %2513 = vmatpush1.msra.mxu0 %v333
        %2514 = vmatprep.subr.mxu0 0.0
        %2515 = vmatpush1.msra.mxu0 %v334
        %2516 = vmatprep.subr.mxu0 0.0
        %2517 = vmatpush1.msra.mxu0 %v335
        %2518 = vmatprep.subr.mxu0 0.0
        %2519 = vmatpush1.msra.mxu0 %v336
        %2520 = vmatprep.subr.mxu0 0.0
        %2521 = vmatpush1.msra.mxu0 %v337
        %2522 = vmatprep.subr.mxu0 0.0
        %2523 = vmatpush1.msra.mxu0 %v338
        %2524 = vmatprep.subr.mxu0 0.0
        %2525 = vmatpush1.msra.mxu0 %v339
        %2526 = vmatprep.subr.mxu0 0.0
        %2527 = vmatpush1.msra.mxu0 %v340
        %2528 = vmatprep.subr.mxu0 0.0
        %2529 = vmatpush1.msra.mxu0 %v341
        %2530 = vmatprep.subr.mxu0 0.0
        %2531 = vmatpush1.msra.mxu0 %v342
        %2532 = vmatprep.subr.mxu0 0.0
        %2533 = vmatpush1.msra.mxu0 %v343
        %2534 = vmatprep.subr.mxu0 0.0
        %v2535 = vand.u32 %v356, 4294901760
        %2536 = vmatpush1.msra.mxu0 %v2535
        %2537 = vmatprep.subr.mxu0 0.0
        %2538 = vmatpush1.msra.mxu0 0.0
        %2539 = vmatprep.subr.mxu0 0.0
        %2540 = vmatpush1.msra.mxu0 0.0
        %2541 = vmatprep.subr.mxu0 0.0
        %2542 = vmatpush1.msra.mxu0 0.0
        %2543 = vmatprep.subr.mxu0 0.0
        %2544 = vmatpush1.msra.mxu0 0.0
        %2545 = vmatprep.subr.mxu0 0.0
        %2546 = vmatpush1.msra.mxu0 0.0
        %2547 = vmatprep.subr.mxu0 0.0
        %2548 = vmatpush1.msra.mxu0 0.0
        %2549 = vmatprep.subr.mxu0 0.0
        %2550 = vmatpush1.msra.mxu0 0.0
        %2551 = vmatprep.subr.mxu0 0.0
        %2552 = vmatpush1.msra.mxu0 0.0
        %2553 = vmatprep.subr.mxu0 0.0
        %2554 = vmatpush1.msra.mxu0 0.0
        %2555 = vmatprep.subr.mxu0 0.0
        %2556 = vmatpush1.msra.mxu0 0.0
        %2557 = vmatprep.subr.mxu0 0.0
        %2558 = vmatpush1.msra.mxu0 0.0
        %2559 = vmatprep.subr.mxu0 0.0
        %2560 = vmatpush1.msra.mxu0 0.0
        %2561 = vmatprep.subr.mxu0 0.0
        %2562 = vmatpush1.msra.mxu0 0.0
        %2563 = vmatprep.subr.mxu0 0.0
        %2564 = vmatpush1.msra.mxu0 0.0
        %2565 = vmatprep.subr.mxu0 0.0
        %2566 = vmatpush1.msra.mxu0 0.0
        %2567 = vmatprep.subr.mxu0 0.0
        %2568 = vmatpush1.msra.mxu0 0.0
        %2569 = vmatprep.subr.mxu0 0.0
        %2570 = vmatpush1.msra.mxu0 0.0
        %2571 = vmatprep.subr.mxu0 0.0
        %2572 = vmatpush1.msra.mxu0 0.0
        %2573 = vmatprep.subr.mxu0 0.0
        %2574 = vmatpush1.msra.mxu0 0.0
        %2575 = vmatprep.mubr.f32.mxu0 0.0
        %v2576 = vand.u32 %v2050, 4294901760
        %2577 = vmatmul.mubr.f32.gmra.mrb[0].mxu0 %v2576
        %v2578 = vpop.f32.mrb[0].mxu0
        %v2579 = vadd.f32 %v2507, %v2578
        %v2580 = vpop.f32.mrb[0].mxu0
        %2581 = vdwg.mxu0
        %v2582 = vmax.f32 %v2579, 0.0
        %v2584 = vrot.slane %v2579, 1
        %v2587 = vmul.f32 %v2047, %v2579
        %v2588 = vmul.f32 %v2048, %v2584
        %v2591 = vrot.slane %v2588, 7
        %v2592 = vsel %vm898, %v2591, %v2587
        %v2594 = vsub.f32 %v2582, %v2592
        %v2595 = vand.u32 2147483647, %v2579
        %v2596 = vsub.f32 0.0, %v2595
        %v2597 = vmul.f32 %v2596, 1.442695
        %v2598 = vpow.pop %v2597
        %v2599 = vadd.f32 %v2598, 1.0
        %v2600 = vlog2.pop %v2599
        %v2601 = vmul.f32 %v2600, 0.6931472
        %v2602 = vadd.f32 %v2594, %v2601
        %v2603 = vsel %vm910, %v2602, 0.0
        %2604 = vadd.xlane.f32.xlu0 %v2603
        %v2605 = vpop.xlane.xlu0 %2604
        %v2606 = vadd.f32 %v2042, %v2605
        %s2607 = scalar_lea.vmem %s208, 8 [#allocation2]
        %v2608 = vld [vmem:[%s2607] sm:$0x3]
        %v2609 = vld [vmem:[%s217 + $0x4] sm:$0x1]
        %v2610 = vld [vmem:[%s217 + $0xc] sm:$0x1]
        %v2611 = vcvt.s32.f32 %v2609
        %v2612 = vcvt.s32.f32 %v2610
        %v2614 = vsel %vm350, %v2608, 0
        %2616 = vmatprep.subr.mxu0 0.0
        %2617 = vmatpush1.msra.mxu0 %v332
        %2618 = vmatprep.subr.mxu0 0.0
        %2619 = vmatpush1.msra.mxu0 %v333
        %2620 = vmatprep.subr.mxu0 0.0
        %2621 = vmatpush1.msra.mxu0 %v334
        %2622 = vmatprep.subr.mxu0 0.0
        %2623 = vmatpush1.msra.mxu0 %v335
        %2624 = vmatprep.subr.mxu0 0.0
        %2625 = vmatpush1.msra.mxu0 %v336
        %2626 = vmatprep.subr.mxu0 0.0
        %2627 = vmatpush1.msra.mxu0 %v337
        %2628 = vmatprep.subr.mxu0 0.0
        %2629 = vmatpush1.msra.mxu0 %v338
        %2630 = vmatprep.subr.mxu0 0.0
        %2631 = vmatpush1.msra.mxu0 %v339
        %2632 = vmatprep.subr.mxu0 0.0
        %2633 = vmatpush1.msra.mxu0 %v340
        %2634 = vmatprep.subr.mxu0 0.0
        %2635 = vmatpush1.msra.mxu0 %v341
        %2636 = vmatprep.subr.mxu0 0.0
        %2637 = vmatpush1.msra.mxu0 %v342
        %2638 = vmatprep.subr.mxu0 0.0
        %2639 = vmatpush1.msra.mxu0 %v343
        %2640 = vmatprep.subr.mxu0 0.0
        %v2641 = vand.u32 %v356, 4294901760
        %2642 = vmatpush1.msra.mxu0 %v2641
        %2643 = vmatprep.subr.mxu0 0.0
        %2644 = vmatpush1.msra.mxu0 0.0
        %2645 = vmatprep.subr.mxu0 0.0
        %2646 = vmatpush1.msra.mxu0 0.0
        %2647 = vmatprep.subr.mxu0 0.0
        %2648 = vmatpush1.msra.mxu0 0.0
        %2649 = vmatprep.subr.mxu0 0.0
        %2650 = vmatpush1.msra.mxu0 0.0
        %2651 = vmatprep.subr.mxu0 0.0
        %2652 = vmatpush1.msra.mxu0 0.0
        %2653 = vmatprep.subr.mxu0 0.0
        %2654 = vmatpush1.msra.mxu0 0.0
        %2655 = vmatprep.subr.mxu0 0.0
        %2656 = vmatpush1.msra.mxu0 0.0
        %2657 = vmatprep.subr.mxu0 0.0
        %2658 = vmatpush1.msra.mxu0 0.0
        %2659 = vmatprep.subr.mxu0 0.0
        %2660 = vmatpush1.msra.mxu0 0.0
        %2661 = vmatprep.subr.mxu0 0.0
        %2662 = vmatpush1.msra.mxu0 0.0
        %2663 = vmatprep.subr.mxu0 0.0
        %2664 = vmatpush1.msra.mxu0 0.0
        %2665 = vmatprep.subr.mxu0 0.0
        %2666 = vmatpush1.msra.mxu0 0.0
        %2667 = vmatprep.subr.mxu0 0.0
        %2668 = vmatpush1.msra.mxu0 0.0
        %2669 = vmatprep.subr.mxu0 0.0
        %2670 = vmatpush1.msra.mxu0 0.0
        %2671 = vmatprep.subr.mxu0 0.0
        %2672 = vmatpush1.msra.mxu0 0.0
        %2673 = vmatprep.subr.mxu0 0.0
        %2674 = vmatpush1.msra.mxu0 0.0
        %2675 = vmatprep.subr.mxu0 0.0
        %2676 = vmatpush1.msra.mxu0 0.0
        %2677 = vmatprep.subr.mxu0 0.0
        %2678 = vmatpush1.msra.mxu0 0.0
        %2679 = vmatprep.subr.mxu0 0.0
        %2680 = vmatpush1.msra.mxu0 0.0
        %2681 = vmatprep.mubr.f32.mxu0 0.0
        %v2682 = vand.u32 %v2614, 4294901760
        %v2683 = vsub.f32 %v2614, %v2682
        %v2684 = vand.u32 %v2683, 4294901760
        %v2685 = vsub.f32 %v2683, %v2684
        %v2686 = vand.u32 %v2685, 4294901760
        %2687 = vmatmul.mubr.f32.gmra.mrb[0].mxu0 %v2686
        %v2688 = vpop.f32.mrb[0].mxu0
        %v2689 = vadd.f32 0.0, %v2688
        %v2690 = vpop.f32.mrb[0].mxu0
        %2691 = vdwg.mxu0
        %2692 = vmatprep.subr.mxu0 0.0
        %v2693 = vsub.f32 %v332, %v332
        %v2694 = vand.u32 %v2693, 4294901760
        %v2695 = vsub.f32 %v2693, %v2694
        %v2696 = vand.u32 %v2695, 4294901760
        %2697 = vmatpush1.msra.mxu0 %v2696
        %2698 = vmatprep.subr.mxu0 0.0
        %v2699 = vsub.f32 %v333, %v333
        %v2700 = vand.u32 %v2699, 4294901760
        %v2701 = vsub.f32 %v2699, %v2700
        %v2702 = vand.u32 %v2701, 4294901760
        %2703 = vmatpush1.msra.mxu0 %v2702
        %2704 = vmatprep.subr.mxu0 0.0
        %v2705 = vsub.f32 %v334, %v334
        %v2706 = vand.u32 %v2705, 4294901760
        %v2707 = vsub.f32 %v2705, %v2706
        %v2708 = vand.u32 %v2707, 4294901760
        %2709 = vmatpush1.msra.mxu0 %v2708
        %2710 = vmatprep.subr.mxu0 0.0
        %v2711 = vsub.f32 %v335, %v335
        %v2712 = vand.u32 %v2711, 4294901760
        %v2713 = vsub.f32 %v2711, %v2712
        %v2714 = vand.u32 %v2713, 4294901760
        %2715 = vmatpush1.msra.mxu0 %v2714
        %2716 = vmatprep.subr.mxu0 0.0
        %v2717 = vsub.f32 %v336, %v336
        %v2718 = vand.u32 %v2717, 4294901760
        %v2719 = vsub.f32 %v2717, %v2718
        %v2720 = vand.u32 %v2719, 4294901760
        %2721 = vmatpush1.msra.mxu0 %v2720
        %2722 = vmatprep.subr.mxu0 0.0
        %v2723 = vsub.f32 %v337, %v337
        %v2724 = vand.u32 %v2723, 4294901760
        %v2725 = vsub.f32 %v2723, %v2724
        %v2726 = vand.u32 %v2725, 4294901760
        %2727 = vmatpush1.msra.mxu0 %v2726
        %2728 = vmatprep.subr.mxu0 0.0
        %v2729 = vsub.f32 %v338, %v338
        %v2730 = vand.u32 %v2729, 4294901760
        %v2731 = vsub.f32 %v2729, %v2730
        %v2732 = vand.u32 %v2731, 4294901760
        %2733 = vmatpush1.msra.mxu0 %v2732
        %2734 = vmatprep.subr.mxu0 0.0
        %v2735 = vsub.f32 %v339, %v339
        %v2736 = vand.u32 %v2735, 4294901760
        %v2737 = vsub.f32 %v2735, %v2736
        %v2738 = vand.u32 %v2737, 4294901760
        %2739 = vmatpush1.msra.mxu0 %v2738
        %2740 = vmatprep.subr.mxu0 0.0
        %v2741 = vsub.f32 %v340, %v340
        %v2742 = vand.u32 %v2741, 4294901760
        %v2743 = vsub.f32 %v2741, %v2742
        %v2744 = vand.u32 %v2743, 4294901760
        %2745 = vmatpush1.msra.mxu0 %v2744
        %2746 = vmatprep.subr.mxu0 0.0
        %v2747 = vsub.f32 %v341, %v341
        %v2748 = vand.u32 %v2747, 4294901760
        %v2749 = vsub.f32 %v2747, %v2748
        %v2750 = vand.u32 %v2749, 4294901760
        %2751 = vmatpush1.msra.mxu0 %v2750
        %2752 = vmatprep.subr.mxu0 0.0
        %v2753 = vsub.f32 %v342, %v342
        %v2754 = vand.u32 %v2753, 4294901760
        %v2755 = vsub.f32 %v2753, %v2754
        %v2756 = vand.u32 %v2755, 4294901760
        %2757 = vmatpush1.msra.mxu0 %v2756
        %2758 = vmatprep.subr.mxu0 0.0
        %v2759 = vsub.f32 %v343, %v343
        %v2760 = vand.u32 %v2759, 4294901760
        %v2761 = vsub.f32 %v2759, %v2760
        %v2762 = vand.u32 %v2761, 4294901760
        %2763 = vmatpush1.msra.mxu0 %v2762
        %2764 = vmatprep.subr.mxu0 0.0
        %v2765 = vand.u32 %v356, 4294901760
        %v2766 = vsub.f32 %v356, %v2765
        %v2767 = vand.u32 %v2766, 4294901760
        %v2768 = vsub.f32 %v2766, %v2767
        %v2769 = vand.u32 %v2768, 4294901760
        %2770 = vmatpush1.msra.mxu0 %v2769
        %2771 = vmatprep.subr.mxu0 0.0
        %2772 = vmatpush1.msra.mxu0 0.0
        %2773 = vmatprep.subr.mxu0 0.0
        %2774 = vmatpush1.msra.mxu0 0.0
        %2775 = vmatprep.subr.mxu0 0.0
        %2776 = vmatpush1.msra.mxu0 0.0
        %2777 = vmatprep.subr.mxu0 0.0
        %2778 = vmatpush1.msra.mxu0 0.0
        %2779 = vmatprep.subr.mxu0 0.0
        %2780 = vmatpush1.msra.mxu0 0.0
        %2781 = vmatprep.subr.mxu0 0.0
        %2782 = vmatpush1.msra.mxu0 0.0
        %2783 = vmatprep.subr.mxu0 0.0
        %2784 = vmatpush1.msra.mxu0 0.0
        %2785 = vmatprep.subr.mxu0 0.0
        %2786 = vmatpush1.msra.mxu0 0.0
        %2787 = vmatprep.subr.mxu0 0.0
        %2788 = vmatpush1.msra.mxu0 0.0
        %2789 = vmatprep.subr.mxu0 0.0
        %2790 = vmatpush1.msra.mxu0 0.0
        %2791 = vmatprep.subr.mxu0 0.0
        %2792 = vmatpush1.msra.mxu0 0.0
        %2793 = vmatprep.subr.mxu0 0.0
        %2794 = vmatpush1.msra.mxu0 0.0
        %2795 = vmatprep.subr.mxu0 0.0
        %2796 = vmatpush1.msra.mxu0 0.0
        %2797 = vmatprep.subr.mxu0 0.0
        %2798 = vmatpush1.msra.mxu0 0.0
        %2799 = vmatprep.subr.mxu0 0.0
        %2800 = vmatpush1.msra.mxu0 0.0
        %2801 = vmatprep.subr.mxu0 0.0
        %2802 = vmatpush1.msra.mxu0 0.0
        %2803 = vmatprep.subr.mxu0 0.0
        %2804 = vmatpush1.msra.mxu0 0.0
        %2805 = vmatprep.subr.mxu0 0.0
        %2806 = vmatpush1.msra.mxu0 0.0
        %2807 = vmatprep.subr.mxu0 0.0
        %2808 = vmatpush1.msra.mxu0 0.0
        %2809 = vmatprep.mubr.f32.mxu0 0.0
        %v2810 = vand.u32 %v2614, 4294901760
        %2811 = vmatmul.mubr.f32.gmra.mrb[0].mxu0 %v2810
        %v2812 = vpop.f32.mrb[0].mxu0
        %v2813 = vadd.f32 %v2689, %v2812
        %v2814 = vpop.f32.mrb[0].mxu0
        %2815 = vdwg.mxu0
        %2816 = vmatprep.subr.mxu0 0.0
        %v2817 = vsub.f32 %v332, %v332
        %2818 = vmatpush1.msra.mxu0 %v2817
        %2819 = vmatprep.subr.mxu0 0.0
        %v2820 = vsub.f32 %v333, %v333
        %2821 = vmatpush1.msra.mxu0 %v2820
        %2822 = vmatprep.subr.mxu0 0.0
        %v2823 = vsub.f32 %v334, %v334
        %2824 = vmatpush1.msra.mxu0 %v2823
        %2825 = vmatprep.subr.mxu0 0.0
        %v2826 = vsub.f32 %v335, %v335
        %2827 = vmatpush1.msra.mxu0 %v2826
        %2828 = vmatprep.subr.mxu0 0.0
        %v2829 = vsub.f32 %v336, %v336
        %2830 = vmatpush1.msra.mxu0 %v2829
        %2831 = vmatprep.subr.mxu0 0.0
        %v2832 = vsub.f32 %v337, %v337
        %2833 = vmatpush1.msra.mxu0 %v2832
        %2834 = vmatprep.subr.mxu0 0.0
        %v2835 = vsub.f32 %v338, %v338
        %2836 = vmatpush1.msra.mxu0 %v2835
        %2837 = vmatprep.subr.mxu0 0.0
        %v2838 = vsub.f32 %v339, %v339
        %2839 = vmatpush1.msra.mxu0 %v2838
        %2840 = vmatprep.subr.mxu0 0.0
        %v2841 = vsub.f32 %v340, %v340
        %2842 = vmatpush1.msra.mxu0 %v2841
        %2843 = vmatprep.subr.mxu0 0.0
        %v2844 = vsub.f32 %v341, %v341
        %2845 = vmatpush1.msra.mxu0 %v2844
        %2846 = vmatprep.subr.mxu0 0.0
        %v2847 = vsub.f32 %v342, %v342
        %2848 = vmatpush1.msra.mxu0 %v2847
        %2849 = vmatprep.subr.mxu0 0.0
        %v2850 = vsub.f32 %v343, %v343
        %2851 = vmatpush1.msra.mxu0 %v2850
        %2852 = vmatprep.subr.mxu0 0.0
        %v2853 = vand.u32 %v356, 4294901760
        %v2854 = vsub.f32 %v356, %v2853
        %2855 = vmatpush1.msra.mxu0 %v2854
        %2856 = vmatprep.subr.mxu0 0.0
        %2857 = vmatpush1.msra.mxu0 0.0
        %2858 = vmatprep.subr.mxu0 0.0
        %2859 = vmatpush1.msra.mxu0 0.0
        %2860 = vmatprep.subr.mxu0 0.0
        %2861 = vmatpush1.msra.mxu0 0.0
        %2862 = vmatprep.subr.mxu0 0.0
        %2863 = vmatpush1.msra.mxu0 0.0
        %2864 = vmatprep.subr.mxu0 0.0
        %2865 = vmatpush1.msra.mxu0 0.0
        %2866 = vmatprep.subr.mxu0 0.0
        %2867 = vmatpush1.msra.mxu0 0.0
        %2868 = vmatprep.subr.mxu0 0.0
        %2869 = vmatpush1.msra.mxu0 0.0
        %2870 = vmatprep.subr.mxu0 0.0
        %2871 = vmatpush1.msra.mxu0 0.0
        %2872 = vmatprep.subr.mxu0 0.0
        %2873 = vmatpush1.msra.mxu0 0.0
        %2874 = vmatprep.subr.mxu0 0.0
        %2875 = vmatpush1.msra.mxu0 0.0
        %2876 = vmatprep.subr.mxu0 0.0
        %2877 = vmatpush1.msra.mxu0 0.0
        %2878 = vmatprep.subr.mxu0 0.0
        %2879 = vmatpush1.msra.mxu0 0.0
        %2880 = vmatprep.subr.mxu0 0.0
        %2881 = vmatpush1.msra.mxu0 0.0
        %2882 = vmatprep.subr.mxu0 0.0
        %2883 = vmatpush1.msra.mxu0 0.0
        %2884 = vmatprep.subr.mxu0 0.0
        %2885 = vmatpush1.msra.mxu0 0.0
        %2886 = vmatprep.subr.mxu0 0.0
        %2887 = vmatpush1.msra.mxu0 0.0
        %2888 = vmatprep.subr.mxu0 0.0
        %2889 = vmatpush1.msra.mxu0 0.0
        %2890 = vmatprep.subr.mxu0 0.0
        %2891 = vmatpush1.msra.mxu0 0.0
        %2892 = vmatprep.subr.mxu0 0.0
        %2893 = vmatpush1.msra.mxu0 0.0
        %2894 = vmatprep.mubr.f32.mxu0 0.0
        %v2895 = vand.u32 %v2614, 4294901760
        %v2896 = vsub.f32 %v2614, %v2895
        %2897 = vmatmul.mubr.f32.gmra.mrb[0].mxu0 %v2896
        %v2898 = vpop.f32.mrb[0].mxu0
        %v2899 = vadd.f32 %v2813, %v2898
        %v2900 = vpop.f32.mrb[0].mxu0
        %2901 = vdwg.mxu0
        %2902 = vmatprep.subr.mxu0 0.0
        %2903 = vmatpush1.msra.mxu0 %v332
        %2904 = vmatprep.subr.mxu0 0.0
        %2905 = vmatpush1.msra.mxu0 %v333
        %2906 = vmatprep.subr.mxu0 0.0
        %2907 = vmatpush1.msra.mxu0 %v334
        %2908 = vmatprep.subr.mxu0 0.0
        %2909 = vmatpush1.msra.mxu0 %v335
        %2910 = vmatprep.subr.mxu0 0.0
        %2911 = vmatpush1.msra.mxu0 %v336
        %2912 = vmatprep.subr.mxu0 0.0
        %2913 = vmatpush1.msra.mxu0 %v337
        %2914 = vmatprep.subr.mxu0 0.0
        %2915 = vmatpush1.msra.mxu0 %v338
        %2916 = vmatprep.subr.mxu0 0.0
        %2917 = vmatpush1.msra.mxu0 %v339
        %2918 = vmatprep.subr.mxu0 0.0
        %2919 = vmatpush1.msra.mxu0 %v340
        %2920 = vmatprep.subr.mxu0 0.0
        %2921 = vmatpush1.msra.mxu0 %v341
        %2922 = vmatprep.subr.mxu0 0.0
        %2923 = vmatpush1.msra.mxu0 %v342
        %2924 = vmatprep.subr.mxu0 0.0
        %2925 = vmatpush1.msra.mxu0 %v343
        %2926 = vmatprep.subr.mxu0 0.0
        %v2927 = vand.u32 %v356, 4294901760
        %2928 = vmatpush1.msra.mxu0 %v2927
        %2929 = vmatprep.subr.mxu0 0.0
        %2930 = vmatpush1.msra.mxu0 0.0
        %2931 = vmatprep.subr.mxu0 0.0
        %2932 = vmatpush1.msra.mxu0 0.0
        %2933 = vmatprep.subr.mxu0 0.0
        %2934 = vmatpush1.msra.mxu0 0.0
        %2935 = vmatprep.subr.mxu0 0.0
        %2936 = vmatpush1.msra.mxu0 0.0
        %2937 = vmatprep.subr.mxu0 0.0
        %2938 = vmatpush1.msra.mxu0 0.0
        %2939 = vmatprep.subr.mxu0 0.0
        %2940 = vmatpush1.msra.mxu0 0.0
        %2941 = vmatprep.subr.mxu0 0.0
        %2942 = vmatpush1.msra.mxu0 0.0
        %2943 = vmatprep.subr.mxu0 0.0
        %2944 = vmatpush1.msra.mxu0 0.0
        %2945 = vmatprep.subr.mxu0 0.0
        %2946 = vmatpush1.msra.mxu0 0.0
        %2947 = vmatprep.subr.mxu0 0.0
        %2948 = vmatpush1.msra.mxu0 0.0
        %2949 = vmatprep.subr.mxu0 0.0
        %2950 = vmatpush1.msra.mxu0 0.0
        %2951 = vmatprep.subr.mxu0 0.0
        %2952 = vmatpush1.msra.mxu0 0.0
        %2953 = vmatprep.subr.mxu0 0.0
        %2954 = vmatpush1.msra.mxu0 0.0
        %2955 = vmatprep.subr.mxu0 0.0
        %2956 = vmatpush1.msra.mxu0 0.0
        %2957 = vmatprep.subr.mxu0 0.0
        %2958 = vmatpush1.msra.mxu0 0.0
        %2959 = vmatprep.subr.mxu0 0.0
        %2960 = vmatpush1.msra.mxu0 0.0
        %2961 = vmatprep.subr.mxu0 0.0
        %2962 = vmatpush1.msra.mxu0 0.0
        %2963 = vmatprep.subr.mxu0 0.0
        %2964 = vmatpush1.msra.mxu0 0.0
        %2965 = vmatprep.subr.mxu0 0.0
        %2966 = vmatpush1.msra.mxu0 0.0
        %2967 = vmatprep.mubr.f32.mxu0 0.0
        %v2968 = vand.u32 %v2614, 4294901760
        %v2969 = vsub.f32 %v2614, %v2968
        %v2970 = vand.u32 %v2969, 4294901760
        %2971 = vmatmul.mubr.f32.gmra.mrb[0].mxu0 %v2970
        %v2972 = vpop.f32.mrb[0].mxu0
        %v2973 = vadd.f32 %v2899, %v2972
        %v2974 = vpop.f32.mrb[0].mxu0
        %2975 = vdwg.mxu0
        %2976 = vmatprep.subr.mxu0 0.0
        %v2977 = vsub.f32 %v332, %v332
        %v2978 = vand.u32 %v2977, 4294901760
        %2979 = vmatpush1.msra.mxu0 %v2978
        %2980 = vmatprep.subr.mxu0 0.0
        %v2981 = vsub.f32 %v333, %v333
        %v2982 = vand.u32 %v2981, 4294901760
        %2983 = vmatpush1.msra.mxu0 %v2982
        %2984 = vmatprep.subr.mxu0 0.0
        %v2985 = vsub.f32 %v334, %v334
        %v2986 = vand.u32 %v2985, 4294901760
        %2987 = vmatpush1.msra.mxu0 %v2986
        %2988 = vmatprep.subr.mxu0 0.0
        %v2989 = vsub.f32 %v335, %v335
        %v2990 = vand.u32 %v2989, 4294901760
        %2991 = vmatpush1.msra.mxu0 %v2990
        %2992 = vmatprep.subr.mxu0 0.0
        %v2993 = vsub.f32 %v336, %v336
        %v2994 = vand.u32 %v2993, 4294901760
        %2995 = vmatpush1.msra.mxu0 %v2994
        %2996 = vmatprep.subr.mxu0 0.0
        %v2997 = vsub.f32 %v337, %v337
        %v2998 = vand.u32 %v2997, 4294901760
        %2999 = vmatpush1.msra.mxu0 %v2998
        %3000 = vmatprep.subr.mxu0 0.0
        %v3001 = vsub.f32 %v338, %v338
        %v3002 = vand.u32 %v3001, 4294901760
        %3003 = vmatpush1.msra.mxu0 %v3002
        %3004 = vmatprep.subr.mxu0 0.0
        %v3005 = vsub.f32 %v339, %v339
        %v3006 = vand.u32 %v3005, 4294901760
        %3007 = vmatpush1.msra.mxu0 %v3006
        %3008 = vmatprep.subr.mxu0 0.0
        %v3009 = vsub.f32 %v340, %v340
        %v3010 = vand.u32 %v3009, 4294901760
        %3011 = vmatpush1.msra.mxu0 %v3010
        %3012 = vmatprep.subr.mxu0 0.0
        %v3013 = vsub.f32 %v341, %v341
        %v3014 = vand.u32 %v3013, 4294901760
        %3015 = vmatpush1.msra.mxu0 %v3014
        %3016 = vmatprep.subr.mxu0 0.0
        %v3017 = vsub.f32 %v342, %v342
        %v3018 = vand.u32 %v3017, 4294901760
        %3019 = vmatpush1.msra.mxu0 %v3018
        %3020 = vmatprep.subr.mxu0 0.0
        %v3021 = vsub.f32 %v343, %v343
        %v3022 = vand.u32 %v3021, 4294901760
        %3023 = vmatpush1.msra.mxu0 %v3022
        %3024 = vmatprep.subr.mxu0 0.0
        %v3025 = vand.u32 %v356, 4294901760
        %v3026 = vsub.f32 %v356, %v3025
        %v3027 = vand.u32 %v3026, 4294901760
        %3028 = vmatpush1.msra.mxu0 %v3027
        %3029 = vmatprep.subr.mxu0 0.0
        %3030 = vmatpush1.msra.mxu0 0.0
        %3031 = vmatprep.subr.mxu0 0.0
        %3032 = vmatpush1.msra.mxu0 0.0
        %3033 = vmatprep.subr.mxu0 0.0
        %3034 = vmatpush1.msra.mxu0 0.0
        %3035 = vmatprep.subr.mxu0 0.0
        %3036 = vmatpush1.msra.mxu0 0.0
        %3037 = vmatprep.subr.mxu0 0.0
        %3038 = vmatpush1.msra.mxu0 0.0
        %3039 = vmatprep.subr.mxu0 0.0
        %3040 = vmatpush1.msra.mxu0 0.0
        %3041 = vmatprep.subr.mxu0 0.0
        %3042 = vmatpush1.msra.mxu0 0.0
        %3043 = vmatprep.subr.mxu0 0.0
        %3044 = vmatpush1.msra.mxu0 0.0
        %3045 = vmatprep.subr.mxu0 0.0
        %3046 = vmatpush1.msra.mxu0 0.0
        %3047 = vmatprep.subr.mxu0 0.0
        %3048 = vmatpush1.msra.mxu0 0.0
        %3049 = vmatprep.subr.mxu0 0.0
        %3050 = vmatpush1.msra.mxu0 0.0
        %3051 = vmatprep.subr.mxu0 0.0
        %3052 = vmatpush1.msra.mxu0 0.0
        %3053 = vmatprep.subr.mxu0 0.0
        %3054 = vmatpush1.msra.mxu0 0.0
        %3055 = vmatprep.subr.mxu0 0.0
        %3056 = vmatpush1.msra.mxu0 0.0
        %3057 = vmatprep.subr.mxu0 0.0
        %3058 = vmatpush1.msra.mxu0 0.0
        %3059 = vmatprep.subr.mxu0 0.0
        %3060 = vmatpush1.msra.mxu0 0.0
        %3061 = vmatprep.subr.mxu0 0.0
        %3062 = vmatpush1.msra.mxu0 0.0
        %3063 = vmatprep.subr.mxu0 0.0
        %3064 = vmatpush1.msra.mxu0 0.0
        %3065 = vmatprep.subr.mxu0 0.0
        %3066 = vmatpush1.msra.mxu0 0.0
        %3067 = vmatprep.mubr.f32.mxu0 0.0
        %v3068 = vand.u32 %v2614, 4294901760
        %3069 = vmatmul.mubr.f32.gmra.mrb[0].mxu0 %v3068
        %v3070 = vpop.f32.mrb[0].mxu0
        %v3071 = vadd.f32 %v2973, %v3070
        %v3072 = vpop.f32.mrb[0].mxu0
        %3073 = vdwg.mxu0
        %3074 = vmatprep.subr.mxu0 0.0
        %3075 = vmatpush1.msra.mxu0 %v332
        %3076 = vmatprep.subr.mxu0 0.0
        %3077 = vmatpush1.msra.mxu0 %v333
        %3078 = vmatprep.subr.mxu0 0.0
        %3079 = vmatpush1.msra.mxu0 %v334
        %3080 = vmatprep.subr.mxu0 0.0
        %3081 = vmatpush1.msra.mxu0 %v335
        %3082 = vmatprep.subr.mxu0 0.0
        %3083 = vmatpush1.msra.mxu0 %v336
        %3084 = vmatprep.subr.mxu0 0.0
        %3085 = vmatpush1.msra.mxu0 %v337
        %3086 = vmatprep.subr.mxu0 0.0
        %3087 = vmatpush1.msra.mxu0 %v338
        %3088 = vmatprep.subr.mxu0 0.0
        %3089 = vmatpush1.msra.mxu0 %v339
        %3090 = vmatprep.subr.mxu0 0.0
        %3091 = vmatpush1.msra.mxu0 %v340
        %3092 = vmatprep.subr.mxu0 0.0
        %3093 = vmatpush1.msra.mxu0 %v341
        %3094 = vmatprep.subr.mxu0 0.0
        %3095 = vmatpush1.msra.mxu0 %v342
        %3096 = vmatprep.subr.mxu0 0.0
        %3097 = vmatpush1.msra.mxu0 %v343
        %3098 = vmatprep.subr.mxu0 0.0
        %v3099 = vand.u32 %v356, 4294901760
        %3100 = vmatpush1.msra.mxu0 %v3099
        %3101 = vmatprep.subr.mxu0 0.0
        %3102 = vmatpush1.msra.mxu0 0.0
        %3103 = vmatprep.subr.mxu0 0.0
        %3104 = vmatpush1.msra.mxu0 0.0
        %3105 = vmatprep.subr.mxu0 0.0
        %3106 = vmatpush1.msra.mxu0 0.0
        %3107 = vmatprep.subr.mxu0 0.0
        %3108 = vmatpush1.msra.mxu0 0.0
        %3109 = vmatprep.subr.mxu0 0.0
        %3110 = vmatpush1.msra.mxu0 0.0
        %3111 = vmatprep.subr.mxu0 0.0
        %3112 = vmatpush1.msra.mxu0 0.0
        %3113 = vmatprep.subr.mxu0 0.0
        %3114 = vmatpush1.msra.mxu0 0.0
        %3115 = vmatprep.subr.mxu0 0.0
        %3116 = vmatpush1.msra.mxu0 0.0
        %3117 = vmatprep.subr.mxu0 0.0
        %3118 = vmatpush1.msra.mxu0 0.0
        %3119 = vmatprep.subr.mxu0 0.0
        %3120 = vmatpush1.msra.mxu0 0.0
        %3121 = vmatprep.subr.mxu0 0.0
        %3122 = vmatpush1.msra.mxu0 0.0
        %3123 = vmatprep.subr.mxu0 0.0
        %3124 = vmatpush1.msra.mxu0 0.0
        %3125 = vmatprep.subr.mxu0 0.0
        %3126 = vmatpush1.msra.mxu0 0.0
        %3127 = vmatprep.subr.mxu0 0.0
        %3128 = vmatpush1.msra.mxu0 0.0
        %3129 = vmatprep.subr.mxu0 0.0
        %3130 = vmatpush1.msra.mxu0 0.0
        %3131 = vmatprep.subr.mxu0 0.0
        %3132 = vmatpush1.msra.mxu0 0.0
        %3133 = vmatprep.subr.mxu0 0.0
        %3134 = vmatpush1.msra.mxu0 0.0
        %3135 = vmatprep.subr.mxu0 0.0
        %3136 = vmatpush1.msra.mxu0 0.0
        %3137 = vmatprep.subr.mxu0 0.0
        %3138 = vmatpush1.msra.mxu0 0.0
        %3139 = vmatprep.mubr.f32.mxu0 0.0
        %v3140 = vand.u32 %v2614, 4294901760
        %3141 = vmatmul.mubr.f32.gmra.mrb[0].mxu0 %v3140
        %v3142 = vpop.f32.mrb[0].mxu0
        %v3143 = vadd.f32 %v3071, %v3142
        %v3144 = vpop.f32.mrb[0].mxu0
        %3145 = vdwg.mxu0
        %v3146 = vmax.f32 %v3143, 0.0
        %v3148 = vrot.slane %v3143, 1
        %v3151 = vmul.f32 %v2611, %v3143
        %v3152 = vmul.f32 %v2612, %v3148
        %v3155 = vrot.slane %v3152, 7
        %v3156 = vsel %vm898, %v3155, %v3151
        %v3158 = vsub.f32 %v3146, %v3156
        %v3159 = vand.u32 2147483647, %v3143
        %v3160 = vsub.f32 0.0, %v3159
        %v3161 = vmul.f32 %v3160, 1.442695
        %v3162 = vpow.pop %v3161
        %v3163 = vadd.f32 %v3162, 1.0
        %v3164 = vlog2.pop %v3163
        %v3165 = vmul.f32 %v3164, 0.6931472
        %v3166 = vadd.f32 %v3158, %v3165
        %v3167 = vsel %vm910, %v3166, 0.0
        %3168 = vadd.xlane.f32.xlu0 %v3167
        %v3169 = vpop.xlane.xlu0 %3168
        %v3170 = vadd.f32 %v2606, %v3169
        %s3171 = scalar_lea.vmem %s208, 10 [#allocation2]
        %v3172 = vld [vmem:[%s3171] sm:$0x3]
        %v3173 = vld [vmem:[%s217 + $0x5] sm:$0x1]
        %v3174 = vld [vmem:[%s217 + $0xd] sm:$0x1]
        %v3175 = vcvt.s32.f32 %v3173
        %v3176 = vcvt.s32.f32 %v3174
        %v3178 = vsel %vm350, %v3172, 0
        %3180 = vmatprep.subr.mxu0 0.0
        %3181 = vmatpush1.msra.mxu0 %v332
        %3182 = vmatprep.subr.mxu0 0.0
        %3183 = vmatpush1.msra.mxu0 %v333
        %3184 = vmatprep.subr.mxu0 0.0
        %3185 = vmatpush1.msra.mxu0 %v334
        %3186 = vmatprep.subr.mxu0 0.0
        %3187 = vmatpush1.msra.mxu0 %v335
        %3188 = vmatprep.subr.mxu0 0.0
        %3189 = vmatpush1.msra.mxu0 %v336
        %3190 = vmatprep.subr.mxu0 0.0
        %3191 = vmatpush1.msra.mxu0 %v337
        %3192 = vmatprep.subr.mxu0 0.0
        %3193 = vmatpush1.msra.mxu0 %v338
        %3194 = vmatprep.subr.mxu0 0.0
        %3195 = vmatpush1.msra.mxu0 %v339
        %3196 = vmatprep.subr.mxu0 0.0
        %3197 = vmatpush1.msra.mxu0 %v340
        %3198 = vmatprep.subr.mxu0 0.0
        %3199 = vmatpush1.msra.mxu0 %v341
        %3200 = vmatprep.subr.mxu0 0.0
        %3201 = vmatpush1.msra.mxu0 %v342
        %3202 = vmatprep.subr.mxu0 0.0
        %3203 = vmatpush1.msra.mxu0 %v343
        %3204 = vmatprep.subr.mxu0 0.0
        %v3205 = vand.u32 %v356, 4294901760
        %3206 = vmatpush1.msra.mxu0 %v3205
        %3207 = vmatprep.subr.mxu0 0.0
        %3208 = vmatpush1.msra.mxu0 0.0
        %3209 = vmatprep.subr.mxu0 0.0
        %3210 = vmatpush1.msra.mxu0 0.0
        %3211 = vmatprep.subr.mxu0 0.0
        %3212 = vmatpush1.msra.mxu0 0.0
        %3213 = vmatprep.subr.mxu0 0.0
        %3214 = vmatpush1.msra.mxu0 0.0
        %3215 = vmatprep.subr.mxu0 0.0
        %3216 = vmatpush1.msra.mxu0 0.0
        %3217 = vmatprep.subr.mxu0 0.0
        %3218 = vmatpush1.msra.mxu0 0.0
        %3219 = vmatprep.subr.mxu0 0.0
        %3220 = vmatpush1.msra.mxu0 0.0
        %3221 = vmatprep.subr.mxu0 0.0
        %3222 = vmatpush1.msra.mxu0 0.0
        %3223 = vmatprep.subr.mxu0 0.0
        %3224 = vmatpush1.msra.mxu0 0.0
        %3225 = vmatprep.subr.mxu0 0.0
        %3226 = vmatpush1.msra.mxu0 0.0
        %3227 = vmatprep.subr.mxu0 0.0
        %3228 = vmatpush1.msra.mxu0 0.0
        %3229 = vmatprep.subr.mxu0 0.0
        %3230 = vmatpush1.msra.mxu0 0.0
        %3231 = vmatprep.subr.mxu0 0.0
        %3232 = vmatpush1.msra.mxu0 0.0
        %3233 = vmatprep.subr.mxu0 0.0
        %3234 = vmatpush1.msra.mxu0 0.0
        %3235 = vmatprep.subr.mxu0 0.0
        %3236 = vmatpush1.msra.mxu0 0.0
        %3237 = vmatprep.subr.mxu0 0.0
        %3238 = vmatpush1.msra.mxu0 0.0
        %3239 = vmatprep.subr.mxu0 0.0
        %3240 = vmatpush1.msra.mxu0 0.0
        %3241 = vmatprep.subr.mxu0 0.0
        %3242 = vmatpush1.msra.mxu0 0.0
        %3243 = vmatprep.subr.mxu0 0.0
        %3244 = vmatpush1.msra.mxu0 0.0
        %3245 = vmatprep.mubr.f32.mxu0 0.0
        %v3246 = vand.u32 %v3178, 4294901760
        %v3247 = vsub.f32 %v3178, %v3246
        %v3248 = vand.u32 %v3247, 4294901760
        %v3249 = vsub.f32 %v3247, %v3248
        %v3250 = vand.u32 %v3249, 4294901760
        %3251 = vmatmul.mubr.f32.gmra.mrb[0].mxu0 %v3250
        %v3252 = vpop.f32.mrb[0].mxu0
        %v3253 = vadd.f32 0.0, %v3252
        %v3254 = vpop.f32.mrb[0].mxu0
        %3255 = vdwg.mxu0
        %3256 = vmatprep.subr.mxu0 0.0
        %v3257 = vsub.f32 %v332, %v332
        %v3258 = vand.u32 %v3257, 4294901760
        %v3259 = vsub.f32 %v3257, %v3258
        %v3260 = vand.u32 %v3259, 4294901760
        %3261 = vmatpush1.msra.mxu0 %v3260
        %3262 = vmatprep.subr.mxu0 0.0
        %v3263 = vsub.f32 %v333, %v333
        %v3264 = vand.u32 %v3263, 4294901760
        %v3265 = vsub.f32 %v3263, %v3264
        %v3266 = vand.u32 %v3265, 4294901760
        %3267 = vmatpush1.msra.mxu0 %v3266
        %3268 = vmatprep.subr.mxu0 0.0
        %v3269 = vsub.f32 %v334, %v334
        %v3270 = vand.u32 %v3269, 4294901760
        %v3271 = vsub.f32 %v3269, %v3270
        %v3272 = vand.u32 %v3271, 4294901760
        %3273 = vmatpush1.msra.mxu0 %v3272
        %3274 = vmatprep.subr.mxu0 0.0
        %v3275 = vsub.f32 %v335, %v335
        %v3276 = vand.u32 %v3275, 4294901760
        %v3277 = vsub.f32 %v3275, %v3276
        %v3278 = vand.u32 %v3277, 4294901760
        %3279 = vmatpush1.msra.mxu0 %v3278
        %3280 = vmatprep.subr.mxu0 0.0
        %v3281 = vsub.f32 %v336, %v336
        %v3282 = vand.u32 %v3281, 4294901760
        %v3283 = vsub.f32 %v3281, %v3282
        %v3284 = vand.u32 %v3283, 4294901760
        %3285 = vmatpush1.msra.mxu0 %v3284
        %3286 = vmatprep.subr.mxu0 0.0
        %v3287 = vsub.f32 %v337, %v337
        %v3288 = vand.u32 %v3287, 4294901760
        %v3289 = vsub.f32 %v3287, %v3288
        %v3290 = vand.u32 %v3289, 4294901760
        %3291 = vmatpush1.msra.mxu0 %v3290
        %3292 = vmatprep.subr.mxu0 0.0
        %v3293 = vsub.f32 %v338, %v338
        %v3294 = vand.u32 %v3293, 4294901760
        %v3295 = vsub.f32 %v3293, %v3294
        %v3296 = vand.u32 %v3295, 4294901760
        %3297 = vmatpush1.msra.mxu0 %v3296
        %3298 = vmatprep.subr.mxu0 0.0
        %v3299 = vsub.f32 %v339, %v339
        %v3300 = vand.u32 %v3299, 4294901760
        %v3301 = vsub.f32 %v3299, %v3300
        %v3302 = vand.u32 %v3301, 4294901760
        %3303 = vmatpush1.msra.mxu0 %v3302
        %3304 = vmatprep.subr.mxu0 0.0
        %v3305 = vsub.f32 %v340, %v340
        %v3306 = vand.u32 %v3305, 4294901760
        %v3307 = vsub.f32 %v3305, %v3306
        %v3308 = vand.u32 %v3307, 4294901760
        %3309 = vmatpush1.msra.mxu0 %v3308
        %3310 = vmatprep.subr.mxu0 0.0
        %v3311 = vsub.f32 %v341, %v341
        %v3312 = vand.u32 %v3311, 4294901760
        %v3313 = vsub.f32 %v3311, %v3312
        %v3314 = vand.u32 %v3313, 4294901760
        %3315 = vmatpush1.msra.mxu0 %v3314
        %3316 = vmatprep.subr.mxu0 0.0
        %v3317 = vsub.f32 %v342, %v342
        %v3318 = vand.u32 %v3317, 4294901760
        %v3319 = vsub.f32 %v3317, %v3318
        %v3320 = vand.u32 %v3319, 4294901760
        %3321 = vmatpush1.msra.mxu0 %v3320
        %3322 = vmatprep.subr.mxu0 0.0
        %v3323 = vsub.f32 %v343, %v343
        %v3324 = vand.u32 %v3323, 4294901760
        %v3325 = vsub.f32 %v3323, %v3324
        %v3326 = vand.u32 %v3325, 4294901760
        %3327 = vmatpush1.msra.mxu0 %v3326
        %3328 = vmatprep.subr.mxu0 0.0
        %v3329 = vand.u32 %v356, 4294901760
        %v3330 = vsub.f32 %v356, %v3329
        %v3331 = vand.u32 %v3330, 4294901760
        %v3332 = vsub.f32 %v3330, %v3331
        %v3333 = vand.u32 %v3332, 4294901760
        %3334 = vmatpush1.msra.mxu0 %v3333
        %3335 = vmatprep.subr.mxu0 0.0
        %3336 = vmatpush1.msra.mxu0 0.0
        %3337 = vmatprep.subr.mxu0 0.0
        %3338 = vmatpush1.msra.mxu0 0.0
        %3339 = vmatprep.subr.mxu0 0.0
        %3340 = vmatpush1.msra.mxu0 0.0
        %3341 = vmatprep.subr.mxu0 0.0
        %3342 = vmatpush1.msra.mxu0 0.0
        %3343 = vmatprep.subr.mxu0 0.0
        %3344 = vmatpush1.msra.mxu0 0.0
        %3345 = vmatprep.subr.mxu0 0.0
        %3346 = vmatpush1.msra.mxu0 0.0
        %3347 = vmatprep.subr.mxu0 0.0
        %3348 = vmatpush1.msra.mxu0 0.0
        %3349 = vmatprep.subr.mxu0 0.0
        %3350 = vmatpush1.msra.mxu0 0.0
        %3351 = vmatprep.subr.mxu0 0.0
        %3352 = vmatpush1.msra.mxu0 0.0
        %3353 = vmatprep.subr.mxu0 0.0
        %3354 = vmatpush1.msra.mxu0 0.0
        %3355 = vmatprep.subr.mxu0 0.0
        %3356 = vmatpush1.msra.mxu0 0.0
        %3357 = vmatprep.subr.mxu0 0.0
        %3358 = vmatpush1.msra.mxu0 0.0
        %3359 = vmatprep.subr.mxu0 0.0
        %3360 = vmatpush1.msra.mxu0 0.0
        %3361 = vmatprep.subr.mxu0 0.0
        %3362 = vmatpush1.msra.mxu0 0.0
        %3363 = vmatprep.subr.mxu0 0.0
        %3364 = vmatpush1.msra.mxu0 0.0
        %3365 = vmatprep.subr.mxu0 0.0
        %3366 = vmatpush1.msra.mxu0 0.0
        %3367 = vmatprep.subr.mxu0 0.0
        %3368 = vmatpush1.msra.mxu0 0.0
        %3369 = vmatprep.subr.mxu0 0.0
        %3370 = vmatpush1.msra.mxu0 0.0
        %3371 = vmatprep.subr.mxu0 0.0
        %3372 = vmatpush1.msra.mxu0 0.0
        %3373 = vmatprep.mubr.f32.mxu0 0.0
        %v3374 = vand.u32 %v3178, 4294901760
        %3375 = vmatmul.mubr.f32.gmra.mrb[0].mxu0 %v3374
        %v3376 = vpop.f32.mrb[0].mxu0
        %v3377 = vadd.f32 %v3253, %v3376
        %v3378 = vpop.f32.mrb[0].mxu0
        %3379 = vdwg.mxu0
        %3380 = vmatprep.subr.mxu0 0.0
        %v3381 = vsub.f32 %v332, %v332
        %3382 = vmatpush1.msra.mxu0 %v3381
        %3383 = vmatprep.subr.mxu0 0.0
        %v3384 = vsub.f32 %v333, %v333
        %3385 = vmatpush1.msra.mxu0 %v3384
        %3386 = vmatprep.subr.mxu0 0.0
        %v3387 = vsub.f32 %v334, %v334
        %3388 = vmatpush1.msra.mxu0 %v3387
        %3389 = vmatprep.subr.mxu0 0.0
        %v3390 = vsub.f32 %v335, %v335
        %3391 = vmatpush1.msra.mxu0 %v3390
        %3392 = vmatprep.subr.mxu0 0.0
        %v3393 = vsub.f32 %v336, %v336
        %3394 = vmatpush1.msra.mxu0 %v3393
        %3395 = vmatprep.subr.mxu0 0.0
        %v3396 = vsub.f32 %v337, %v337
        %3397 = vmatpush1.msra.mxu0 %v3396
        %3398 = vmatprep.subr.mxu0 0.0
        %v3399 = vsub.f32 %v338, %v338
        %3400 = vmatpush1.msra.mxu0 %v3399
        %3401 = vmatprep.subr.mxu0 0.0
        %v3402 = vsub.f32 %v339, %v339
        %3403 = vmatpush1.msra.mxu0 %v3402
        %3404 = vmatprep.subr.mxu0 0.0
        %v3405 = vsub.f32 %v340, %v340
        %3406 = vmatpush1.msra.mxu0 %v3405
        %3407 = vmatprep.subr.mxu0 0.0
        %v3408 = vsub.f32 %v341, %v341
        %3409 = vmatpush1.msra.mxu0 %v3408
        %3410 = vmatprep.subr.mxu0 0.0
        %v3411 = vsub.f32 %v342, %v342
        %3412 = vmatpush1.msra.mxu0 %v3411
        %3413 = vmatprep.subr.mxu0 0.0
        %v3414 = vsub.f32 %v343, %v343
        %3415 = vmatpush1.msra.mxu0 %v3414
        %3416 = vmatprep.subr.mxu0 0.0
        %v3417 = vand.u32 %v356, 4294901760
        %v3418 = vsub.f32 %v356, %v3417
        %3419 = vmatpush1.msra.mxu0 %v3418
        %3420 = vmatprep.subr.mxu0 0.0
        %3421 = vmatpush1.msra.mxu0 0.0
        %3422 = vmatprep.subr.mxu0 0.0
        %3423 = vmatpush1.msra.mxu0 0.0
        %3424 = vmatprep.subr.mxu0 0.0
        %3425 = vmatpush1.msra.mxu0 0.0
        %3426 = vmatprep.subr.mxu0 0.0
        %3427 = vmatpush1.msra.mxu0 0.0
        %3428 = vmatprep.subr.mxu0 0.0
        %3429 = vmatpush1.msra.mxu0 0.0
        %3430 = vmatprep.subr.mxu0 0.0
        %3431 = vmatpush1.msra.mxu0 0.0
        %3432 = vmatprep.subr.mxu0 0.0
        %3433 = vmatpush1.msra.mxu0 0.0
        %3434 = vmatprep.subr.mxu0 0.0
        %3435 = vmatpush1.msra.mxu0 0.0
        %3436 = vmatprep.subr.mxu0 0.0
        %3437 = vmatpush1.msra.mxu0 0.0
        %3438 = vmatprep.subr.mxu0 0.0
        %3439 = vmatpush1.msra.mxu0 0.0
        %3440 = vmatprep.subr.mxu0 0.0
        %3441 = vmatpush1.msra.mxu0 0.0
        %3442 = vmatprep.subr.mxu0 0.0
        %3443 = vmatpush1.msra.mxu0 0.0
        %3444 = vmatprep.subr.mxu0 0.0
        %3445 = vmatpush1.msra.mxu0 0.0
        %3446 = vmatprep.subr.mxu0 0.0
        %3447 = vmatpush1.msra.mxu0 0.0
        %3448 = vmatprep.subr.mxu0 0.0
        %3449 = vmatpush1.msra.mxu0 0.0
        %3450 = vmatprep.subr.mxu0 0.0
        %3451 = vmatpush1.msra.mxu0 0.0
        %3452 = vmatprep.subr.mxu0 0.0
        %3453 = vmatpush1.msra.mxu0 0.0
        %3454 = vmatprep.subr.mxu0 0.0
        %3455 = vmatpush1.msra.mxu0 0.0
        %3456 = vmatprep.subr.mxu0 0.0
        %3457 = vmatpush1.msra.mxu0 0.0
        %3458 = vmatprep.mubr.f32.mxu0 0.0
        %v3459 = vand.u32 %v3178, 4294901760
        %v3460 = vsub.f32 %v3178, %v3459
        %3461 = vmatmul.mubr.f32.gmra.mrb[0].mxu0 %v3460
        %v3462 = vpop.f32.mrb[0].mxu0
        %v3463 = vadd.f32 %v3377, %v3462
        %v3464 = vpop.f32.mrb[0].mxu0
        %3465 = vdwg.mxu0
        %3466 = vmatprep.subr.mxu0 0.0
        %3467 = vmatpush1.msra.mxu0 %v332
        %3468 = vmatprep.subr.mxu0 0.0
        %3469 = vmatpush1.msra.mxu0 %v333
        %3470 = vmatprep.subr.mxu0 0.0
        %3471 = vmatpush1.msra.mxu0 %v334
        %3472 = vmatprep.subr.mxu0 0.0
        %3473 = vmatpush1.msra.mxu0 %v335
        %3474 = vmatprep.subr.mxu0 0.0
        %3475 = vmatpush1.msra.mxu0 %v336
        %3476 = vmatprep.subr.mxu0 0.0
        %3477 = vmatpush1.msra.mxu0 %v337
        %3478 = vmatprep.subr.mxu0 0.0
        %3479 = vmatpush1.msra.mxu0 %v338
        %3480 = vmatprep.subr.mxu0 0.0
        %3481 = vmatpush1.msra.mxu0 %v339
        %3482 = vmatprep.subr.mxu0 0.0
        %3483 = vmatpush1.msra.mxu0 %v340
        %3484 = vmatprep.subr.mxu0 0.0
        %3485 = vmatpush1.msra.mxu0 %v341
        %3486 = vmatprep.subr.mxu0 0.0
        %3487 = vmatpush1.msra.mxu0 %v342
        %3488 = vmatprep.subr.mxu0 0.0
        %3489 = vmatpush1.msra.mxu0 %v343
        %3490 = vmatprep.subr.mxu0 0.0
        %v3491 = vand.u32 %v356, 4294901760
        %3492 = vmatpush1.msra.mxu0 %v3491
        %3493 = vmatprep.subr.mxu0 0.0
        %3494 = vmatpush1.msra.mxu0 0.0
        %3495 = vmatprep.subr.mxu0 0.0
        %3496 = vmatpush1.msra.mxu0 0.0
        %3497 = vmatprep.subr.mxu0 0.0
        %3498 = vmatpush1.msra.mxu0 0.0
        %3499 = vmatprep.subr.mxu0 0.0
        %3500 = vmatpush1.msra.mxu0 0.0
        %3501 = vmatprep.subr.mxu0 0.0
        %3502 = vmatpush1.msra.mxu0 0.0
        %3503 = vmatprep.subr.mxu0 0.0
        %3504 = vmatpush1.msra.mxu0 0.0
        %3505 = vmatprep.subr.mxu0 0.0
        %3506 = vmatpush1.msra.mxu0 0.0
        %3507 = vmatprep.subr.mxu0 0.0
        %3508 = vmatpush1.msra.mxu0 0.0
        %3509 = vmatprep.subr.mxu0 0.0
        %3510 = vmatpush1.msra.mxu0 0.0
        %3511 = vmatprep.subr.mxu0 0.0
        %3512 = vmatpush1.msra.mxu0 0.0
        %3513 = vmatprep.subr.mxu0 0.0
        %3514 = vmatpush1.msra.mxu0 0.0
        %3515 = vmatprep.subr.mxu0 0.0
        %3516 = vmatpush1.msra.mxu0 0.0
        %3517 = vmatprep.subr.mxu0 0.0
        %3518 = vmatpush1.msra.mxu0 0.0
        %3519 = vmatprep.subr.mxu0 0.0
        %3520 = vmatpush1.msra.mxu0 0.0
        %3521 = vmatprep.subr.mxu0 0.0
        %3522 = vmatpush1.msra.mxu0 0.0
        %3523 = vmatprep.subr.mxu0 0.0
        %3524 = vmatpush1.msra.mxu0 0.0
        %3525 = vmatprep.subr.mxu0 0.0
        %3526 = vmatpush1.msra.mxu0 0.0
        %3527 = vmatprep.subr.mxu0 0.0
        %3528 = vmatpush1.msra.mxu0 0.0
        %3529 = vmatprep.subr.mxu0 0.0
        %3530 = vmatpush1.msra.mxu0 0.0
        %3531 = vmatprep.mubr.f32.mxu0 0.0
        %v3532 = vand.u32 %v3178, 4294901760
        %v3533 = vsub.f32 %v3178, %v3532
        %v3534 = vand.u32 %v3533, 4294901760
        %3535 = vmatmul.mubr.f32.gmra.mrb[0].mxu0 %v3534
        %v3536 = vpop.f32.mrb[0].mxu0
        %v3537 = vadd.f32 %v3463, %v3536
        %v3538 = vpop.f32.mrb[0].mxu0
        %3539 = vdwg.mxu0
        %3540 = vmatprep.subr.mxu0 0.0
        %v3541 = vsub.f32 %v332, %v332
        %v3542 = vand.u32 %v3541, 4294901760
        %3543 = vmatpush1.msra.mxu0 %v3542
        %3544 = vmatprep.subr.mxu0 0.0
        %v3545 = vsub.f32 %v333, %v333
        %v3546 = vand.u32 %v3545, 4294901760
        %3547 = vmatpush1.msra.mxu0 %v3546
        %3548 = vmatprep.subr.mxu0 0.0
        %v3549 = vsub.f32 %v334, %v334
        %v3550 = vand.u32 %v3549, 4294901760
        %3551 = vmatpush1.msra.mxu0 %v3550
        %3552 = vmatprep.subr.mxu0 0.0
        %v3553 = vsub.f32 %v335, %v335
        %v3554 = vand.u32 %v3553, 4294901760
        %3555 = vmatpush1.msra.mxu0 %v3554
        %3556 = vmatprep.subr.mxu0 0.0
        %v3557 = vsub.f32 %v336, %v336
        %v3558 = vand.u32 %v3557, 4294901760
        %3559 = vmatpush1.msra.mxu0 %v3558
        %3560 = vmatprep.subr.mxu0 0.0
        %v3561 = vsub.f32 %v337, %v337
        %v3562 = vand.u32 %v3561, 4294901760
        %3563 = vmatpush1.msra.mxu0 %v3562
        %3564 = vmatprep.subr.mxu0 0.0
        %v3565 = vsub.f32 %v338, %v338
        %v3566 = vand.u32 %v3565, 4294901760
        %3567 = vmatpush1.msra.mxu0 %v3566
        %3568 = vmatprep.subr.mxu0 0.0
        %v3569 = vsub.f32 %v339, %v339
        %v3570 = vand.u32 %v3569, 4294901760
        %3571 = vmatpush1.msra.mxu0 %v3570
        %3572 = vmatprep.subr.mxu0 0.0
        %v3573 = vsub.f32 %v340, %v340
        %v3574 = vand.u32 %v3573, 4294901760
        %3575 = vmatpush1.msra.mxu0 %v3574
        %3576 = vmatprep.subr.mxu0 0.0
        %v3577 = vsub.f32 %v341, %v341
        %v3578 = vand.u32 %v3577, 4294901760
        %3579 = vmatpush1.msra.mxu0 %v3578
        %3580 = vmatprep.subr.mxu0 0.0
        %v3581 = vsub.f32 %v342, %v342
        %v3582 = vand.u32 %v3581, 4294901760
        %3583 = vmatpush1.msra.mxu0 %v3582
        %3584 = vmatprep.subr.mxu0 0.0
        %v3585 = vsub.f32 %v343, %v343
        %v3586 = vand.u32 %v3585, 4294901760
        %3587 = vmatpush1.msra.mxu0 %v3586
        %3588 = vmatprep.subr.mxu0 0.0
        %v3589 = vand.u32 %v356, 4294901760
        %v3590 = vsub.f32 %v356, %v3589
        %v3591 = vand.u32 %v3590, 4294901760
        %3592 = vmatpush1.msra.mxu0 %v3591
        %3593 = vmatprep.subr.mxu0 0.0
        %3594 = vmatpush1.msra.mxu0 0.0
        %3595 = vmatprep.subr.mxu0 0.0
        %3596 = vmatpush1.msra.mxu0 0.0
        %3597 = vmatprep.subr.mxu0 0.0
        %3598 = vmatpush1.msra.mxu0 0.0
        %3599 = vmatprep.subr.mxu0 0.0
        %3600 = vmatpush1.msra.mxu0 0.0
        %3601 = vmatprep.subr.mxu0 0.0
        %3602 = vmatpush1.msra.mxu0 0.0
        %3603 = vmatprep.subr.mxu0 0.0
        %3604 = vmatpush1.msra.mxu0 0.0
        %3605 = vmatprep.subr.mxu0 0.0
        %3606 = vmatpush1.msra.mxu0 0.0
        %3607 = vmatprep.subr.mxu0 0.0
        %3608 = vmatpush1.msra.mxu0 0.0
        %3609 = vmatprep.subr.mxu0 0.0
        %3610 = vmatpush1.msra.mxu0 0.0
        %3611 = vmatprep.subr.mxu0 0.0
        %3612 = vmatpush1.msra.mxu0 0.0
        %3613 = vmatprep.subr.mxu0 0.0
        %3614 = vmatpush1.msra.mxu0 0.0
        %3615 = vmatprep.subr.mxu0 0.0
        %3616 = vmatpush1.msra.mxu0 0.0
        %3617 = vmatprep.subr.mxu0 0.0
        %3618 = vmatpush1.msra.mxu0 0.0
        %3619 = vmatprep.subr.mxu0 0.0
        %3620 = vmatpush1.msra.mxu0 0.0
        %3621 = vmatprep.subr.mxu0 0.0
        %3622 = vmatpush1.msra.mxu0 0.0
        %3623 = vmatprep.subr.mxu0 0.0
        %3624 = vmatpush1.msra.mxu0 0.0
        %3625 = vmatprep.subr.mxu0 0.0
        %3626 = vmatpush1.msra.mxu0 0.0
        %3627 = vmatprep.subr.mxu0 0.0
        %3628 = vmatpush1.msra.mxu0 0.0
        %3629 = vmatprep.subr.mxu0 0.0
        %3630 = vmatpush1.msra.mxu0 0.0
        %3631 = vmatprep.mubr.f32.mxu0 0.0
        %v3632 = vand.u32 %v3178, 4294901760
        %3633 = vmatmul.mubr.f32.gmra.mrb[0].mxu0 %v3632
        %v3634 = vpop.f32.mrb[0].mxu0
        %v3635 = vadd.f32 %v3537, %v3634
        %v3636 = vpop.f32.mrb[0].mxu0
        %3637 = vdwg.mxu0
        %3638 = vmatprep.subr.mxu0 0.0
        %3639 = vmatpush1.msra.mxu0 %v332
        %3640 = vmatprep.subr.mxu0 0.0
        %3641 = vmatpush1.msra.mxu0 %v333
        %3642 = vmatprep.subr.mxu0 0.0
        %3643 = vmatpush1.msra.mxu0 %v334
        %3644 = vmatprep.subr.mxu0 0.0
        %3645 = vmatpush1.msra.mxu0 %v335
        %3646 = vmatprep.subr.mxu0 0.0
        %3647 = vmatpush1.msra.mxu0 %v336
        %3648 = vmatprep.subr.mxu0 0.0
        %3649 = vmatpush1.msra.mxu0 %v337
        %3650 = vmatprep.subr.mxu0 0.0
        %3651 = vmatpush1.msra.mxu0 %v338
        %3652 = vmatprep.subr.mxu0 0.0
        %3653 = vmatpush1.msra.mxu0 %v339
        %3654 = vmatprep.subr.mxu0 0.0
        %3655 = vmatpush1.msra.mxu0 %v340
        %3656 = vmatprep.subr.mxu0 0.0
        %3657 = vmatpush1.msra.mxu0 %v341
        %3658 = vmatprep.subr.mxu0 0.0
        %3659 = vmatpush1.msra.mxu0 %v342
        %3660 = vmatprep.subr.mxu0 0.0
        %3661 = vmatpush1.msra.mxu0 %v343
        %3662 = vmatprep.subr.mxu0 0.0
        %v3663 = vand.u32 %v356, 4294901760
        %3664 = vmatpush1.msra.mxu0 %v3663
        %3665 = vmatprep.subr.mxu0 0.0
        %3666 = vmatpush1.msra.mxu0 0.0
        %3667 = vmatprep.subr.mxu0 0.0
        %3668 = vmatpush1.msra.mxu0 0.0
        %3669 = vmatprep.subr.mxu0 0.0
        %3670 = vmatpush1.msra.mxu0 0.0
        %3671 = vmatprep.subr.mxu0 0.0
        %3672 = vmatpush1.msra.mxu0 0.0
        %3673 = vmatprep.subr.mxu0 0.0
        %3674 = vmatpush1.msra.mxu0 0.0
        %3675 = vmatprep.subr.mxu0 0.0
        %3676 = vmatpush1.msra.mxu0 0.0
        %3677 = vmatprep.subr.mxu0 0.0
        %3678 = vmatpush1.msra.mxu0 0.0
        %3679 = vmatprep.subr.mxu0 0.0
        %3680 = vmatpush1.msra.mxu0 0.0
        %3681 = vmatprep.subr.mxu0 0.0
        %3682 = vmatpush1.msra.mxu0 0.0
        %3683 = vmatprep.subr.mxu0 0.0
        %3684 = vmatpush1.msra.mxu0 0.0
        %3685 = vmatprep.subr.mxu0 0.0
        %3686 = vmatpush1.msra.mxu0 0.0
        %3687 = vmatprep.subr.mxu0 0.0
        %3688 = vmatpush1.msra.mxu0 0.0
        %3689 = vmatprep.subr.mxu0 0.0
        %3690 = vmatpush1.msra.mxu0 0.0
        %3691 = vmatprep.subr.mxu0 0.0
        %3692 = vmatpush1.msra.mxu0 0.0
        %3693 = vmatprep.subr.mxu0 0.0
        %3694 = vmatpush1.msra.mxu0 0.0
        %3695 = vmatprep.subr.mxu0 0.0
        %3696 = vmatpush1.msra.mxu0 0.0
        %3697 = vmatprep.subr.mxu0 0.0
        %3698 = vmatpush1.msra.mxu0 0.0
        %3699 = vmatprep.subr.mxu0 0.0
        %3700 = vmatpush1.msra.mxu0 0.0
        %3701 = vmatprep.subr.mxu0 0.0
        %3702 = vmatpush1.msra.mxu0 0.0
        %3703 = vmatprep.mubr.f32.mxu0 0.0
        %v3704 = vand.u32 %v3178, 4294901760
        %3705 = vmatmul.mubr.f32.gmra.mrb[0].mxu0 %v3704
        %v3706 = vpop.f32.mrb[0].mxu0
        %v3707 = vadd.f32 %v3635, %v3706
        %v3708 = vpop.f32.mrb[0].mxu0
        %3709 = vdwg.mxu0
        %v3710 = vmax.f32 %v3707, 0.0
        %v3712 = vrot.slane %v3707, 1
        %v3715 = vmul.f32 %v3175, %v3707
        %v3716 = vmul.f32 %v3176, %v3712
        %v3719 = vrot.slane %v3716, 7
        %v3720 = vsel %vm898, %v3719, %v3715
        %v3722 = vsub.f32 %v3710, %v3720
        %v3723 = vand.u32 2147483647, %v3707
        %v3724 = vsub.f32 0.0, %v3723
        %v3725 = vmul.f32 %v3724, 1.442695
        %v3726 = vpow.pop %v3725
        %v3727 = vadd.f32 %v3726, 1.0
        %v3728 = vlog2.pop %v3727
        %v3729 = vmul.f32 %v3728, 0.6931472
        %v3730 = vadd.f32 %v3722, %v3729
        %v3731 = vsel %vm910, %v3730, 0.0
        %3732 = vadd.xlane.f32.xlu0 %v3731
        %v3733 = vpop.xlane.xlu0 %3732
        %v3734 = vadd.f32 %v3170, %v3733
        %s3735 = scalar_lea.vmem %s208, 12 [#allocation2]
        %v3736 = vld [vmem:[%s3735] sm:$0x3]
        %v3737 = vld [vmem:[%s217 + $0x6] sm:$0x1]
        %v3738 = vld [vmem:[%s217 + $0xe] sm:$0x1]
        %v3739 = vcvt.s32.f32 %v3737
        %v3740 = vcvt.s32.f32 %v3738
        %v3742 = vsel %vm350, %v3736, 0
        %3744 = vmatprep.subr.mxu0 0.0
        %3745 = vmatpush1.msra.mxu0 %v332
        %3746 = vmatprep.subr.mxu0 0.0
        %3747 = vmatpush1.msra.mxu0 %v333
        %3748 = vmatprep.subr.mxu0 0.0
        %3749 = vmatpush1.msra.mxu0 %v334
        %3750 = vmatprep.subr.mxu0 0.0
        %3751 = vmatpush1.msra.mxu0 %v335
        %3752 = vmatprep.subr.mxu0 0.0
        %3753 = vmatpush1.msra.mxu0 %v336
        %3754 = vmatprep.subr.mxu0 0.0
        %3755 = vmatpush1.msra.mxu0 %v337
        %3756 = vmatprep.subr.mxu0 0.0
        %3757 = vmatpush1.msra.mxu0 %v338
        %3758 = vmatprep.subr.mxu0 0.0
        %3759 = vmatpush1.msra.mxu0 %v339
        %3760 = vmatprep.subr.mxu0 0.0
        %3761 = vmatpush1.msra.mxu0 %v340
        %3762 = vmatprep.subr.mxu0 0.0
        %3763 = vmatpush1.msra.mxu0 %v341
        %3764 = vmatprep.subr.mxu0 0.0
        %3765 = vmatpush1.msra.mxu0 %v342
        %3766 = vmatprep.subr.mxu0 0.0
        %3767 = vmatpush1.msra.mxu0 %v343
        %3768 = vmatprep.subr.mxu0 0.0
        %v3769 = vand.u32 %v356, 4294901760
        %3770 = vmatpush1.msra.mxu0 %v3769
        %3771 = vmatprep.subr.mxu0 0.0
        %3772 = vmatpush1.msra.mxu0 0.0
        %3773 = vmatprep.subr.mxu0 0.0
        %3774 = vmatpush1.msra.mxu0 0.0
        %3775 = vmatprep.subr.mxu0 0.0
        %3776 = vmatpush1.msra.mxu0 0.0
        %3777 = vmatprep.subr.mxu0 0.0
        %3778 = vmatpush1.msra.mxu0 0.0
        %3779 = vmatprep.subr.mxu0 0.0
        %3780 = vmatpush1.msra.mxu0 0.0
        %3781 = vmatprep.subr.mxu0 0.0
        %3782 = vmatpush1.msra.mxu0 0.0
        %3783 = vmatprep.subr.mxu0 0.0
        %3784 = vmatpush1.msra.mxu0 0.0
        %3785 = vmatprep.subr.mxu0 0.0
        %3786 = vmatpush1.msra.mxu0 0.0
        %3787 = vmatprep.subr.mxu0 0.0
        %3788 = vmatpush1.msra.mxu0 0.0
        %3789 = vmatprep.subr.mxu0 0.0
        %3790 = vmatpush1.msra.mxu0 0.0
        %3791 = vmatprep.subr.mxu0 0.0
        %3792 = vmatpush1.msra.mxu0 0.0
        %3793 = vmatprep.subr.mxu0 0.0
        %3794 = vmatpush1.msra.mxu0 0.0
        %3795 = vmatprep.subr.mxu0 0.0
        %3796 = vmatpush1.msra.mxu0 0.0
        %3797 = vmatprep.subr.mxu0 0.0
        %3798 = vmatpush1.msra.mxu0 0.0
        %3799 = vmatprep.subr.mxu0 0.0
        %3800 = vmatpush1.msra.mxu0 0.0
        %3801 = vmatprep.subr.mxu0 0.0
        %3802 = vmatpush1.msra.mxu0 0.0
        %3803 = vmatprep.subr.mxu0 0.0
        %3804 = vmatpush1.msra.mxu0 0.0
        %3805 = vmatprep.subr.mxu0 0.0
        %3806 = vmatpush1.msra.mxu0 0.0
        %3807 = vmatprep.subr.mxu0 0.0
        %3808 = vmatpush1.msra.mxu0 0.0
        %3809 = vmatprep.mubr.f32.mxu0 0.0
        %v3810 = vand.u32 %v3742, 4294901760
        %v3811 = vsub.f32 %v3742, %v3810
        %v3812 = vand.u32 %v3811, 4294901760
        %v3813 = vsub.f32 %v3811, %v3812
        %v3814 = vand.u32 %v3813, 4294901760
        %3815 = vmatmul.mubr.f32.gmra.mrb[0].mxu0 %v3814
        %v3816 = vpop.f32.mrb[0].mxu0
        %v3817 = vadd.f32 0.0, %v3816
        %v3818 = vpop.f32.mrb[0].mxu0
        %3819 = vdwg.mxu0
        %3820 = vmatprep.subr.mxu0 0.0
        %v3821 = vsub.f32 %v332, %v332
        %v3822 = vand.u32 %v3821, 4294901760
        %v3823 = vsub.f32 %v3821, %v3822
        %v3824 = vand.u32 %v3823, 4294901760
        %3825 = vmatpush1.msra.mxu0 %v3824
        %3826 = vmatprep.subr.mxu0 0.0
        %v3827 = vsub.f32 %v333, %v333
        %v3828 = vand.u32 %v3827, 4294901760
        %v3829 = vsub.f32 %v3827, %v3828
        %v3830 = vand.u32 %v3829, 4294901760
        %3831 = vmatpush1.msra.mxu0 %v3830
        %3832 = vmatprep.subr.mxu0 0.0
        %v3833 = vsub.f32 %v334, %v334
        %v3834 = vand.u32 %v3833, 4294901760
        %v3835 = vsub.f32 %v3833, %v3834
        %v3836 = vand.u32 %v3835, 4294901760
        %3837 = vmatpush1.msra.mxu0 %v3836
        %3838 = vmatprep.subr.mxu0 0.0
        %v3839 = vsub.f32 %v335, %v335
        %v3840 = vand.u32 %v3839, 4294901760
        %v3841 = vsub.f32 %v3839, %v3840
        %v3842 = vand.u32 %v3841, 4294901760
        %3843 = vmatpush1.msra.mxu0 %v3842
        %3844 = vmatprep.subr.mxu0 0.0
        %v3845 = vsub.f32 %v336, %v336
        %v3846 = vand.u32 %v3845, 4294901760
        %v3847 = vsub.f32 %v3845, %v3846
        %v3848 = vand.u32 %v3847, 4294901760
        %3849 = vmatpush1.msra.mxu0 %v3848
        %3850 = vmatprep.subr.mxu0 0.0
        %v3851 = vsub.f32 %v337, %v337
        %v3852 = vand.u32 %v3851, 4294901760
        %v3853 = vsub.f32 %v3851, %v3852
        %v3854 = vand.u32 %v3853, 4294901760
        %3855 = vmatpush1.msra.mxu0 %v3854
        %3856 = vmatprep.subr.mxu0 0.0
        %v3857 = vsub.f32 %v338, %v338
        %v3858 = vand.u32 %v3857, 4294901760
        %v3859 = vsub.f32 %v3857, %v3858
        %v3860 = vand.u32 %v3859, 4294901760
        %3861 = vmatpush1.msra.mxu0 %v3860
        %3862 = vmatprep.subr.mxu0 0.0
        %v3863 = vsub.f32 %v339, %v339
        %v3864 = vand.u32 %v3863, 4294901760
        %v3865 = vsub.f32 %v3863, %v3864
        %v3866 = vand.u32 %v3865, 4294901760
        %3867 = vmatpush1.msra.mxu0 %v3866
        %3868 = vmatprep.subr.mxu0 0.0
        %v3869 = vsub.f32 %v340, %v340
        %v3870 = vand.u32 %v3869, 4294901760
        %v3871 = vsub.f32 %v3869, %v3870
        %v3872 = vand.u32 %v3871, 4294901760
        %3873 = vmatpush1.msra.mxu0 %v3872
        %3874 = vmatprep.subr.mxu0 0.0
        %v3875 = vsub.f32 %v341, %v341
        %v3876 = vand.u32 %v3875, 4294901760
        %v3877 = vsub.f32 %v3875, %v3876
        %v3878 = vand.u32 %v3877, 4294901760
        %3879 = vmatpush1.msra.mxu0 %v3878
        %3880 = vmatprep.subr.mxu0 0.0
        %v3881 = vsub.f32 %v342, %v342
        %v3882 = vand.u32 %v3881, 4294901760
        %v3883 = vsub.f32 %v3881, %v3882
        %v3884 = vand.u32 %v3883, 4294901760
        %3885 = vmatpush1.msra.mxu0 %v3884
        %3886 = vmatprep.subr.mxu0 0.0
        %v3887 = vsub.f32 %v343, %v343
        %v3888 = vand.u32 %v3887, 4294901760
        %v3889 = vsub.f32 %v3887, %v3888
        %v3890 = vand.u32 %v3889, 4294901760
        %3891 = vmatpush1.msra.mxu0 %v3890
        %3892 = vmatprep.subr.mxu0 0.0
        %v3893 = vand.u32 %v356, 4294901760
        %v3894 = vsub.f32 %v356, %v3893
        %v3895 = vand.u32 %v3894, 4294901760
        %v3896 = vsub.f32 %v3894, %v3895
        %v3897 = vand.u32 %v3896, 4294901760
        %3898 = vmatpush1.msra.mxu0 %v3897
        %3899 = vmatprep.subr.mxu0 0.0
        %3900 = vmatpush1.msra.mxu0 0.0
        %3901 = vmatprep.subr.mxu0 0.0
        %3902 = vmatpush1.msra.mxu0 0.0
        %3903 = vmatprep.subr.mxu0 0.0
        %3904 = vmatpush1.msra.mxu0 0.0
        %3905 = vmatprep.subr.mxu0 0.0
        %3906 = vmatpush1.msra.mxu0 0.0
        %3907 = vmatprep.subr.mxu0 0.0
        %3908 = vmatpush1.msra.mxu0 0.0
        %3909 = vmatprep.subr.mxu0 0.0
        %3910 = vmatpush1.msra.mxu0 0.0
        %3911 = vmatprep.subr.mxu0 0.0
        %3912 = vmatpush1.msra.mxu0 0.0
        %3913 = vmatprep.subr.mxu0 0.0
        %3914 = vmatpush1.msra.mxu0 0.0
        %3915 = vmatprep.subr.mxu0 0.0
        %3916 = vmatpush1.msra.mxu0 0.0
        %3917 = vmatprep.subr.mxu0 0.0
        %3918 = vmatpush1.msra.mxu0 0.0
        %3919 = vmatprep.subr.mxu0 0.0
        %3920 = vmatpush1.msra.mxu0 0.0
        %3921 = vmatprep.subr.mxu0 0.0
        %3922 = vmatpush1.msra.mxu0 0.0
        %3923 = vmatprep.subr.mxu0 0.0
        %3924 = vmatpush1.msra.mxu0 0.0
        %3925 = vmatprep.subr.mxu0 0.0
        %3926 = vmatpush1.msra.mxu0 0.0
        %3927 = vmatprep.subr.mxu0 0.0
        %3928 = vmatpush1.msra.mxu0 0.0
        %3929 = vmatprep.subr.mxu0 0.0
        %3930 = vmatpush1.msra.mxu0 0.0
        %3931 = vmatprep.subr.mxu0 0.0
        %3932 = vmatpush1.msra.mxu0 0.0
        %3933 = vmatprep.subr.mxu0 0.0
        %3934 = vmatpush1.msra.mxu0 0.0
        %3935 = vmatprep.subr.mxu0 0.0
        %3936 = vmatpush1.msra.mxu0 0.0
        %3937 = vmatprep.mubr.f32.mxu0 0.0
        %v3938 = vand.u32 %v3742, 4294901760
        %3939 = vmatmul.mubr.f32.gmra.mrb[0].mxu0 %v3938
        %v3940 = vpop.f32.mrb[0].mxu0
        %v3941 = vadd.f32 %v3817, %v3940
        %v3942 = vpop.f32.mrb[0].mxu0
        %3943 = vdwg.mxu0
        %3944 = vmatprep.subr.mxu0 0.0
        %v3945 = vsub.f32 %v332, %v332
        %3946 = vmatpush1.msra.mxu0 %v3945
        %3947 = vmatprep.subr.mxu0 0.0
        %v3948 = vsub.f32 %v333, %v333
        %3949 = vmatpush1.msra.mxu0 %v3948
        %3950 = vmatprep.subr.mxu0 0.0
        %v3951 = vsub.f32 %v334, %v334
        %3952 = vmatpush1.msra.mxu0 %v3951
        %3953 = vmatprep.subr.mxu0 0.0
        %v3954 = vsub.f32 %v335, %v335
        %3955 = vmatpush1.msra.mxu0 %v3954
        %3956 = vmatprep.subr.mxu0 0.0
        %v3957 = vsub.f32 %v336, %v336
        %3958 = vmatpush1.msra.mxu0 %v3957
        %3959 = vmatprep.subr.mxu0 0.0
        %v3960 = vsub.f32 %v337, %v337
        %3961 = vmatpush1.msra.mxu0 %v3960
        %3962 = vmatprep.subr.mxu0 0.0
        %v3963 = vsub.f32 %v338, %v338
        %3964 = vmatpush1.msra.mxu0 %v3963
        %3965 = vmatprep.subr.mxu0 0.0
        %v3966 = vsub.f32 %v339, %v339
        %3967 = vmatpush1.msra.mxu0 %v3966
        %3968 = vmatprep.subr.mxu0 0.0
        %v3969 = vsub.f32 %v340, %v340
        %3970 = vmatpush1.msra.mxu0 %v3969
        %3971 = vmatprep.subr.mxu0 0.0
        %v3972 = vsub.f32 %v341, %v341
        %3973 = vmatpush1.msra.mxu0 %v3972
        %3974 = vmatprep.subr.mxu0 0.0
        %v3975 = vsub.f32 %v342, %v342
        %3976 = vmatpush1.msra.mxu0 %v3975
        %3977 = vmatprep.subr.mxu0 0.0
        %v3978 = vsub.f32 %v343, %v343
        %3979 = vmatpush1.msra.mxu0 %v3978
        %3980 = vmatprep.subr.mxu0 0.0
        %v3981 = vand.u32 %v356, 4294901760
        %v3982 = vsub.f32 %v356, %v3981
        %3983 = vmatpush1.msra.mxu0 %v3982
        %3984 = vmatprep.subr.mxu0 0.0
        %3985 = vmatpush1.msra.mxu0 0.0
        %3986 = vmatprep.subr.mxu0 0.0
        %3987 = vmatpush1.msra.mxu0 0.0
        %3988 = vmatprep.subr.mxu0 0.0
        %3989 = vmatpush1.msra.mxu0 0.0
        %3990 = vmatprep.subr.mxu0 0.0
        %3991 = vmatpush1.msra.mxu0 0.0
        %3992 = vmatprep.subr.mxu0 0.0
        %3993 = vmatpush1.msra.mxu0 0.0
        %3994 = vmatprep.subr.mxu0 0.0
        %3995 = vmatpush1.msra.mxu0 0.0
        %3996 = vmatprep.subr.mxu0 0.0
        %3997 = vmatpush1.msra.mxu0 0.0
        %3998 = vmatprep.subr.mxu0 0.0
        %3999 = vmatpush1.msra.mxu0 0.0
        %4000 = vmatprep.subr.mxu0 0.0
        %4001 = vmatpush1.msra.mxu0 0.0
        %4002 = vmatprep.subr.mxu0 0.0
        %4003 = vmatpush1.msra.mxu0 0.0
        %4004 = vmatprep.subr.mxu0 0.0
        %4005 = vmatpush1.msra.mxu0 0.0
        %4006 = vmatprep.subr.mxu0 0.0
        %4007 = vmatpush1.msra.mxu0 0.0
        %4008 = vmatprep.subr.mxu0 0.0
        %4009 = vmatpush1.msra.mxu0 0.0
        %4010 = vmatprep.subr.mxu0 0.0
        %4011 = vmatpush1.msra.mxu0 0.0
        %4012 = vmatprep.subr.mxu0 0.0
        %4013 = vmatpush1.msra.mxu0 0.0
        %4014 = vmatprep.subr.mxu0 0.0
        %4015 = vmatpush1.msra.mxu0 0.0
        %4016 = vmatprep.subr.mxu0 0.0
        %4017 = vmatpush1.msra.mxu0 0.0
        %4018 = vmatprep.subr.mxu0 0.0
        %4019 = vmatpush1.msra.mxu0 0.0
        %4020 = vmatprep.subr.mxu0 0.0
        %4021 = vmatpush1.msra.mxu0 0.0
        %4022 = vmatprep.mubr.f32.mxu0 0.0
        %v4023 = vand.u32 %v3742, 4294901760
        %v4024 = vsub.f32 %v3742, %v4023
        %4025 = vmatmul.mubr.f32.gmra.mrb[0].mxu0 %v4024
        %v4026 = vpop.f32.mrb[0].mxu0
        %v4027 = vadd.f32 %v3941, %v4026
        %v4028 = vpop.f32.mrb[0].mxu0
        %4029 = vdwg.mxu0
        %4030 = vmatprep.subr.mxu0 0.0
        %4031 = vmatpush1.msra.mxu0 %v332
        %4032 = vmatprep.subr.mxu0 0.0
        %4033 = vmatpush1.msra.mxu0 %v333
        %4034 = vmatprep.subr.mxu0 0.0
        %4035 = vmatpush1.msra.mxu0 %v334
        %4036 = vmatprep.subr.mxu0 0.0
        %4037 = vmatpush1.msra.mxu0 %v335
        %4038 = vmatprep.subr.mxu0 0.0
        %4039 = vmatpush1.msra.mxu0 %v336
        %4040 = vmatprep.subr.mxu0 0.0
        %4041 = vmatpush1.msra.mxu0 %v337
        %4042 = vmatprep.subr.mxu0 0.0
        %4043 = vmatpush1.msra.mxu0 %v338
        %4044 = vmatprep.subr.mxu0 0.0
        %4045 = vmatpush1.msra.mxu0 %v339
        %4046 = vmatprep.subr.mxu0 0.0
        %4047 = vmatpush1.msra.mxu0 %v340
        %4048 = vmatprep.subr.mxu0 0.0
        %4049 = vmatpush1.msra.mxu0 %v341
        %4050 = vmatprep.subr.mxu0 0.0
        %4051 = vmatpush1.msra.mxu0 %v342
        %4052 = vmatprep.subr.mxu0 0.0
        %4053 = vmatpush1.msra.mxu0 %v343
        %4054 = vmatprep.subr.mxu0 0.0
        %v4055 = vand.u32 %v356, 4294901760
        %4056 = vmatpush1.msra.mxu0 %v4055
        %4057 = vmatprep.subr.mxu0 0.0
        %4058 = vmatpush1.msra.mxu0 0.0
        %4059 = vmatprep.subr.mxu0 0.0
        %4060 = vmatpush1.msra.mxu0 0.0
        %4061 = vmatprep.subr.mxu0 0.0
        %4062 = vmatpush1.msra.mxu0 0.0
        %4063 = vmatprep.subr.mxu0 0.0
        %4064 = vmatpush1.msra.mxu0 0.0
        %4065 = vmatprep.subr.mxu0 0.0
        %4066 = vmatpush1.msra.mxu0 0.0
        %4067 = vmatprep.subr.mxu0 0.0
        %4068 = vmatpush1.msra.mxu0 0.0
        %4069 = vmatprep.subr.mxu0 0.0
        %4070 = vmatpush1.msra.mxu0 0.0
        %4071 = vmatprep.subr.mxu0 0.0
        %4072 = vmatpush1.msra.mxu0 0.0
        %4073 = vmatprep.subr.mxu0 0.0
        %4074 = vmatpush1.msra.mxu0 0.0
        %4075 = vmatprep.subr.mxu0 0.0
        %4076 = vmatpush1.msra.mxu0 0.0
        %4077 = vmatprep.subr.mxu0 0.0
        %4078 = vmatpush1.msra.mxu0 0.0
        %4079 = vmatprep.subr.mxu0 0.0
        %4080 = vmatpush1.msra.mxu0 0.0
        %4081 = vmatprep.subr.mxu0 0.0
        %4082 = vmatpush1.msra.mxu0 0.0
        %4083 = vmatprep.subr.mxu0 0.0
        %4084 = vmatpush1.msra.mxu0 0.0
        %4085 = vmatprep.subr.mxu0 0.0
        %4086 = vmatpush1.msra.mxu0 0.0
        %4087 = vmatprep.subr.mxu0 0.0
        %4088 = vmatpush1.msra.mxu0 0.0
        %4089 = vmatprep.subr.mxu0 0.0
        %4090 = vmatpush1.msra.mxu0 0.0
        %4091 = vmatprep.subr.mxu0 0.0
        %4092 = vmatpush1.msra.mxu0 0.0
        %4093 = vmatprep.subr.mxu0 0.0
        %4094 = vmatpush1.msra.mxu0 0.0
        %4095 = vmatprep.mubr.f32.mxu0 0.0
        %v4096 = vand.u32 %v3742, 4294901760
        %v4097 = vsub.f32 %v3742, %v4096
        %v4098 = vand.u32 %v4097, 4294901760
        %4099 = vmatmul.mubr.f32.gmra.mrb[0].mxu0 %v4098
        %v4100 = vpop.f32.mrb[0].mxu0
        %v4101 = vadd.f32 %v4027, %v4100
        %v4102 = vpop.f32.mrb[0].mxu0
        %4103 = vdwg.mxu0
        %4104 = vmatprep.subr.mxu0 0.0
        %v4105 = vsub.f32 %v332, %v332
        %v4106 = vand.u32 %v4105, 4294901760
        %4107 = vmatpush1.msra.mxu0 %v4106
        %4108 = vmatprep.subr.mxu0 0.0
        %v4109 = vsub.f32 %v333, %v333
        %v4110 = vand.u32 %v4109, 4294901760
        %4111 = vmatpush1.msra.mxu0 %v4110
        %4112 = vmatprep.subr.mxu0 0.0
        %v4113 = vsub.f32 %v334, %v334
        %v4114 = vand.u32 %v4113, 4294901760
        %4115 = vmatpush1.msra.mxu0 %v4114
        %4116 = vmatprep.subr.mxu0 0.0
        %v4117 = vsub.f32 %v335, %v335
        %v4118 = vand.u32 %v4117, 4294901760
        %4119 = vmatpush1.msra.mxu0 %v4118
        %4120 = vmatprep.subr.mxu0 0.0
        %v4121 = vsub.f32 %v336, %v336
        %v4122 = vand.u32 %v4121, 4294901760
        %4123 = vmatpush1.msra.mxu0 %v4122
        %4124 = vmatprep.subr.mxu0 0.0
        %v4125 = vsub.f32 %v337, %v337
        %v4126 = vand.u32 %v4125, 4294901760
        %4127 = vmatpush1.msra.mxu0 %v4126
        %4128 = vmatprep.subr.mxu0 0.0
        %v4129 = vsub.f32 %v338, %v338
        %v4130 = vand.u32 %v4129, 4294901760
        %4131 = vmatpush1.msra.mxu0 %v4130
        %4132 = vmatprep.subr.mxu0 0.0
        %v4133 = vsub.f32 %v339, %v339
        %v4134 = vand.u32 %v4133, 4294901760
        %4135 = vmatpush1.msra.mxu0 %v4134
        %4136 = vmatprep.subr.mxu0 0.0
        %v4137 = vsub.f32 %v340, %v340
        %v4138 = vand.u32 %v4137, 4294901760
        %4139 = vmatpush1.msra.mxu0 %v4138
        %4140 = vmatprep.subr.mxu0 0.0
        %v4141 = vsub.f32 %v341, %v341
        %v4142 = vand.u32 %v4141, 4294901760
        %4143 = vmatpush1.msra.mxu0 %v4142
        %4144 = vmatprep.subr.mxu0 0.0
        %v4145 = vsub.f32 %v342, %v342
        %v4146 = vand.u32 %v4145, 4294901760
        %4147 = vmatpush1.msra.mxu0 %v4146
        %4148 = vmatprep.subr.mxu0 0.0
        %v4149 = vsub.f32 %v343, %v343
        %v4150 = vand.u32 %v4149, 4294901760
        %4151 = vmatpush1.msra.mxu0 %v4150
        %4152 = vmatprep.subr.mxu0 0.0
        %v4153 = vand.u32 %v356, 4294901760
        %v4154 = vsub.f32 %v356, %v4153
        %v4155 = vand.u32 %v4154, 4294901760
        %4156 = vmatpush1.msra.mxu0 %v4155
        %4157 = vmatprep.subr.mxu0 0.0
        %4158 = vmatpush1.msra.mxu0 0.0
        %4159 = vmatprep.subr.mxu0 0.0
        %4160 = vmatpush1.msra.mxu0 0.0
        %4161 = vmatprep.subr.mxu0 0.0
        %4162 = vmatpush1.msra.mxu0 0.0
        %4163 = vmatprep.subr.mxu0 0.0
        %4164 = vmatpush1.msra.mxu0 0.0
        %4165 = vmatprep.subr.mxu0 0.0
        %4166 = vmatpush1.msra.mxu0 0.0
        %4167 = vmatprep.subr.mxu0 0.0
        %4168 = vmatpush1.msra.mxu0 0.0
        %4169 = vmatprep.subr.mxu0 0.0
        %4170 = vmatpush1.msra.mxu0 0.0
        %4171 = vmatprep.subr.mxu0 0.0
        %4172 = vmatpush1.msra.mxu0 0.0
        %4173 = vmatprep.subr.mxu0 0.0
        %4174 = vmatpush1.msra.mxu0 0.0
        %4175 = vmatprep.subr.mxu0 0.0
        %4176 = vmatpush1.msra.mxu0 0.0
        %4177 = vmatprep.subr.mxu0 0.0
        %4178 = vmatpush1.msra.mxu0 0.0
        %4179 = vmatprep.subr.mxu0 0.0
        %4180 = vmatpush1.msra.mxu0 0.0
        %4181 = vmatprep.subr.mxu0 0.0
        %4182 = vmatpush1.msra.mxu0 0.0
        %4183 = vmatprep.subr.mxu0 0.0
        %4184 = vmatpush1.msra.mxu0 0.0
        %4185 = vmatprep.subr.mxu0 0.0
        %4186 = vmatpush1.msra.mxu0 0.0
        %4187 = vmatprep.subr.mxu0 0.0
        %4188 = vmatpush1.msra.mxu0 0.0
        %4189 = vmatprep.subr.mxu0 0.0
        %4190 = vmatpush1.msra.mxu0 0.0
        %4191 = vmatprep.subr.mxu0 0.0
        %4192 = vmatpush1.msra.mxu0 0.0
        %4193 = vmatprep.subr.mxu0 0.0
        %4194 = vmatpush1.msra.mxu0 0.0
        %4195 = vmatprep.mubr.f32.mxu0 0.0
        %v4196 = vand.u32 %v3742, 4294901760
        %4197 = vmatmul.mubr.f32.gmra.mrb[0].mxu0 %v4196
        %v4198 = vpop.f32.mrb[0].mxu0
        %v4199 = vadd.f32 %v4101, %v4198
        %v4200 = vpop.f32.mrb[0].mxu0
        %4201 = vdwg.mxu0
        %4202 = vmatprep.subr.mxu0 0.0
        %4203 = vmatpush1.msra.mxu0 %v332
        %4204 = vmatprep.subr.mxu0 0.0
        %4205 = vmatpush1.msra.mxu0 %v333
        %4206 = vmatprep.subr.mxu0 0.0
        %4207 = vmatpush1.msra.mxu0 %v334
        %4208 = vmatprep.subr.mxu0 0.0
        %4209 = vmatpush1.msra.mxu0 %v335
        %4210 = vmatprep.subr.mxu0 0.0
        %4211 = vmatpush1.msra.mxu0 %v336
        %4212 = vmatprep.subr.mxu0 0.0
        %4213 = vmatpush1.msra.mxu0 %v337
        %4214 = vmatprep.subr.mxu0 0.0
        %4215 = vmatpush1.msra.mxu0 %v338
        %4216 = vmatprep.subr.mxu0 0.0
        %4217 = vmatpush1.msra.mxu0 %v339
        %4218 = vmatprep.subr.mxu0 0.0
        %4219 = vmatpush1.msra.mxu0 %v340
        %4220 = vmatprep.subr.mxu0 0.0
        %4221 = vmatpush1.msra.mxu0 %v341
        %4222 = vmatprep.subr.mxu0 0.0
        %4223 = vmatpush1.msra.mxu0 %v342
        %4224 = vmatprep.subr.mxu0 0.0
        %4225 = vmatpush1.msra.mxu0 %v343
        %4226 = vmatprep.subr.mxu0 0.0
        %v4227 = vand.u32 %v356, 4294901760
        %4228 = vmatpush1.msra.mxu0 %v4227
        %4229 = vmatprep.subr.mxu0 0.0
        %4230 = vmatpush1.msra.mxu0 0.0
        %4231 = vmatprep.subr.mxu0 0.0
        %4232 = vmatpush1.msra.mxu0 0.0
        %4233 = vmatprep.subr.mxu0 0.0
        %4234 = vmatpush1.msra.mxu0 0.0
        %4235 = vmatprep.subr.mxu0 0.0
        %4236 = vmatpush1.msra.mxu0 0.0
        %4237 = vmatprep.subr.mxu0 0.0
        %4238 = vmatpush1.msra.mxu0 0.0
        %4239 = vmatprep.subr.mxu0 0.0
        %4240 = vmatpush1.msra.mxu0 0.0
        %4241 = vmatprep.subr.mxu0 0.0
        %4242 = vmatpush1.msra.mxu0 0.0
        %4243 = vmatprep.subr.mxu0 0.0
        %4244 = vmatpush1.msra.mxu0 0.0
        %4245 = vmatprep.subr.mxu0 0.0
        %4246 = vmatpush1.msra.mxu0 0.0
        %4247 = vmatprep.subr.mxu0 0.0
        %4248 = vmatpush1.msra.mxu0 0.0
        %4249 = vmatprep.subr.mxu0 0.0
        %4250 = vmatpush1.msra.mxu0 0.0
        %4251 = vmatprep.subr.mxu0 0.0
        %4252 = vmatpush1.msra.mxu0 0.0
        %4253 = vmatprep.subr.mxu0 0.0
        %4254 = vmatpush1.msra.mxu0 0.0
        %4255 = vmatprep.subr.mxu0 0.0
        %4256 = vmatpush1.msra.mxu0 0.0
        %4257 = vmatprep.subr.mxu0 0.0
        %4258 = vmatpush1.msra.mxu0 0.0
        %4259 = vmatprep.subr.mxu0 0.0
        %4260 = vmatpush1.msra.mxu0 0.0
        %4261 = vmatprep.subr.mxu0 0.0
        %4262 = vmatpush1.msra.mxu0 0.0
        %4263 = vmatprep.subr.mxu0 0.0
        %4264 = vmatpush1.msra.mxu0 0.0
        %4265 = vmatprep.subr.mxu0 0.0
        %4266 = vmatpush1.msra.mxu0 0.0
        %4267 = vmatprep.mubr.f32.mxu0 0.0
        %v4268 = vand.u32 %v3742, 4294901760
        %4269 = vmatmul.mubr.f32.gmra.mrb[0].mxu0 %v4268
        %v4270 = vpop.f32.mrb[0].mxu0
        %v4271 = vadd.f32 %v4199, %v4270
        %v4272 = vpop.f32.mrb[0].mxu0
        %4273 = vdwg.mxu0
        %v4274 = vmax.f32 %v4271, 0.0
        %v4276 = vrot.slane %v4271, 1
        %v4279 = vmul.f32 %v3739, %v4271
        %v4280 = vmul.f32 %v3740, %v4276
        %v4283 = vrot.slane %v4280, 7
        %v4284 = vsel %vm898, %v4283, %v4279
        %v4286 = vsub.f32 %v4274, %v4284
        %v4287 = vand.u32 2147483647, %v4271
        %v4288 = vsub.f32 0.0, %v4287
        %v4289 = vmul.f32 %v4288, 1.442695
        %v4290 = vpow.pop %v4289
        %v4291 = vadd.f32 %v4290, 1.0
        %v4292 = vlog2.pop %v4291
        %v4293 = vmul.f32 %v4292, 0.6931472
        %v4294 = vadd.f32 %v4286, %v4293
        %v4295 = vsel %vm910, %v4294, 0.0
        %4296 = vadd.xlane.f32.xlu0 %v4295
        %v4297 = vpop.xlane.xlu0 %4296
        %v4298 = vadd.f32 %v3734, %v4297
        %s4299 = scalar_lea.vmem %s208, 14 [#allocation2]
        %v4300 = vld [vmem:[%s4299] sm:$0x3]
        %v4301 = vld [vmem:[%s217 + $0x7] sm:$0x1]
        %v4302 = vld [vmem:[%s217 + $0xf] sm:$0x1]
        %v4303 = vcvt.s32.f32 %v4301
        %v4304 = vcvt.s32.f32 %v4302
        %v4306 = vsel %vm350, %v4300, 0
        %4308 = vmatprep.subr.mxu0 0.0
        %4309 = vmatpush1.msra.mxu0 %v332
        %4310 = vmatprep.subr.mxu0 0.0
        %4311 = vmatpush1.msra.mxu0 %v333
        %4312 = vmatprep.subr.mxu0 0.0
        %4313 = vmatpush1.msra.mxu0 %v334
        %4314 = vmatprep.subr.mxu0 0.0
        %4315 = vmatpush1.msra.mxu0 %v335
        %4316 = vmatprep.subr.mxu0 0.0
        %4317 = vmatpush1.msra.mxu0 %v336
        %4318 = vmatprep.subr.mxu0 0.0
        %4319 = vmatpush1.msra.mxu0 %v337
        %4320 = vmatprep.subr.mxu0 0.0
        %4321 = vmatpush1.msra.mxu0 %v338
        %4322 = vmatprep.subr.mxu0 0.0
        %4323 = vmatpush1.msra.mxu0 %v339
        %4324 = vmatprep.subr.mxu0 0.0
        %4325 = vmatpush1.msra.mxu0 %v340
        %4326 = vmatprep.subr.mxu0 0.0
        %4327 = vmatpush1.msra.mxu0 %v341
        %4328 = vmatprep.subr.mxu0 0.0
        %4329 = vmatpush1.msra.mxu0 %v342
        %4330 = vmatprep.subr.mxu0 0.0
        %4331 = vmatpush1.msra.mxu0 %v343
        %4332 = vmatprep.subr.mxu0 0.0
        %v4333 = vand.u32 %v356, 4294901760
        %4334 = vmatpush1.msra.mxu0 %v4333
        %4335 = vmatprep.subr.mxu0 0.0
        %4336 = vmatpush1.msra.mxu0 0.0
        %4337 = vmatprep.subr.mxu0 0.0
        %4338 = vmatpush1.msra.mxu0 0.0
        %4339 = vmatprep.subr.mxu0 0.0
        %4340 = vmatpush1.msra.mxu0 0.0
        %4341 = vmatprep.subr.mxu0 0.0
        %4342 = vmatpush1.msra.mxu0 0.0
        %4343 = vmatprep.subr.mxu0 0.0
        %4344 = vmatpush1.msra.mxu0 0.0
        %4345 = vmatprep.subr.mxu0 0.0
        %4346 = vmatpush1.msra.mxu0 0.0
        %4347 = vmatprep.subr.mxu0 0.0
        %4348 = vmatpush1.msra.mxu0 0.0
        %4349 = vmatprep.subr.mxu0 0.0
        %4350 = vmatpush1.msra.mxu0 0.0
        %4351 = vmatprep.subr.mxu0 0.0
        %4352 = vmatpush1.msra.mxu0 0.0
        %4353 = vmatprep.subr.mxu0 0.0
        %4354 = vmatpush1.msra.mxu0 0.0
        %4355 = vmatprep.subr.mxu0 0.0
        %4356 = vmatpush1.msra.mxu0 0.0
        %4357 = vmatprep.subr.mxu0 0.0
        %4358 = vmatpush1.msra.mxu0 0.0
        %4359 = vmatprep.subr.mxu0 0.0
        %4360 = vmatpush1.msra.mxu0 0.0
        %4361 = vmatprep.subr.mxu0 0.0
        %4362 = vmatpush1.msra.mxu0 0.0
        %4363 = vmatprep.subr.mxu0 0.0
        %4364 = vmatpush1.msra.mxu0 0.0
        %4365 = vmatprep.subr.mxu0 0.0
        %4366 = vmatpush1.msra.mxu0 0.0
        %4367 = vmatprep.subr.mxu0 0.0
        %4368 = vmatpush1.msra.mxu0 0.0
        %4369 = vmatprep.subr.mxu0 0.0
        %4370 = vmatpush1.msra.mxu0 0.0
        %4371 = vmatprep.subr.mxu0 0.0
        %4372 = vmatpush1.msra.mxu0 0.0
        %4373 = vmatprep.mubr.f32.mxu0 0.0
        %v4374 = vand.u32 %v4306, 4294901760
        %v4375 = vsub.f32 %v4306, %v4374
        %v4376 = vand.u32 %v4375, 4294901760
        %v4377 = vsub.f32 %v4375, %v4376
        %v4378 = vand.u32 %v4377, 4294901760
        %4379 = vmatmul.mubr.f32.gmra.mrb[0].mxu0 %v4378
        %v4380 = vpop.f32.mrb[0].mxu0
        %v4381 = vadd.f32 0.0, %v4380
        %v4382 = vpop.f32.mrb[0].mxu0
        %4383 = vdwg.mxu0
        %4384 = vmatprep.subr.mxu0 0.0
        %v4385 = vsub.f32 %v332, %v332
        %v4386 = vand.u32 %v4385, 4294901760
        %v4387 = vsub.f32 %v4385, %v4386
        %v4388 = vand.u32 %v4387, 4294901760
        %4389 = vmatpush1.msra.mxu0 %v4388
        %4390 = vmatprep.subr.mxu0 0.0
        %v4391 = vsub.f32 %v333, %v333
        %v4392 = vand.u32 %v4391, 4294901760
        %v4393 = vsub.f32 %v4391, %v4392
        %v4394 = vand.u32 %v4393, 4294901760
        %4395 = vmatpush1.msra.mxu0 %v4394
        %4396 = vmatprep.subr.mxu0 0.0
        %v4397 = vsub.f32 %v334, %v334
        %v4398 = vand.u32 %v4397, 4294901760
        %v4399 = vsub.f32 %v4397, %v4398
        %v4400 = vand.u32 %v4399, 4294901760
        %4401 = vmatpush1.msra.mxu0 %v4400
        %4402 = vmatprep.subr.mxu0 0.0
        %v4403 = vsub.f32 %v335, %v335
        %v4404 = vand.u32 %v4403, 4294901760
        %v4405 = vsub.f32 %v4403, %v4404
        %v4406 = vand.u32 %v4405, 4294901760
        %4407 = vmatpush1.msra.mxu0 %v4406
        %4408 = vmatprep.subr.mxu0 0.0
        %v4409 = vsub.f32 %v336, %v336
        %v4410 = vand.u32 %v4409, 4294901760
        %v4411 = vsub.f32 %v4409, %v4410
        %v4412 = vand.u32 %v4411, 4294901760
        %4413 = vmatpush1.msra.mxu0 %v4412
        %4414 = vmatprep.subr.mxu0 0.0
        %v4415 = vsub.f32 %v337, %v337
        %v4416 = vand.u32 %v4415, 4294901760
        %v4417 = vsub.f32 %v4415, %v4416
        %v4418 = vand.u32 %v4417, 4294901760
        %4419 = vmatpush1.msra.mxu0 %v4418
        %4420 = vmatprep.subr.mxu0 0.0
        %v4421 = vsub.f32 %v338, %v338
        %v4422 = vand.u32 %v4421, 4294901760
        %v4423 = vsub.f32 %v4421, %v4422
        %v4424 = vand.u32 %v4423, 4294901760
        %4425 = vmatpush1.msra.mxu0 %v4424
        %4426 = vmatprep.subr.mxu0 0.0
        %v4427 = vsub.f32 %v339, %v339
        %v4428 = vand.u32 %v4427, 4294901760
        %v4429 = vsub.f32 %v4427, %v4428
        %v4430 = vand.u32 %v4429, 4294901760
        %4431 = vmatpush1.msra.mxu0 %v4430
        %4432 = vmatprep.subr.mxu0 0.0
        %v4433 = vsub.f32 %v340, %v340
        %v4434 = vand.u32 %v4433, 4294901760
        %v4435 = vsub.f32 %v4433, %v4434
        %v4436 = vand.u32 %v4435, 4294901760
        %4437 = vmatpush1.msra.mxu0 %v4436
        %4438 = vmatprep.subr.mxu0 0.0
        %v4439 = vsub.f32 %v341, %v341
        %v4440 = vand.u32 %v4439, 4294901760
        %v4441 = vsub.f32 %v4439, %v4440
        %v4442 = vand.u32 %v4441, 4294901760
        %4443 = vmatpush1.msra.mxu0 %v4442
        %4444 = vmatprep.subr.mxu0 0.0
        %v4445 = vsub.f32 %v342, %v342
        %v4446 = vand.u32 %v4445, 4294901760
        %v4447 = vsub.f32 %v4445, %v4446
        %v4448 = vand.u32 %v4447, 4294901760
        %4449 = vmatpush1.msra.mxu0 %v4448
        %4450 = vmatprep.subr.mxu0 0.0
        %v4451 = vsub.f32 %v343, %v343
        %v4452 = vand.u32 %v4451, 4294901760
        %v4453 = vsub.f32 %v4451, %v4452
        %v4454 = vand.u32 %v4453, 4294901760
        %4455 = vmatpush1.msra.mxu0 %v4454
        %4456 = vmatprep.subr.mxu0 0.0
        %v4457 = vand.u32 %v356, 4294901760
        %v4458 = vsub.f32 %v356, %v4457
        %v4459 = vand.u32 %v4458, 4294901760
        %v4460 = vsub.f32 %v4458, %v4459
        %v4461 = vand.u32 %v4460, 4294901760
        %4462 = vmatpush1.msra.mxu0 %v4461
        %4463 = vmatprep.subr.mxu0 0.0
        %4464 = vmatpush1.msra.mxu0 0.0
        %4465 = vmatprep.subr.mxu0 0.0
        %4466 = vmatpush1.msra.mxu0 0.0
        %4467 = vmatprep.subr.mxu0 0.0
        %4468 = vmatpush1.msra.mxu0 0.0
        %4469 = vmatprep.subr.mxu0 0.0
        %4470 = vmatpush1.msra.mxu0 0.0
        %4471 = vmatprep.subr.mxu0 0.0
        %4472 = vmatpush1.msra.mxu0 0.0
        %4473 = vmatprep.subr.mxu0 0.0
        %4474 = vmatpush1.msra.mxu0 0.0
        %4475 = vmatprep.subr.mxu0 0.0
        %4476 = vmatpush1.msra.mxu0 0.0
        %4477 = vmatprep.subr.mxu0 0.0
        %4478 = vmatpush1.msra.mxu0 0.0
        %4479 = vmatprep.subr.mxu0 0.0
        %4480 = vmatpush1.msra.mxu0 0.0
        %4481 = vmatprep.subr.mxu0 0.0
        %4482 = vmatpush1.msra.mxu0 0.0
        %4483 = vmatprep.subr.mxu0 0.0
        %4484 = vmatpush1.msra.mxu0 0.0
        %4485 = vmatprep.subr.mxu0 0.0
        %4486 = vmatpush1.msra.mxu0 0.0
        %4487 = vmatprep.subr.mxu0 0.0
        %4488 = vmatpush1.msra.mxu0 0.0
        %4489 = vmatprep.subr.mxu0 0.0
        %4490 = vmatpush1.msra.mxu0 0.0
        %4491 = vmatprep.subr.mxu0 0.0
        %4492 = vmatpush1.msra.mxu0 0.0
        %4493 = vmatprep.subr.mxu0 0.0
        %4494 = vmatpush1.msra.mxu0 0.0
        %4495 = vmatprep.subr.mxu0 0.0
        %4496 = vmatpush1.msra.mxu0 0.0
        %4497 = vmatprep.subr.mxu0 0.0
        %4498 = vmatpush1.msra.mxu0 0.0
        %4499 = vmatprep.subr.mxu0 0.0
        %4500 = vmatpush1.msra.mxu0 0.0
        %4501 = vmatprep.mubr.f32.mxu0 0.0
        %v4502 = vand.u32 %v4306, 4294901760
        %4503 = vmatmul.mubr.f32.gmra.mrb[0].mxu0 %v4502
        %v4504 = vpop.f32.mrb[0].mxu0
        %v4505 = vadd.f32 %v4381, %v4504
        %v4506 = vpop.f32.mrb[0].mxu0
        %4507 = vdwg.mxu0
        %4508 = vmatprep.subr.mxu0 0.0
        %v4509 = vsub.f32 %v332, %v332
        %4510 = vmatpush1.msra.mxu0 %v4509
        %4511 = vmatprep.subr.mxu0 0.0
        %v4512 = vsub.f32 %v333, %v333
        %4513 = vmatpush1.msra.mxu0 %v4512
        %4514 = vmatprep.subr.mxu0 0.0
        %v4515 = vsub.f32 %v334, %v334
        %4516 = vmatpush1.msra.mxu0 %v4515
        %4517 = vmatprep.subr.mxu0 0.0
        %v4518 = vsub.f32 %v335, %v335
        %4519 = vmatpush1.msra.mxu0 %v4518
        %4520 = vmatprep.subr.mxu0 0.0
        %v4521 = vsub.f32 %v336, %v336
        %4522 = vmatpush1.msra.mxu0 %v4521
        %4523 = vmatprep.subr.mxu0 0.0
        %v4524 = vsub.f32 %v337, %v337
        %4525 = vmatpush1.msra.mxu0 %v4524
        %4526 = vmatprep.subr.mxu0 0.0
        %v4527 = vsub.f32 %v338, %v338
        %4528 = vmatpush1.msra.mxu0 %v4527
        %4529 = vmatprep.subr.mxu0 0.0
        %v4530 = vsub.f32 %v339, %v339
        %4531 = vmatpush1.msra.mxu0 %v4530
        %4532 = vmatprep.subr.mxu0 0.0
        %v4533 = vsub.f32 %v340, %v340
        %4534 = vmatpush1.msra.mxu0 %v4533
        %4535 = vmatprep.subr.mxu0 0.0
        %v4536 = vsub.f32 %v341, %v341
        %4537 = vmatpush1.msra.mxu0 %v4536
        %4538 = vmatprep.subr.mxu0 0.0
        %v4539 = vsub.f32 %v342, %v342
        %4540 = vmatpush1.msra.mxu0 %v4539
        %4541 = vmatprep.subr.mxu0 0.0
        %v4542 = vsub.f32 %v343, %v343
        %4543 = vmatpush1.msra.mxu0 %v4542
        %4544 = vmatprep.subr.mxu0 0.0
        %v4545 = vand.u32 %v356, 4294901760
        %v4546 = vsub.f32 %v356, %v4545
        %4547 = vmatpush1.msra.mxu0 %v4546
        %4548 = vmatprep.subr.mxu0 0.0
        %4549 = vmatpush1.msra.mxu0 0.0
        %4550 = vmatprep.subr.mxu0 0.0
        %4551 = vmatpush1.msra.mxu0 0.0
        %4552 = vmatprep.subr.mxu0 0.0
        %4553 = vmatpush1.msra.mxu0 0.0
        %4554 = vmatprep.subr.mxu0 0.0
        %4555 = vmatpush1.msra.mxu0 0.0
        %4556 = vmatprep.subr.mxu0 0.0
        %4557 = vmatpush1.msra.mxu0 0.0
        %4558 = vmatprep.subr.mxu0 0.0
        %4559 = vmatpush1.msra.mxu0 0.0
        %4560 = vmatprep.subr.mxu0 0.0
        %4561 = vmatpush1.msra.mxu0 0.0
        %4562 = vmatprep.subr.mxu0 0.0
        %4563 = vmatpush1.msra.mxu0 0.0
        %4564 = vmatprep.subr.mxu0 0.0
        %4565 = vmatpush1.msra.mxu0 0.0
        %4566 = vmatprep.subr.mxu0 0.0
        %4567 = vmatpush1.msra.mxu0 0.0
        %4568 = vmatprep.subr.mxu0 0.0
        %4569 = vmatpush1.msra.mxu0 0.0
        %4570 = vmatprep.subr.mxu0 0.0
        %4571 = vmatpush1.msra.mxu0 0.0
        %4572 = vmatprep.subr.mxu0 0.0
        %4573 = vmatpush1.msra.mxu0 0.0
        %4574 = vmatprep.subr.mxu0 0.0
        %4575 = vmatpush1.msra.mxu0 0.0
        %4576 = vmatprep.subr.mxu0 0.0
        %4577 = vmatpush1.msra.mxu0 0.0
        %4578 = vmatprep.subr.mxu0 0.0
        %4579 = vmatpush1.msra.mxu0 0.0
        %4580 = vmatprep.subr.mxu0 0.0
        %4581 = vmatpush1.msra.mxu0 0.0
        %4582 = vmatprep.subr.mxu0 0.0
        %4583 = vmatpush1.msra.mxu0 0.0
        %4584 = vmatprep.subr.mxu0 0.0
        %4585 = vmatpush1.msra.mxu0 0.0
        %4586 = vmatprep.mubr.f32.mxu0 0.0
        %v4587 = vand.u32 %v4306, 4294901760
        %v4588 = vsub.f32 %v4306, %v4587
        %4589 = vmatmul.mubr.f32.gmra.mrb[0].mxu0 %v4588
        %v4590 = vpop.f32.mrb[0].mxu0
        %v4591 = vadd.f32 %v4505, %v4590
        %v4592 = vpop.f32.mrb[0].mxu0
        %4593 = vdwg.mxu0
        %4594 = vmatprep.subr.mxu0 0.0
        %4595 = vmatpush1.msra.mxu0 %v332
        %4596 = vmatprep.subr.mxu0 0.0
        %4597 = vmatpush1.msra.mxu0 %v333
        %4598 = vmatprep.subr.mxu0 0.0
        %4599 = vmatpush1.msra.mxu0 %v334
        %4600 = vmatprep.subr.mxu0 0.0
        %4601 = vmatpush1.msra.mxu0 %v335
        %4602 = vmatprep.subr.mxu0 0.0
        %4603 = vmatpush1.msra.mxu0 %v336
        %4604 = vmatprep.subr.mxu0 0.0
        %4605 = vmatpush1.msra.mxu0 %v337
        %4606 = vmatprep.subr.mxu0 0.0
        %4607 = vmatpush1.msra.mxu0 %v338
        %4608 = vmatprep.subr.mxu0 0.0
        %4609 = vmatpush1.msra.mxu0 %v339
        %4610 = vmatprep.subr.mxu0 0.0
        %4611 = vmatpush1.msra.mxu0 %v340
        %4612 = vmatprep.subr.mxu0 0.0
        %4613 = vmatpush1.msra.mxu0 %v341
        %4614 = vmatprep.subr.mxu0 0.0
        %4615 = vmatpush1.msra.mxu0 %v342
        %4616 = vmatprep.subr.mxu0 0.0
        %4617 = vmatpush1.msra.mxu0 %v343
        %4618 = vmatprep.subr.mxu0 0.0
        %v4619 = vand.u32 %v356, 4294901760
        %4620 = vmatpush1.msra.mxu0 %v4619
        %4621 = vmatprep.subr.mxu0 0.0
        %4622 = vmatpush1.msra.mxu0 0.0
        %4623 = vmatprep.subr.mxu0 0.0
        %4624 = vmatpush1.msra.mxu0 0.0
        %4625 = vmatprep.subr.mxu0 0.0
        %4626 = vmatpush1.msra.mxu0 0.0
        %4627 = vmatprep.subr.mxu0 0.0
        %4628 = vmatpush1.msra.mxu0 0.0
        %4629 = vmatprep.subr.mxu0 0.0
        %4630 = vmatpush1.msra.mxu0 0.0
        %4631 = vmatprep.subr.mxu0 0.0
        %4632 = vmatpush1.msra.mxu0 0.0
        %4633 = vmatprep.subr.mxu0 0.0
        %4634 = vmatpush1.msra.mxu0 0.0
        %4635 = vmatprep.subr.mxu0 0.0
        %4636 = vmatpush1.msra.mxu0 0.0
        %4637 = vmatprep.subr.mxu0 0.0
        %4638 = vmatpush1.msra.mxu0 0.0
        %4639 = vmatprep.subr.mxu0 0.0
        %4640 = vmatpush1.msra.mxu0 0.0
        %4641 = vmatprep.subr.mxu0 0.0
        %4642 = vmatpush1.msra.mxu0 0.0
        %4643 = vmatprep.subr.mxu0 0.0
        %4644 = vmatpush1.msra.mxu0 0.0
        %4645 = vmatprep.subr.mxu0 0.0
        %4646 = vmatpush1.msra.mxu0 0.0
        %4647 = vmatprep.subr.mxu0 0.0
        %4648 = vmatpush1.msra.mxu0 0.0
        %4649 = vmatprep.subr.mxu0 0.0
        %4650 = vmatpush1.msra.mxu0 0.0
        %4651 = vmatprep.subr.mxu0 0.0
        %4652 = vmatpush1.msra.mxu0 0.0
        %4653 = vmatprep.subr.mxu0 0.0
        %4654 = vmatpush1.msra.mxu0 0.0
        %4655 = vmatprep.subr.mxu0 0.0
        %4656 = vmatpush1.msra.mxu0 0.0
        %4657 = vmatprep.subr.mxu0 0.0
        %4658 = vmatpush1.msra.mxu0 0.0
        %4659 = vmatprep.mubr.f32.mxu0 0.0
        %v4660 = vand.u32 %v4306, 4294901760
        %v4661 = vsub.f32 %v4306, %v4660
        %v4662 = vand.u32 %v4661, 4294901760
        %4663 = vmatmul.mubr.f32.gmra.mrb[0].mxu0 %v4662
        %v4664 = vpop.f32.mrb[0].mxu0
        %v4665 = vadd.f32 %v4591, %v4664
        %v4666 = vpop.f32.mrb[0].mxu0
        %4667 = vdwg.mxu0
        %4668 = vmatprep.subr.mxu0 0.0
        %v4669 = vsub.f32 %v332, %v332
        %v4670 = vand.u32 %v4669, 4294901760
        %4671 = vmatpush1.msra.mxu0 %v4670
        %4672 = vmatprep.subr.mxu0 0.0
        %v4673 = vsub.f32 %v333, %v333
        %v4674 = vand.u32 %v4673, 4294901760
        %4675 = vmatpush1.msra.mxu0 %v4674
        %4676 = vmatprep.subr.mxu0 0.0
        %v4677 = vsub.f32 %v334, %v334
        %v4678 = vand.u32 %v4677, 4294901760
        %4679 = vmatpush1.msra.mxu0 %v4678
        %4680 = vmatprep.subr.mxu0 0.0
        %v4681 = vsub.f32 %v335, %v335
        %v4682 = vand.u32 %v4681, 4294901760
        %4683 = vmatpush1.msra.mxu0 %v4682
        %4684 = vmatprep.subr.mxu0 0.0
        %v4685 = vsub.f32 %v336, %v336
        %v4686 = vand.u32 %v4685, 4294901760
        %4687 = vmatpush1.msra.mxu0 %v4686
        %4688 = vmatprep.subr.mxu0 0.0
        %v4689 = vsub.f32 %v337, %v337
        %v4690 = vand.u32 %v4689, 4294901760
        %4691 = vmatpush1.msra.mxu0 %v4690
        %4692 = vmatprep.subr.mxu0 0.0
        %v4693 = vsub.f32 %v338, %v338
        %v4694 = vand.u32 %v4693, 4294901760
        %4695 = vmatpush1.msra.mxu0 %v4694
        %4696 = vmatprep.subr.mxu0 0.0
        %v4697 = vsub.f32 %v339, %v339
        %v4698 = vand.u32 %v4697, 4294901760
        %4699 = vmatpush1.msra.mxu0 %v4698
        %4700 = vmatprep.subr.mxu0 0.0
        %v4701 = vsub.f32 %v340, %v340
        %v4702 = vand.u32 %v4701, 4294901760
        %4703 = vmatpush1.msra.mxu0 %v4702
        %4704 = vmatprep.subr.mxu0 0.0
        %v4705 = vsub.f32 %v341, %v341
        %v4706 = vand.u32 %v4705, 4294901760
        %4707 = vmatpush1.msra.mxu0 %v4706
        %4708 = vmatprep.subr.mxu0 0.0
        %v4709 = vsub.f32 %v342, %v342
        %v4710 = vand.u32 %v4709, 4294901760
        %4711 = vmatpush1.msra.mxu0 %v4710
        %4712 = vmatprep.subr.mxu0 0.0
        %v4713 = vsub.f32 %v343, %v343
        %v4714 = vand.u32 %v4713, 4294901760
        %4715 = vmatpush1.msra.mxu0 %v4714
        %4716 = vmatprep.subr.mxu0 0.0
        %v4717 = vand.u32 %v356, 4294901760
        %v4718 = vsub.f32 %v356, %v4717
        %v4719 = vand.u32 %v4718, 4294901760
        %4720 = vmatpush1.msra.mxu0 %v4719
        %4721 = vmatprep.subr.mxu0 0.0
        %4722 = vmatpush1.msra.mxu0 0.0
        %4723 = vmatprep.subr.mxu0 0.0
        %4724 = vmatpush1.msra.mxu0 0.0
        %4725 = vmatprep.subr.mxu0 0.0
        %4726 = vmatpush1.msra.mxu0 0.0
        %4727 = vmatprep.subr.mxu0 0.0
        %4728 = vmatpush1.msra.mxu0 0.0
        %4729 = vmatprep.subr.mxu0 0.0
        %4730 = vmatpush1.msra.mxu0 0.0
        %4731 = vmatprep.subr.mxu0 0.0
        %4732 = vmatpush1.msra.mxu0 0.0
        %4733 = vmatprep.subr.mxu0 0.0
        %4734 = vmatpush1.msra.mxu0 0.0
        %4735 = vmatprep.subr.mxu0 0.0
        %4736 = vmatpush1.msra.mxu0 0.0
        %4737 = vmatprep.subr.mxu0 0.0
        %4738 = vmatpush1.msra.mxu0 0.0
        %4739 = vmatprep.subr.mxu0 0.0
        %4740 = vmatpush1.msra.mxu0 0.0
        %4741 = vmatprep.subr.mxu0 0.0
        %4742 = vmatpush1.msra.mxu0 0.0
        %4743 = vmatprep.subr.mxu0 0.0
        %4744 = vmatpush1.msra.mxu0 0.0
        %4745 = vmatprep.subr.mxu0 0.0
        %4746 = vmatpush1.msra.mxu0 0.0
        %4747 = vmatprep.subr.mxu0 0.0
        %4748 = vmatpush1.msra.mxu0 0.0
        %4749 = vmatprep.subr.mxu0 0.0
        %4750 = vmatpush1.msra.mxu0 0.0
        %4751 = vmatprep.subr.mxu0 0.0
        %4752 = vmatpush1.msra.mxu0 0.0
        %4753 = vmatprep.subr.mxu0 0.0
        %4754 = vmatpush1.msra.mxu0 0.0
        %4755 = vmatprep.subr.mxu0 0.0
        %4756 = vmatpush1.msra.mxu0 0.0
        %4757 = vmatprep.subr.mxu0 0.0
        %4758 = vmatpush1.msra.mxu0 0.0
        %4759 = vmatprep.mubr.f32.mxu0 0.0
        %v4760 = vand.u32 %v4306, 4294901760
        %4761 = vmatmul.mubr.f32.gmra.mrb[0].mxu0 %v4760
        %v4762 = vpop.f32.mrb[0].mxu0
        %v4763 = vadd.f32 %v4665, %v4762
        %v4764 = vpop.f32.mrb[0].mxu0
        %4765 = vdwg.mxu0
        %4766 = vmatprep.subr.mxu0 0.0
        %4767 = vmatpush1.msra.mxu0 %v332
        %4768 = vmatprep.subr.mxu0 0.0
        %4769 = vmatpush1.msra.mxu0 %v333
        %4770 = vmatprep.subr.mxu0 0.0
        %4771 = vmatpush1.msra.mxu0 %v334
        %4772 = vmatprep.subr.mxu0 0.0
        %4773 = vmatpush1.msra.mxu0 %v335
        %4774 = vmatprep.subr.mxu0 0.0
        %4775 = vmatpush1.msra.mxu0 %v336
        %4776 = vmatprep.subr.mxu0 0.0
        %4777 = vmatpush1.msra.mxu0 %v337
        %4778 = vmatprep.subr.mxu0 0.0
        %4779 = vmatpush1.msra.mxu0 %v338
        %4780 = vmatprep.subr.mxu0 0.0
        %4781 = vmatpush1.msra.mxu0 %v339
        %4782 = vmatprep.subr.mxu0 0.0
        %4783 = vmatpush1.msra.mxu0 %v340
        %4784 = vmatprep.subr.mxu0 0.0
        %4785 = vmatpush1.msra.mxu0 %v341
        %4786 = vmatprep.subr.mxu0 0.0
        %4787 = vmatpush1.msra.mxu0 %v342
        %4788 = vmatprep.subr.mxu0 0.0
        %4789 = vmatpush1.msra.mxu0 %v343
        %4790 = vmatprep.subr.mxu0 0.0
        %v4791 = vand.u32 %v356, 4294901760
        %4792 = vmatpush1.msra.mxu0 %v4791
        %4793 = vmatprep.subr.mxu0 0.0
        %4794 = vmatpush1.msra.mxu0 0.0
        %4795 = vmatprep.subr.mxu0 0.0
        %4796 = vmatpush1.msra.mxu0 0.0
        %4797 = vmatprep.subr.mxu0 0.0
        %4798 = vmatpush1.msra.mxu0 0.0
        %4799 = vmatprep.subr.mxu0 0.0
        %4800 = vmatpush1.msra.mxu0 0.0
        %4801 = vmatprep.subr.mxu0 0.0
        %4802 = vmatpush1.msra.mxu0 0.0
        %4803 = vmatprep.subr.mxu0 0.0
        %4804 = vmatpush1.msra.mxu0 0.0
        %4805 = vmatprep.subr.mxu0 0.0
        %4806 = vmatpush1.msra.mxu0 0.0
        %4807 = vmatprep.subr.mxu0 0.0
        %4808 = vmatpush1.msra.mxu0 0.0
        %4809 = vmatprep.subr.mxu0 0.0
        %4810 = vmatpush1.msra.mxu0 0.0
        %4811 = vmatprep.subr.mxu0 0.0
        %4812 = vmatpush1.msra.mxu0 0.0
        %4813 = vmatprep.subr.mxu0 0.0
        %4814 = vmatpush1.msra.mxu0 0.0
        %4815 = vmatprep.subr.mxu0 0.0
        %4816 = vmatpush1.msra.mxu0 0.0
        %4817 = vmatprep.subr.mxu0 0.0
        %4818 = vmatpush1.msra.mxu0 0.0
        %4819 = vmatprep.subr.mxu0 0.0
        %4820 = vmatpush1.msra.mxu0 0.0
        %4821 = vmatprep.subr.mxu0 0.0
        %4822 = vmatpush1.msra.mxu0 0.0
        %4823 = vmatprep.subr.mxu0 0.0
        %4824 = vmatpush1.msra.mxu0 0.0
        %4825 = vmatprep.subr.mxu0 0.0
        %4826 = vmatpush1.msra.mxu0 0.0
        %4827 = vmatprep.subr.mxu0 0.0
        %4828 = vmatpush1.msra.mxu0 0.0
        %4829 = vmatprep.subr.mxu0 0.0
        %4830 = vmatpush1.msra.mxu0 0.0
        %4831 = vmatprep.mubr.f32.mxu0 0.0
        %v4832 = vand.u32 %v4306, 4294901760
        %4833 = vmatmul.mubr.f32.gmra.mrb[0].mxu0 %v4832
        %v4834 = vpop.f32.mrb[0].mxu0
        %v4835 = vadd.f32 %v4763, %v4834
        %v4836 = vpop.f32.mrb[0].mxu0
        %4837 = vdwg.mxu0
        %v4838 = vmax.f32 %v4835, 0.0
        %v4840 = vrot.slane %v4835, 1
        %v4843 = vmul.f32 %v4303, %v4835
        %v4844 = vmul.f32 %v4304, %v4840
        %v4847 = vrot.slane %v4844, 7
        %v4848 = vsel %vm898, %v4847, %v4843
        %v4850 = vsub.f32 %v4838, %v4848
        %v4851 = vand.u32 2147483647, %v4835
        %v4852 = vsub.f32 0.0, %v4851
        %v4853 = vmul.f32 %v4852, 1.442695
        %v4854 = vpow.pop %v4853
        %v4855 = vadd.f32 %v4854, 1.0
        %v4856 = vlog2.pop %v4855
        %v4857 = vmul.f32 %v4856, 0.6931472
        %v4858 = vadd.f32 %v4850, %v4857
        %v4859 = vsel %vm910, %v4858, 0.0
        %4860 = vadd.xlane.f32.xlu0 %v4859
        %v4861 = vpop.xlane.xlu0 %4860
        %v4862 = vadd.f32 %v4298, %v4861
        %v4863 = vld [vmem:[%s4] sm:$0x3]
        %v4864 = vmul.f32 %v4862, 0.0012755102
        %v4865 = vadd.f32 %v4863, %v4864
        %vm4866 = vcmask 1024
        %4867 = vst.msk [vmem:[%s4] sm:$0x3] %vm4866, %v4865
        // Predicated region
        $region49: #{tpu_custom_call.1} parent=35 // pred_check
          %p4868 = pneg %p128
        $region50: #{tpu_custom_call.1} parent=35 // pred_check_branch
          %4870 = sbr.rel (%p4868) target = $region52
        $region51: #{tpu_custom_call.1} parent=35 // pred_region
          _
        $region52: #{tpu_custom_call.1} parent=35 // pred_fallthru
          _
        // Predicated region
        $region53: #{tpu_custom_call.1} parent=35 // pred_check
          %p4871 = pneg %p128
        $region54: #{tpu_custom_call.1} parent=35 // pred_check_branch
          %4873 = sbr.rel (%p4871) target = $region56
        $region55: #{tpu_custom_call.1} parent=35 // pred_region
          _
        $region56: #{tpu_custom_call.1} parent=35 // pred_fallthru
          _
      $region36: #{tpu_custom_call.1} parent=5 // pred_fallthru
        _
      %p4874 = scmp.le.s32.totalorder 2, %s16
      // Predicated region
      $region57: #{tpu_custom_call.1} parent=5 // pred_check
        %p4875 = pneg %p4874
      $region58: #{tpu_custom_call.1} parent=5 // pred_check_branch
        %4877 = sbr.rel (%p4875) target = $region60
      $region59: #{tpu_custom_call.1} parent=5 // pred_region
        %s4878 = ssub.s32 %s16, 2
      $region60: #{tpu_custom_call.1} parent=5 // pred_fallthru
        _
    $region6: #{tpu_custom_call.1} parent=1 // loop_footer
      %s20 = sadd.s32 1, %s16
    $region7: #{tpu_custom_call.1} parent=1 // loop_footer_branch
      %15 = sbr.rel target = $region3
    $region8: #{tpu_custom_call.1} parent=1 // loop_exit
      _
    %4879 = vsyncpa [#allocation3], 1
    %s4880 = scalar_lea.sflag [#allocation3], 1
    %4881 = vsyncpa %s4880, 1
    %4882 = vsyncpa [#allocation5], 1
    %s4883 = scalar_lea.sflag [#allocation5], 1
    %4884 = vsyncpa %s4883, 1

</llo_original>
